<compile_context>
chip_gen: v7x
topology: tpu7x:2x2x1
jax: 0.10.0
libtpu: 0.0.40
codegen_flags: <defaults>
</compile_context>

<pallas_src>
import functools

import jax
import jax.numpy as jnp
from jax.experimental import pallas as pl
from jax.experimental.pallas import tpu as pltpu

LANE = 128      # TPU lane width: pad all feature/class dims to this
TILE = 256      # row / K tile for the A_hat @ XW aggregation
_VMEM_LIMIT = 32 * 1024 * 1024  # safe on v5e/v6e/v7x, plenty for these tiles


def _round_up(x, m):
    return (x + m - 1) // m * m


# ---------------------------------------------------------------------------
# Kernel 1: feature transform  XW = X @ W   (bf16 in, f32 accumulate, bf16 out)
# ---------------------------------------------------------------------------
def _xw_kernel(x_ref, w_ref, out_ref):
    out_ref[...] = jnp.dot(
        x_ref[...], w_ref[...], preferred_element_type=jnp.float32
    ).astype(out_ref.dtype)


def _feature_transform(x_bf16, w_bf16, tile_m):
    n_pad, f_in = x_bf16.shape
    f_out = w_bf16.shape[1]
    return pl.pallas_call(
        _xw_kernel,
        out_shape=jax.ShapeDtypeStruct((n_pad, f_out), jnp.bfloat16),
        grid_spec=pltpu.PrefetchScalarGridSpec(
            num_scalar_prefetch=0,
            grid=(n_pad // tile_m,),
            in_specs=[
                pl.BlockSpec((tile_m, f_in), lambda i: (i, 0)),
                pl.BlockSpec((f_in, f_out), lambda i: (0, 0)),  # W resident
            ],
            out_specs=pl.BlockSpec((tile_m, f_out), lambda i: (i, 0)),
        ),
        compiler_params=pltpu.CompilerParams(
            dimension_semantics=("parallel",),
            vmem_limit_bytes=_VMEM_LIMIT,
        ),
    )(x_bf16, w_bf16)


# ---------------------------------------------------------------------------
# Kernel 2: tiled aggregation  out = A_hat @ XW + b  -> ReLU / log_softmax
#   grid = (row-tiles of A_hat, K-tiles of A_hat columns)
#   f32 accumulator in VMEM scratch, init at k==0, epilogue at k==last.
# ---------------------------------------------------------------------------
def _agg_kernel(adj_ref, xw_ref, b_ref, out_ref, acc_ref, *, activation, num_valid):
    k = pl.program_id(1)

    @pl.when(k == 0)
    def _():
        acc_ref[...] = jnp.zeros_like(acc_ref)

    acc_ref[...] += jnp.dot(
        adj_ref[...], xw_ref[...], preferred_element_type=jnp.float32
    )

    @pl.when(k == pl.num_programs(1) - 1)
    def _():
        logits = acc_ref[...] + b_ref[...]          # bias added once, in f32
        if activation == "relu":
            out_ref[...] = jnp.maximum(logits, 0.0).astype(out_ref.dtype)
        else:
            # log_softmax along the (lane-padded) class axis; padded class
            # columns are masked out of the max/sum and stripped by the caller.
            col = jax.lax.broadcasted_iota(jnp.int32, logits.shape, 1)
            masked = jnp.where(col < num_valid, logits, -jnp.inf)
            m = jnp.max(masked, axis=-1, keepdims=True)
            z = masked - m
            lse = jnp.log(jnp.sum(jnp.exp(z), axis=-1, keepdims=True))
            out_ref[...] = (z - lse).astype(out_ref.dtype)


def _aggregate(adj_bf16, xw_bf16, b_f32, *, activation, num_valid, out_dtype,
               tile_m, tile_k):
    n_pad = adj_bf16.shape[0]
    f_out = xw_bf16.shape[1]
    kernel = functools.partial(_agg_kernel, activation=activation, num_valid=num_valid)
    return pl.pallas_call(
        kernel,
        out_shape=jax.ShapeDtypeStruct((n_pad, f_out), out_dtype),
        grid_spec=pltpu.PrefetchScalarGridSpec(
            num_scalar_prefetch=0,
            grid=(n_pad // tile_m, n_pad // tile_k),
            in_specs=[
                pl.BlockSpec((tile_m, tile_k), lambda i, k: (i, k)),   # A_hat tile
                pl.BlockSpec((tile_k, f_out), lambda i, k: (k, 0)),    # XW K-slab
                pl.BlockSpec((1, f_out), lambda i, k: (0, 0)),         # bias resident
            ],
            out_specs=pl.BlockSpec((tile_m, f_out), lambda i, k: (i, 0)),
            scratch_shapes=[pltpu.VMEM((tile_m, f_out), jnp.float32)],
        ),
        compiler_params=pltpu.CompilerParams(
            dimension_semantics=("parallel", "arbitrary"),
            vmem_limit_bytes=_VMEM_LIMIT,
        ),
    )(adj_bf16, xw_bf16, b_f32)


# ---------------------------------------------------------------------------
# Plain-JAX glue: normalized adjacency + parameter init
# ---------------------------------------------------------------------------
def normalized_adjacency(edge_index, num_nodes):
    """Dense D^-1/2 (A + I) D^-1/2 (PyG GCNConv default normalization).

    Uses scatter-add so duplicate edges accumulate (matches PyG scatter-add).
    """
    src, dst = edge_index[0], edge_index[1]
    a = jnp.zeros((num_nodes, num_nodes), dtype=jnp.float32)
    a = a.at[dst, src].add(1.0)                      # message flows src -> dst
    a = a + jnp.eye(num_nodes, dtype=jnp.float32)    # self-loops
    deg = jnp.sum(a, axis=1)
    d_inv_sqrt = jnp.where(deg > 0, jax.lax.rsqrt(deg), 0.0)
    return d_inv_sqrt[:, None] * a * d_inv_sqrt[None, :]


def glorot(key, fan_in, fan_out):
    limit = jnp.sqrt(6.0 / (fan_in + fan_out))
    return jax.random.uniform(
        key, (fan_in, fan_out), dtype=jnp.float32, minval=-limit, maxval=limit
    )


def init_gcn_params(key, input_dim, hidden_dim, output_dim):
    k1, k2 = jax.random.split(key)
    return {
        "w1": glorot(k1, input_dim, hidden_dim),
        "b1": jnp.zeros((hidden_dim,), jnp.float32),
        "w2": glorot(k2, hidden_dim, output_dim),
        "b2": jnp.zeros((output_dim,), jnp.float32),
    }


@functools.partial(jax.jit, static_argnames=("num_nodes",))
def gcn_forward(params, x, edge_index, num_nodes):
    n = num_nodes
    f_in = x.shape[1]
    hidden = params["w1"].shape[1]
    n_classes = params["w2"].shape[1]

    n_pad = _round_up(max(n, TILE), TILE)
    f_in_pad = _round_up(f_in, LANE)
    hid_pad = _round_up(hidden, LANE)
    cls_pad = _round_up(n_classes, LANE)

    # --- build + pad operands (zeros in padded rows/cols are inert) ---------
    adj = normalized_adjacency(edge_index, n).astype(jnp.bfloat16)
    adj_p = jnp.zeros((n_pad, n_pad), jnp.bfloat16).at[:n, :n].set(adj)

    x_p = jnp.zeros((n_pad, f_in_pad), jnp.bfloat16).at[:n, :f_in].set(
        x.astype(jnp.bfloat16))
    w1_p = jnp.zeros((f_in_pad, hid_pad), jnp.bfloat16).at[:f_in, :hidden].set(
        params["w1"].astype(jnp.bfloat16))
    b1_p = jnp.zeros((1, hid_pad), jnp.float32).at[0, :hidden].set(params["b1"])
    w2_p = jnp.zeros((hid_pad, cls_pad), jnp.bfloat16).at[:hidden, :n_classes].set(
        params["w2"].astype(jnp.bfloat16))
    b2_p = jnp.zeros((1, cls_pad), jnp.float32).at[0, :n_classes].set(params["b2"])

    # --- layer 1: GCNConv -> ReLU -------------------------------------------
    xw1 = _feature_transform(x_p, w1_p, TILE)
    h = _aggregate(adj_p, xw1, b1_p, activation="relu", num_valid=hidden,
                   out_dtype=jnp.bfloat16, tile_m=TILE, tile_k=TILE)

    # F.dropout(x, training=self.training): module in eval mode -> identity.

    # --- layer 2: GCNConv -> log_softmax(dim=1) ------------------------------
    xw2 = _feature_transform(h, w2_p, TILE)
    out = _aggregate(adj_p, xw2, b2_p, activation="log_softmax",
                     num_valid=n_classes, out_dtype=jnp.float32,
                     tile_m=TILE, tile_k=TILE)

    return out[:n, :n_classes]   # strip node/class padding


# ---------------------------------------------------------------------------
# Reference (pure f32 JAX) for a sanity check
# ---------------------------------------------------------------------------
def gcn_reference(params, x, edge_index, num_nodes):
    adj = normalized_adjacency(edge_index, num_nodes)
    h = jnp.maximum(adj @ (x @ params["w1"]) + params["b1"], 0.0)
    logits = adj @ (h @ params["w2"]) + params["b2"]
    return jax.nn.log_softmax(logits, axis=1)


if __name__ == "__main__":
    key = jax.random.PRNGKey(0)
    k_feat, k_edge, k_param = jax.random.split(key, 3)

    num_nodes = 300                      # pads to 512 -> grid (2, 2) with TILE=256
    input_dim, hidden_dim, output_dim = 16, 32, 4
    num_edges = 900

    x = jax.random.normal(k_feat, (num_nodes, input_dim), dtype=jnp.float32)
    edge_index = jax.random.randint(
        k_edge, (2, num_edges), minval=0, maxval=num_nodes, dtype=jnp.int32
    )
    params = init_gcn_params(k_param, input_dim, hidden_dim, output_dim)

    out = gcn_forward(params, x, edge_index, num_nodes)
    out = jax.block_until_ready(out)

    ref = gcn_reference(params, x, edge_index, num_nodes)
    assert out.shape == (num_nodes, output_dim)
    # bf16 matmuls (f32 accumulate) vs f32 reference -> loose tolerance
    max_err = float(jnp.max(jnp.abs(out - ref)))
    assert max_err < 5e-2, f"max abs error {max_err}"

    print("KERNEL_OK")
</pallas_src>

<mosaic_0001>
module attributes {stable_mosaic.version = 11 : i64} {
  func.func @_xw_kernel(%arg0: i32, %arg1: memref<256x128xbf16, #tpu.memory_space<vmem>>, %arg2: memref<128x128xbf16, #tpu.memory_space<vmem>>, %arg3: memref<256x128xbf16, #tpu.memory_space<vmem>>) attributes {dimension_semantics = [#tpu.dimension_semantics<parallel>], iteration_bounds = array<i64: 2>, scalar_prefetch = 0 : i64, scratch_operands = 0 : i64, tpu.core_type = #tpu.core_type<tc>, window_params = [{transform_indices = @transform_0, window_bounds = array<i64: 256, 128>}, {pipeline_mode = #tpu.pipeline_mode<synchronous>, transform_indices = @transform_1, window_bounds = array<i64: 128, 128>}, {transform_indices = @transform_2, window_bounds = array<i64: 256, 128>}]} {
    %c0 = arith.constant 0 : index
    %c0_0 = arith.constant 0 : index
    %0 = vector.load %arg1[%c0, %c0_0] : memref<256x128xbf16, #tpu.memory_space<vmem>>, vector<256x128xbf16>
    %c0_1 = arith.constant 0 : index
    %c0_2 = arith.constant 0 : index
    %1 = vector.load %arg2[%c0_1, %c0_2] : memref<128x128xbf16, #tpu.memory_space<vmem>>, vector<128x128xbf16>
    %cst = arith.constant dense<0.000000e+00> : vector<256x128xf32>
    %2 = tpu.matmul %0, %1, %cst {dimension_numbers = #tpu.dot_dimension_numbers<[1], [0], [0], [1], [0, 0, 1, 1], [], []>} : vector<256x128xbf16>, vector<128x128xbf16>, vector<256x128xf32> -> vector<256x128xf32>
    %3 = arith.truncf %2 : vector<256x128xf32> to vector<256x128xbf16>
    %c0_3 = arith.constant 0 : index
    %c0_4 = arith.constant 0 : index
    %4 = vector.load %arg3[%c0_3, %c0_4] : memref<256x128xbf16, #tpu.memory_space<vmem>>, vector<256x128xbf16>
    tpu.vector_store %arg3[%c0_3, %c0_4], %3 {strides = array<i32>} : memref<256x128xbf16, #tpu.memory_space<vmem>>, vector<256x128xbf16>,
    return
  }
  func.func @transform_0(%arg0: i32) -> (i32, i32) {
    %c0_i32 = arith.constant 0 : i32
    %c0_i32_0 = arith.constant 0 : i32
    return %arg0, %c0_i32 : i32, i32
  }
  func.func @transform_1(%arg0: i32) -> (i32, i32) {
    %c0_i32 = arith.constant 0 : i32
    %c0_i32_0 = arith.constant 0 : i32
    %c0_i32_1 = arith.constant 0 : i32
    return %c0_i32, %c0_i32_0 : i32, i32
  }
  func.func @transform_2(%arg0: i32) -> (i32, i32) {
    %c0_i32 = arith.constant 0 : i32
    %c0_i32_0 = arith.constant 0 : i32
    return %arg0, %c0_i32 : i32, i32
  }
}

module attributes {stable_mosaic.version = 11 : i64} {
  func.func @_agg_kernel(%arg0: i32, %arg1: i32, %arg2: memref<256x256xbf16, #tpu.memory_space<vmem>>, %arg3: memref<256x128xbf16, #tpu.memory_space<vmem>>, %arg4: memref<1x128xf32, #tpu.memory_space<vmem>>, %arg5: memref<256x128xbf16, #tpu.memory_space<vmem>>, %arg6: memref<256x128xf32, #tpu.memory_space<vmem>>) attributes {dimension_semantics = [#tpu.dimension_semantics<parallel>, #tpu.dimension_semantics<arbitrary>], iteration_bounds = array<i64: 2, 2>, scalar_prefetch = 0 : i64, scratch_operands = 1 : i64, tpu.core_type = #tpu.core_type<tc>, window_params = [{transform_indices = @transform_0, window_bounds = array<i64: 256, 256>}, {transform_indices = @transform_1, window_bounds = array<i64: 256, 128>}, {pipeline_mode = #tpu.pipeline_mode<synchronous>, transform_indices = @transform_2, window_bounds = array<i64: 1, 128>}, {transform_indices = @transform_3, window_bounds = array<i64: 256, 128>}]} {
    %c0_i32 = arith.constant 0 : i32
    %0 = arith.cmpi eq, %arg1, %c0_i32 : i32
    %1 = arith.extui %0 : i1 to i32
    %c0_i32_0 = arith.constant 0 : i32
    %2 = arith.cmpi ne, %1, %c0_i32_0 : i32
    scf.if %2 {
      %cst_9 = arith.constant 0.000000e+00 : f32
      %12 = vector.broadcast %cst_9 : f32 to vector<256x128xf32>
      %c0_10 = arith.constant 0 : index
      %c0_11 = arith.constant 0 : index
      %13 = vector.load %arg6[%c0_10, %c0_11] : memref<256x128xf32, #tpu.memory_space<vmem>>, vector<256x128xf32>
      tpu.vector_store %arg6[%c0_10, %c0_11], %12 {strides = array<i32>} : memref<256x128xf32, #tpu.memory_space<vmem>>, vector<256x128xf32>,
    } else {
    }
    %c0 = arith.constant 0 : index
    %c0_1 = arith.constant 0 : index
    %3 = vector.load %arg6[%c0, %c0_1] : memref<256x128xf32, #tpu.memory_space<vmem>>, vector<256x128xf32>
    %c0_2 = arith.constant 0 : index
    %c0_3 = arith.constant 0 : index
    %4 = vector.load %arg2[%c0_2, %c0_3] : memref<256x256xbf16, #tpu.memory_space<vmem>>, vector<256x256xbf16>
    %c0_4 = arith.constant 0 : index
    %c0_5 = arith.constant 0 : index
    %5 = vector.load %arg3[%c0_4, %c0_5] : memref<256x128xbf16, #tpu.memory_space<vmem>>, vector<256x128xbf16>
    %cst = arith.constant dense<0.000000e+00> : vector<256x128xf32>
    %6 = tpu.matmul %4, %5, %cst {dimension_numbers = #tpu.dot_dimension_numbers<[1], [0], [0], [1], [0, 0, 1, 1], [], []>} : vector<256x256xbf16>, vector<256x128xbf16>, vector<256x128xf32> -> vector<256x128xf32>
    %7 = arith.addf %3, %6 : vector<256x128xf32>
    %c0_6 = arith.constant 0 : index
    %c0_7 = arith.constant 0 : index
    %8 = vector.load %arg6[%c0_6, %c0_7] : memref<256x128xf32, #tpu.memory_space<vmem>>, vector<256x128xf32>
    tpu.vector_store %arg6[%c0_6, %c0_7], %7 {strides = array<i32>} : memref<256x128xf32, #tpu.memory_space<vmem>>, vector<256x128xf32>,
    %c1_i32 = arith.constant 1 : i32
    %9 = arith.cmpi eq, %arg1, %c1_i32 : i32
    %10 = arith.extui %9 : i1 to i32
    %c0_i32_8 = arith.constant 0 : i32
    %11 = arith.cmpi ne, %10, %c0_i32_8 : i32
    scf.if %11 {
      %c0_9 = arith.constant 0 : index
      %c0_10 = arith.constant 0 : index
      %12 = vector.load %arg6[%c0_9, %c0_10] : memref<256x128xf32, #tpu.memory_space<vmem>>, vector<256x128xf32>
      %c0_11 = arith.constant 0 : index
      %c0_12 = arith.constant 0 : index
      %13 = vector.load %arg4[%c0_11, %c0_12] : memref<1x128xf32, #tpu.memory_space<vmem>>, vector<1x128xf32>
      %14 = vector.broadcast %13 : vector<1x128xf32> to vector<256x128xf32>
      %15 = arith.addf %12, %14 : vector<256x128xf32>
      %cst_13 = arith.constant 0.000000e+00 : f32
      %16 = vector.broadcast %cst_13 : f32 to vector<256x128xf32>
      %17 = arith.maximumf %15, %16 : vector<256x128xf32>
      %18 = arith.truncf %17 : vector<256x128xf32> to vector<256x128xbf16>
      %c0_14 = arith.constant 0 : index
      %c0_15 = arith.constant 0 : index
      %19 = vector.load %arg5[%c0_14, %c0_15] : memref<256x128xbf16, #tpu.memory_space<vmem>>, vector<256x128xbf16>
      tpu.vector_store %arg5[%c0_14, %c0_15], %18 {strides = array<i32>} : memref<256x128xbf16, #tpu.memory_space<vmem>>, vector<256x128xbf16>,
    } else {
    }
    return
  }
  func.func @transform_0(%arg0: i32, %arg1: i32) -> (i32, i32) {
    %c0_i32 = arith.constant 0 : i32
    return %arg0, %arg1 : i32, i32
  }
  func.func @transform_1(%arg0: i32, %arg1: i32) -> (i32, i32) {
    %c0_i32 = arith.constant 0 : i32
    %c0_i32_0 = arith.constant 0 : i32
    return %arg1, %c0_i32 : i32, i32
  }
  func.func @transform_2(%arg0: i32, %arg1: i32) -> (i32, i32) {
    %c0_i32 = arith.constant 0 : i32
    %c0_i32_0 = arith.constant 0 : i32
    %c0_i32_1 = arith.constant 0 : i32
    return %c0_i32, %c0_i32_0 : i32, i32
  }
  func.func @transform_3(%arg0: i32, %arg1: i32) -> (i32, i32) {
    %c0_i32 = arith.constant 0 : i32
    %c0_i32_0 = arith.constant 0 : i32
    return %arg0, %c0_i32 : i32, i32
  }
}

module attributes {stable_mosaic.version = 11 : i64} {
  func.func @_agg_kernel(%arg0: i32, %arg1: i32, %arg2: memref<256x256xbf16, #tpu.memory_space<vmem>>, %arg3: memref<256x128xbf16, #tpu.memory_space<vmem>>, %arg4: memref<1x128xf32, #tpu.memory_space<vmem>>, %arg5: memref<256x128xf32, #tpu.memory_space<vmem>>, %arg6: memref<256x128xf32, #tpu.memory_space<vmem>>) attributes {dimension_semantics = [#tpu.dimension_semantics<parallel>, #tpu.dimension_semantics<arbitrary>], iteration_bounds = array<i64: 2, 2>, scalar_prefetch = 0 : i64, scratch_operands = 1 : i64, tpu.core_type = #tpu.core_type<tc>, window_params = [{transform_indices = @transform_0, window_bounds = array<i64: 256, 256>}, {transform_indices = @transform_1, window_bounds = array<i64: 256, 128>}, {pipeline_mode = #tpu.pipeline_mode<synchronous>, transform_indices = @transform_2, window_bounds = array<i64: 1, 128>}, {transform_indices = @transform_3, window_bounds = array<i64: 256, 128>}]} {
    %c0_i32 = arith.constant 0 : i32
    %0 = arith.cmpi eq, %arg1, %c0_i32 : i32
    %1 = arith.extui %0 : i1 to i32
    %c0_i32_0 = arith.constant 0 : i32
    %2 = arith.cmpi ne, %1, %c0_i32_0 : i32
    scf.if %2 {
      %cst_9 = arith.constant 0.000000e+00 : f32
      %12 = vector.broadcast %cst_9 : f32 to vector<256x128xf32>
      %c0_10 = arith.constant 0 : index
      %c0_11 = arith.constant 0 : index
      %13 = vector.load %arg6[%c0_10, %c0_11] : memref<256x128xf32, #tpu.memory_space<vmem>>, vector<256x128xf32>
      tpu.vector_store %arg6[%c0_10, %c0_11], %12 {strides = array<i32>} : memref<256x128xf32, #tpu.memory_space<vmem>>, vector<256x128xf32>,
    } else {
    }
    %c0 = arith.constant 0 : index
    %c0_1 = arith.constant 0 : index
    %3 = vector.load %arg6[%c0, %c0_1] : memref<256x128xf32, #tpu.memory_space<vmem>>, vector<256x128xf32>
    %c0_2 = arith.constant 0 : index
    %c0_3 = arith.constant 0 : index
    %4 = vector.load %arg2[%c0_2, %c0_3] : memref<256x256xbf16, #tpu.memory_space<vmem>>, vector<256x256xbf16>
    %c0_4 = arith.constant 0 : index
    %c0_5 = arith.constant 0 : index
    %5 = vector.load %arg3[%c0_4, %c0_5] : memref<256x128xbf16, #tpu.memory_space<vmem>>, vector<256x128xbf16>
    %cst = arith.constant dense<0.000000e+00> : vector<256x128xf32>
    %6 = tpu.matmul %4, %5, %cst {dimension_numbers = #tpu.dot_dimension_numbers<[1], [0], [0], [1], [0, 0, 1, 1], [], []>} : vector<256x256xbf16>, vector<256x128xbf16>, vector<256x128xf32> -> vector<256x128xf32>
    %7 = arith.addf %3, %6 : vector<256x128xf32>
    %c0_6 = arith.constant 0 : index
    %c0_7 = arith.constant 0 : index
    %8 = vector.load %arg6[%c0_6, %c0_7] : memref<256x128xf32, #tpu.memory_space<vmem>>, vector<256x128xf32>
    tpu.vector_store %arg6[%c0_6, %c0_7], %7 {strides = array<i32>} : memref<256x128xf32, #tpu.memory_space<vmem>>, vector<256x128xf32>,
    %c1_i32 = arith.constant 1 : i32
    %9 = arith.cmpi eq, %arg1, %c1_i32 : i32
    %10 = arith.extui %9 : i1 to i32
    %c0_i32_8 = arith.constant 0 : i32
    %11 = arith.cmpi ne, %10, %c0_i32_8 : i32
    scf.if %11 {
      %c0_9 = arith.constant 0 : index
      %c0_10 = arith.constant 0 : index
      %12 = vector.load %arg6[%c0_9, %c0_10] : memref<256x128xf32, #tpu.memory_space<vmem>>, vector<256x128xf32>
      %c0_11 = arith.constant 0 : index
      %c0_12 = arith.constant 0 : index
      %13 = vector.load %arg4[%c0_11, %c0_12] : memref<1x128xf32, #tpu.memory_space<vmem>>, vector<1x128xf32>
      %14 = vector.broadcast %13 : vector<1x128xf32> to vector<256x128xf32>
      %15 = arith.addf %12, %14 : vector<256x128xf32>
      %16 = tpu.iota {dimensions = array<i32: 1>} : vector<256x128xi32>
      %c4_i32 = arith.constant 4 : i32
      %17 = vector.broadcast %c4_i32 : i32 to vector<256x128xi32>
      %18 = arith.cmpi slt, %16, %17 : vector<256x128xi32>
      %cst_13 = arith.constant 0xFF800000 : f32
      %19 = vector.broadcast %cst_13 : f32 to vector<256x128xf32>
      %20 = arith.select %18, %15, %19 : vector<256x128xi1>, vector<256x128xf32>
      %cst_14 = arith.constant dense<0xFF800000> : vector<256xf32>
      %21 = vector.multi_reduction <maximumf>, %20, %cst_14 [1] : vector<256x128xf32> to vector<256xf32>
      %22 = vector.shape_cast %21 : vector<256xf32> to vector<256x1xf32>
      %23 = vector.broadcast %22 : vector<256x1xf32> to vector<256x128xf32>
      %24 = arith.subf %20, %23 : vector<256x128xf32>
      %25 = math.exp %24 : vector<256x128xf32>
      %cst_15 = arith.constant dense<0.000000e+00> : vector<256xf32>
      %26 = vector.multi_reduction <add>, %25, %cst_15 [1] : vector<256x128xf32> to vector<256xf32>
      %27 = vector.shape_cast %26 : vector<256xf32> to vector<256x1xf32>
      %28 = math.log %27 : vector<256x1xf32>
      %29 = vector.broadcast %28 : vector<256x1xf32> to vector<256x128xf32>
      %30 = arith.subf %24, %29 : vector<256x128xf32>
      %c0_16 = arith.constant 0 : index
      %c0_17 = arith.constant 0 : index
      %31 = vector.load %arg5[%c0_16, %c0_17] : memref<256x128xf32, #tpu.memory_space<vmem>>, vector<256x128xf32>
      tpu.vector_store %arg5[%c0_16, %c0_17], %30 {strides = array<i32>} : memref<256x128xf32, #tpu.memory_space<vmem>>, vector<256x128xf32>,
    } else {
    }
    return
  }
  func.func @transform_0(%arg0: i32, %arg1: i32) -> (i32, i32) {
    %c0_i32 = arith.constant 0 : i32
    return %arg0, %arg1 : i32, i32
  }
  func.func @transform_1(%arg0: i32, %arg1: i32) -> (i32, i32) {
    %c0_i32 = arith.constant 0 : i32
    %c0_i32_0 = arith.constant 0 : i32
    return %arg1, %c0_i32 : i32, i32
  }
  func.func @transform_2(%arg0: i32, %arg1: i32) -> (i32, i32) {
    %c0_i32 = arith.constant 0 : i32
    %c0_i32_0 = arith.constant 0 : i32
    %c0_i32_1 = arith.constant 0 : i32
    return %c0_i32, %c0_i32_0 : i32, i32
  }
  func.func @transform_3(%arg0: i32, %arg1: i32) -> (i32, i32) {
    %c0_i32 = arith.constant 0 : i32
    %c0_i32_0 = arith.constant 0 : i32
    return %arg0, %c0_i32 : i32, i32
  }
}

</mosaic_0001>

<llo_original>
// kernel: gcn_forward.4
$region0: #{gcn_forward.4}
  #allocation0 [shape = 'u32[]', space=smem, size = 0x4, offset = 0x4, fixed_abs, tag = 'smem constant byte address 0x4 - core index']
  #allocation1 [shape = 'u32[144,128]{1,0:T(1,128)}', space=vmem, size = 0x12000, scoped, tag = 'internal scratch']
  %s0 = inlined_call_operand.vmem [shape: bf16[512,128], index: 0, kind: input, shape index: {}]
  %s1 = inlined_call_operand.vmem [shape: bf16[128,128], index: 1, kind: input, shape index: {}]
  %s2 = inlined_call_operand.vmem [shape: bf16[512,128], index: 2, kind: output, shape index: {}]
  %s3 = sld [smem:[#allocation0]]
  $region41: #{gcn_forward.4} parent=0
    _
  %s5 = ssub.s32 1, %s3
  %s6 = scalar_select 0, %s5, %s3
  loop: start=0, step=1, limit=4
  $region2: #{gcn_forward.4} parent=0 // loop_pre_header
    _
  $region3: #{gcn_forward.4} parent=0 // loop_header
    %s8 = sphi 0, %s12
    %p9 = scmp.ge.s32.totalorder %s8, 4
    %s18 = sphi 0, %s20
    %s21 = sphi 0, %s18
    %s22 = sphi 0, %s21
    %s38 = sphi 0, %s22
    %s42 = sphi 0, %s42
    %s44 = sphi 0, %s42
    %s45 = sphi 0, %s44
    %s59 = sphi 0, %s45
    %s65 = sphi 0, %s67
    %s68 = sphi 0, %s65
    %s69 = sphi 0, %s68
    %s85 = sphi 0, %s69
  $region4: #{gcn_forward.4} parent=0 // loop_header_branch
    %11 = sbr.rel (%p9) target = $region8
  $region5: #{gcn_forward.4} parent=0 // loop_body
    %s13 = ssub.s32 %s8, 1
    %s14 = ssub.s32 %s8, 2
    %s15 = sadd.s32 %s8, 1
    %s16 = ssub.s32 %s8, %s15
    %p17 = scmp.eq.s32.totalorder %s16, 0
    %s19 = sadd.s32 %s18, 1
    %s20 = scalar_select %p17, %s18, %s19
    %p23 = pneg %p17
    %p24 = scmp.eq.s32.totalorder %s8, 1
    %p25 = por %p23, %p24
    %p26 = scmp.ne.s32.totalorder %s18, %s21
    %p27 = scmp.eq.s32.totalorder %s8, 0
    %p28 = por %p26, %p27
    %p29 = scmp.ne.s32.totalorder %s18, %s21
    %p30 = scmp.eq.s32.totalorder %s13, 1
    %p31 = por %p29, %p30
    %p32 = scmp.ne.s32.totalorder %s21, %s22
    %p33 = scmp.eq.s32.totalorder %s13, 0
    %p34 = por %p32, %p33
    %p35 = scmp.ne.s32.totalorder %s21, %s22
    %p36 = scmp.eq.s32.totalorder %s14, 1
    %p37 = por %p35, %p36
    %p39 = scmp.ne.s32.totalorder %s22, %s38
    %p40 = scmp.eq.s32.totalorder %s14, 0
    %p41 = por %p39, %p40
    %s43 = sadd.s32 %s42, 1
    %p46 = scmp.eq.s32.totalorder %s8, 1
    %p47 = scmp.ne.s32.totalorder %s42, %s44
    %p48 = scmp.eq.s32.totalorder %s8, 0
    %p49 = por %p47, %p48
    %p50 = scmp.ne.s32.totalorder %s42, %s44
    %p51 = scmp.eq.s32.totalorder %s13, 1
    %p52 = por %p50, %p51
    %p53 = scmp.ne.s32.totalorder %s44, %s45
    %p54 = scmp.eq.s32.totalorder %s13, 0
    %p55 = por %p53, %p54
    %p56 = scmp.ne.s32.totalorder %s44, %s45
    %p57 = scmp.eq.s32.totalorder %s14, 1
    %p58 = por %p56, %p57
    %p60 = scmp.ne.s32.totalorder %s45, %s59
    %p61 = scmp.eq.s32.totalorder %s14, 0
    %p62 = por %p60, %p61
    %s63 = ssub.s32 %s8, %s15
    %p64 = scmp.eq.s32.totalorder %s63, 0
    %s66 = sadd.s32 %s65, 1
    %s67 = scalar_select %p64, %s65, %s66
    %p70 = pneg %p64
    %p71 = scmp.eq.s32.totalorder %s8, 1
    %p72 = por %p70, %p71
    %p73 = scmp.ne.s32.totalorder %s65, %s68
    %p74 = scmp.eq.s32.totalorder %s8, 0
    %p75 = por %p73, %p74
    %p76 = scmp.ne.s32.totalorder %s65, %s68
    %p77 = scmp.eq.s32.totalorder %s13, 1
    %p78 = por %p76, %p77
    %p79 = scmp.ne.s32.totalorder %s68, %s69
    %p80 = scmp.eq.s32.totalorder %s13, 0
    %p81 = por %p79, %p80
    %p82 = scmp.ne.s32.totalorder %s68, %s69
    %p83 = scmp.eq.s32.totalorder %s14, 1
    %p84 = por %p82, %p83
    %p86 = scmp.ne.s32.totalorder %s69, %s85
    %p87 = scmp.eq.s32.totalorder %s14, 0
    %p88 = por %p86, %p87
    %p89 = scmp.le.s32.totalorder 1, %s8
    %p90 = scmp.lt.s32.totalorder %s8, 3
    %p91 = pnand %p89, %p90
    %p92 = pneg %p91
    // Predicated region
    $region9: #{gcn_forward.4} parent=5 // pred_check
      _
    $region10: #{gcn_forward.4} parent=5 // pred_check_branch
      %94 = sbr.rel (%p91) target = $region12
    $region11: #{gcn_forward.4} parent=5 // pred_region
      %s95 = ssub.s32 %s8, 1
      // Predicated region
      $region13: #{gcn_forward.4} parent=11 // pred_check
        %p96 = pneg %p55
      $region14: #{gcn_forward.4} parent=11 // pred_check_branch
        %98 = sbr.rel (%p96) target = $region16
      $region15: #{gcn_forward.4} parent=11 // pred_region
        _
      $region16: #{gcn_forward.4} parent=11 // pred_fallthru
        _
    $region12: #{gcn_forward.4} parent=5 // pred_fallthru
      _
    %p99 = scmp.lt.s32.totalorder %s8, 2
    // Predicated region
    $region17: #{gcn_forward.4} parent=5 // pred_check
      %p100 = pneg %p99
    $region18: #{gcn_forward.4} parent=5 // pred_check_branch
      %102 = sbr.rel (%p100) target = $region20
    $region19: #{gcn_forward.4} parent=5 // pred_region
      // Predicated region
      $region21: #{gcn_forward.4} parent=19 // pred_check
        %p103 = pneg %p28
      $region22: #{gcn_forward.4} parent=19 // pred_check_branch
        %105 = sbr.rel (%p103) target = $region24
      $region23: #{gcn_forward.4} parent=19 // pred_region
        %s106 = smul.u32 32, %s8
        %p107 = scmp.lt.s32.totalorder %s106, 63
        %s108 = scalar_select %p107, %s106, 63
        %s109 = smul.addr %s108, 4
        %s110 = scalar_lea.vmem %s0, %s109
        %s111 = smul.u32 32, %s8
      $region24: #{gcn_forward.4} parent=19 // pred_fallthru
        _
    $region20: #{gcn_forward.4} parent=5 // pred_fallthru
      _
    %p112 = scmp.le.s32.totalorder 1, %s8
    %p113 = scmp.lt.s32.totalorder %s8, 3
    %p114 = pnand %p112, %p113
    %p115 = pneg %p114
    // Predicated region
    $region25: #{gcn_forward.4} parent=5 // pred_check
      _
    $region26: #{gcn_forward.4} parent=5 // pred_check_branch
      %117 = sbr.rel (%p114) target = $region28
    $region27: #{gcn_forward.4} parent=5 // pred_region
      %s118 = ssub.s32 %s8, 1
      %s119 = smul.u32 32, %s13
      %p120 = scmp.lt.s32.totalorder %s119, 63
      %s121 = scalar_select %p120, %s119, 63
      %s122 = smul.addr %s121, 4
      %s123 = scalar_lea.vmem %s0, %s122
      %p124 = pneg %p34
      %p125 = pneg %p31
      %p126 = pneg %p55
      %p127 = pneg %p52
      %p128 = pneg %p81
      %p129 = pneg %p78
      %s130 = smul.u32 32, %s13
      %p131 = scmp.lt.s32.totalorder %s130, 63
      %s132 = scalar_select %p131, %s130, 63
      %s133 = smul.addr %s132, 4
      %s134 = scalar_lea.vmem %s2, %s133
      %s135 = smul.u32 32, %s13
      %p136 = scmp.lt.s32.totalorder %s135, 63
      %s137 = scalar_select %p136, %s135, 63
      %s138 = smul.addr %s137, 4
      %s139 = scalar_lea.vmem %s0, %s138
      %s140 = smul.u32 32, %s13
      %s141 = smul.u32 32, %s13
      %p142 = scmp.lt.s32.totalorder %s141, 63
      %s143 = scalar_select %p142, %s141, 63
      %s144 = smul.addr %s143, 4
      %s145 = scalar_lea.vmem %s2, %s144
      %s146 = smul.u32 32, %s13
      %v148 = vld [vmem:[%s139] sm:$0xf]
      %v149 = vld [vmem:[%s139 + $0x4] sm:$0xf]
      %v150 = vld [vmem:[%s139 + $0x8] sm:$0xf]
      %v151 = vld [vmem:[%s139 + $0xc] sm:$0xf]
      %v152 = vld [vmem:[%s139 + $0x10] sm:$0xf]
      %v153 = vld [vmem:[%s139 + $0x14] sm:$0xf]
      %v154 = vld [vmem:[%s139 + $0x18] sm:$0xf]
      %v155 = vld [vmem:[%s139 + $0x1c] sm:$0xf]
      %v156 = vld [vmem:[%s139 + $0x20] sm:$0xf]
      %v157 = vld [vmem:[%s139 + $0x24] sm:$0xf]
      %v158 = vld [vmem:[%s139 + $0x28] sm:$0xf]
      %v159 = vld [vmem:[%s139 + $0x2c] sm:$0xf]
      %v160 = vld [vmem:[%s139 + $0x30] sm:$0xf]
      %v161 = vld [vmem:[%s139 + $0x34] sm:$0xf]
      %v162 = vld [vmem:[%s139 + $0x38] sm:$0xf]
      %v163 = vld [vmem:[%s139 + $0x3c] sm:$0xf]
      %v164 = vld [vmem:[%s139 + $0x40] sm:$0xf]
      %v165 = vld [vmem:[%s139 + $0x44] sm:$0xf]
      %v166 = vld [vmem:[%s139 + $0x48] sm:$0xf]
      %v167 = vld [vmem:[%s139 + $0x4c] sm:$0xf]
      %v168 = vld [vmem:[%s139 + $0x50] sm:$0xf]
      %v169 = vld [vmem:[%s139 + $0x54] sm:$0xf]
      %v170 = vld [vmem:[%s139 + $0x58] sm:$0xf]
      %v171 = vld [vmem:[%s139 + $0x5c] sm:$0xf]
      %v172 = vld [vmem:[%s139 + $0x60] sm:$0xf]
      %v173 = vld [vmem:[%s139 + $0x64] sm:$0xf]
      %v174 = vld [vmem:[%s139 + $0x68] sm:$0xf]
      %v175 = vld [vmem:[%s139 + $0x6c] sm:$0xf]
      %v176 = vld [vmem:[%s139 + $0x70] sm:$0xf]
      %v177 = vld [vmem:[%s139 + $0x74] sm:$0xf]
      %v178 = vld [vmem:[%s139 + $0x78] sm:$0xf]
      %v179 = vld [vmem:[%s139 + $0x7c] sm:$0xf]
      %v180 = vld [vmem:[%s1] sm:$0xf]
      %v181 = vld [vmem:[%s1 + $0x4] sm:$0xf]
      %v182 = vld [vmem:[%s1 + $0x8] sm:$0xf]
      %v183 = vld [vmem:[%s1 + $0xc] sm:$0xf]
      %v184 = vld [vmem:[%s1 + $0x10] sm:$0xf]
      %v185 = vld [vmem:[%s1 + $0x14] sm:$0xf]
      %v186 = vld [vmem:[%s1 + $0x18] sm:$0xf]
      %v187 = vld [vmem:[%s1 + $0x1c] sm:$0xf]
      %v188 = vld [vmem:[%s1 + $0x20] sm:$0xf]
      %v189 = vld [vmem:[%s1 + $0x24] sm:$0xf]
      %v190 = vld [vmem:[%s1 + $0x28] sm:$0xf]
      %v191 = vld [vmem:[%s1 + $0x2c] sm:$0xf]
      %v192 = vld [vmem:[%s1 + $0x30] sm:$0xf]
      %v193 = vld [vmem:[%s1 + $0x34] sm:$0xf]
      %v194 = vld [vmem:[%s1 + $0x38] sm:$0xf]
      %v195 = vld [vmem:[%s1 + $0x3c] sm:$0xf]
      %v228 = vunpack.c.l.b16 %v148
      %v229 = vunpack.c.l.b16 %v149
      %v230 = vunpack.c.l.b16 %v150
      %v231 = vunpack.c.l.b16 %v151
      %v232 = vunpack.c.l.b16 %v152
      %v233 = vunpack.c.l.b16 %v153
      %v234 = vunpack.c.l.b16 %v154
      %v235 = vunpack.c.l.b16 %v155
      %v236 = vunpack.c.l.b16 %v156
      %v237 = vunpack.c.l.b16 %v157
      %v238 = vunpack.c.l.b16 %v158
      %v239 = vunpack.c.l.b16 %v159
      %v240 = vunpack.c.l.b16 %v160
      %v241 = vunpack.c.l.b16 %v161
      %v242 = vunpack.c.l.b16 %v162
      %v243 = vunpack.c.l.b16 %v163
      %v244 = vunpack.c.l.b16 %v164
      %v245 = vunpack.c.l.b16 %v165
      %v246 = vunpack.c.l.b16 %v166
      %v247 = vunpack.c.l.b16 %v167
      %v248 = vunpack.c.l.b16 %v168
      %v249 = vunpack.c.l.b16 %v169
      %v250 = vunpack.c.l.b16 %v170
      %v251 = vunpack.c.l.b16 %v171
      %v252 = vunpack.c.l.b16 %v172
      %v253 = vunpack.c.l.b16 %v173
      %v254 = vunpack.c.l.b16 %v174
      %v255 = vunpack.c.l.b16 %v175
      %v256 = vunpack.c.l.b16 %v176
      %v257 = vunpack.c.l.b16 %v177
      %v258 = vunpack.c.l.b16 %v178
      %v259 = vunpack.c.l.b16 %v179
      %v260 = vpack.c.b16 %v229, %v228
      %v261 = vpack.c.b16 %v231, %v230
      %v262 = vpack.c.b16 %v233, %v232
      %v263 = vpack.c.b16 %v235, %v234
      %v264 = vpack.c.b16 %v237, %v236
      %v265 = vpack.c.b16 %v239, %v238
      %v266 = vpack.c.b16 %v241, %v240
      %v267 = vpack.c.b16 %v243, %v242
      %v268 = vpack.c.b16 %v245, %v244
      %v269 = vpack.c.b16 %v247, %v246
      %v270 = vpack.c.b16 %v249, %v248
      %v271 = vpack.c.b16 %v251, %v250
      %v272 = vpack.c.b16 %v253, %v252
      %v273 = vpack.c.b16 %v255, %v254
      %v274 = vpack.c.b16 %v257, %v256
      %v275 = vpack.c.b16 %v259, %v258
      %v308 = vunpack.c.l.b16 %v180
      %v309 = vunpack.c.l.b16 %v181
      %v310 = vunpack.c.l.b16 %v182
      %v311 = vunpack.c.l.b16 %v183
      %v312 = vunpack.c.l.b16 %v184
      %v313 = vunpack.c.l.b16 %v185
      %v314 = vunpack.c.l.b16 %v186
      %v315 = vunpack.c.l.b16 %v187
      %v316 = vunpack.c.l.b16 %v188
      %v317 = vunpack.c.l.b16 %v189
      %v318 = vunpack.c.l.b16 %v190
      %v319 = vunpack.c.l.b16 %v191
      %v320 = vunpack.c.l.b16 %v192
      %v321 = vunpack.c.l.b16 %v193
      %v322 = vunpack.c.l.b16 %v194
      %v323 = vunpack.c.l.b16 %v195
      %v324 = vpack.c.b16 %v309, %v308
      %v325 = vpack.c.b16 %v311, %v310
      %v326 = vpack.c.b16 %v313, %v312
      %v327 = vpack.c.b16 %v315, %v314
      %v328 = vpack.c.b16 %v317, %v316
      %v329 = vpack.c.b16 %v319, %v318
      %v330 = vpack.c.b16 %v321, %v320
      %v331 = vpack.c.b16 %v323, %v322
      %340 = vmatprep.subr.bf16.mxu0 0
      %341 = vmatpush1.bf16.msra.mxu0 %v324
      %342 = vmatprep.subr.bf16.mxu0 0
      %343 = vmatpush1.bf16.msra.mxu0 %v325
      %344 = vmatprep.subr.bf16.mxu0 0
      %345 = vmatpush1.bf16.msra.mxu0 %v326
      %346 = vmatprep.subr.bf16.mxu0 0
      %347 = vmatpush1.bf16.msra.mxu0 %v327
      %348 = vmatprep.subr.bf16.mxu0 0
      %349 = vmatpush1.bf16.msra.mxu0 %v328
      %350 = vmatprep.subr.bf16.mxu0 0
      %351 = vmatpush1.bf16.msra.mxu0 %v329
      %352 = vmatprep.subr.bf16.mxu0 0
      %353 = vmatpush1.bf16.msra.mxu0 %v330
      %354 = vmatprep.subr.bf16.mxu0 0
      %355 = vmatpush1.bf16.msra.mxu0 %v331
      %356 = vmatprep.subr.bf16.mxu0 0
      %357 = vmatpush1.bf16.msra.mxu0 0
      %358 = vmatprep.subr.bf16.mxu0 0
      %359 = vmatpush1.bf16.msra.mxu0 0
      %360 = vmatprep.subr.bf16.mxu0 0
      %361 = vmatpush1.bf16.msra.mxu0 0
      %362 = vmatprep.subr.bf16.mxu0 0
      %363 = vmatpush1.bf16.msra.mxu0 0
      %364 = vmatprep.subr.bf16.mxu0 0
      %365 = vmatpush1.bf16.msra.mxu0 0
      %366 = vmatprep.subr.bf16.mxu0 0
      %367 = vmatpush1.bf16.msra.mxu0 0
      %368 = vmatprep.subr.bf16.mxu0 0
      %369 = vmatpush1.bf16.msra.mxu0 0
      %370 = vmatprep.subr.bf16.mxu0 0
      %371 = vmatpush1.bf16.msra.mxu0 0
      %372 = vmatprep.mubr.bf16.mxu0 0
      %373 = vmatmul.mubr.bf16.gmra.mrb[0].mxu0 %v260
      %v374 = vpop.f32.mrb[0].mxu0
      %v375 = vadd.f32 0.0, %v374
      %v376 = vpop.f32.mrb[0].mxu0
      %v377 = vpop.f32.mrb[0].mxu0
      %v378 = vadd.f32 0.0, %v377
      %v379 = vpop.f32.mrb[0].mxu0
      %380 = vmatprep.mubr.bf16.mxu0 0
      %381 = vmatmul.mubr.bf16.gmra.mrb[0].mxu0 %v261
      %v382 = vpop.f32.mrb[0].mxu0
      %v383 = vadd.f32 0.0, %v382
      %v384 = vpop.f32.mrb[0].mxu0
      %v385 = vpop.f32.mrb[0].mxu0
      %v386 = vadd.f32 0.0, %v385
      %v387 = vpop.f32.mrb[0].mxu0
      %388 = vmatprep.mubr.bf16.mxu0 0
      %389 = vmatmul.mubr.bf16.gmra.mrb[0].mxu0 %v262
      %v390 = vpop.f32.mrb[0].mxu0
      %v391 = vadd.f32 0.0, %v390
      %v392 = vpop.f32.mrb[0].mxu0
      %v393 = vpop.f32.mrb[0].mxu0
      %v394 = vadd.f32 0.0, %v393
      %v395 = vpop.f32.mrb[0].mxu0
      %396 = vmatprep.mubr.bf16.mxu0 0
      %397 = vmatmul.mubr.bf16.gmra.mrb[0].mxu0 %v263
      %v398 = vpop.f32.mrb[0].mxu0
      %v399 = vadd.f32 0.0, %v398
      %v400 = vpop.f32.mrb[0].mxu0
      %v401 = vpop.f32.mrb[0].mxu0
      %v402 = vadd.f32 0.0, %v401
      %v403 = vpop.f32.mrb[0].mxu0
      %404 = vmatprep.mubr.bf16.mxu0 0
      %405 = vmatmul.mubr.bf16.gmra.mrb[0].mxu0 %v264
      %v406 = vpop.f32.mrb[0].mxu0
      %v407 = vadd.f32 0.0, %v406
      %v408 = vpop.f32.mrb[0].mxu0
      %v409 = vpop.f32.mrb[0].mxu0
      %v410 = vadd.f32 0.0, %v409
      %v411 = vpop.f32.mrb[0].mxu0
      %412 = vmatprep.mubr.bf16.mxu0 0
      %413 = vmatmul.mubr.bf16.gmra.mrb[0].mxu0 %v265
      %v414 = vpop.f32.mrb[0].mxu0
      %v415 = vadd.f32 0.0, %v414
      %v416 = vpop.f32.mrb[0].mxu0
      %v417 = vpop.f32.mrb[0].mxu0
      %v418 = vadd.f32 0.0, %v417
      %v419 = vpop.f32.mrb[0].mxu0
      %420 = vmatprep.mubr.bf16.mxu0 0
      %421 = vmatmul.mubr.bf16.gmra.mrb[0].mxu0 %v266
      %v422 = vpop.f32.mrb[0].mxu0
      %v423 = vadd.f32 0.0, %v422
      %v424 = vpop.f32.mrb[0].mxu0
      %v425 = vpop.f32.mrb[0].mxu0
      %v426 = vadd.f32 0.0, %v425
      %v427 = vpop.f32.mrb[0].mxu0
      %428 = vmatprep.mubr.bf16.mxu0 0
      %429 = vmatmul.mubr.bf16.gmra.mrb[0].mxu0 %v267
      %v430 = vpop.f32.mrb[0].mxu0
      %v431 = vadd.f32 0.0, %v430
      %v432 = vpop.f32.mrb[0].mxu0
      %v433 = vpop.f32.mrb[0].mxu0
      %v434 = vadd.f32 0.0, %v433
      %v435 = vpop.f32.mrb[0].mxu0
      %436 = vmatprep.mubr.bf16.mxu0 0
      %437 = vmatmul.mubr.bf16.gmra.mrb[0].mxu0 %v268
      %v438 = vpop.f32.mrb[0].mxu0
      %v439 = vadd.f32 0.0, %v438
      %v440 = vpop.f32.mrb[0].mxu0
      %v441 = vpop.f32.mrb[0].mxu0
      %v442 = vadd.f32 0.0, %v441
      %v443 = vpop.f32.mrb[0].mxu0
      %444 = vmatprep.mubr.bf16.mxu0 0
      %445 = vmatmul.mubr.bf16.gmra.mrb[0].mxu0 %v269
      %v446 = vpop.f32.mrb[0].mxu0
      %v447 = vadd.f32 0.0, %v446
      %v448 = vpop.f32.mrb[0].mxu0
      %v449 = vpop.f32.mrb[0].mxu0
      %v450 = vadd.f32 0.0, %v449
      %v451 = vpop.f32.mrb[0].mxu0
      %452 = vmatprep.mubr.bf16.mxu0 0
      %453 = vmatmul.mubr.bf16.gmra.mrb[0].mxu0 %v270
      %v454 = vpop.f32.mrb[0].mxu0
      %v455 = vadd.f32 0.0, %v454
      %v456 = vpop.f32.mrb[0].mxu0
      %v457 = vpop.f32.mrb[0].mxu0
      %v458 = vadd.f32 0.0, %v457
      %v459 = vpop.f32.mrb[0].mxu0
      %460 = vmatprep.mubr.bf16.mxu0 0
      %461 = vmatmul.mubr.bf16.gmra.mrb[0].mxu0 %v271
      %v462 = vpop.f32.mrb[0].mxu0
      %v463 = vadd.f32 0.0, %v462
      %v464 = vpop.f32.mrb[0].mxu0
      %v465 = vpop.f32.mrb[0].mxu0
      %v466 = vadd.f32 0.0, %v465
      %v467 = vpop.f32.mrb[0].mxu0
      %468 = vmatprep.mubr.bf16.mxu0 0
      %469 = vmatmul.mubr.bf16.gmra.mrb[0].mxu0 %v272
      %v470 = vpop.f32.mrb[0].mxu0
      %v471 = vadd.f32 0.0, %v470
      %v472 = vpop.f32.mrb[0].mxu0
      %v473 = vpop.f32.mrb[0].mxu0
      %v474 = vadd.f32 0.0, %v473
      %v475 = vpop.f32.mrb[0].mxu0
      %476 = vmatprep.mubr.bf16.mxu0 0
      %477 = vmatmul.mubr.bf16.gmra.mrb[0].mxu0 %v273
      %v478 = vpop.f32.mrb[0].mxu0
      %v479 = vadd.f32 0.0, %v478
      %v480 = vpop.f32.mrb[0].mxu0
      %v481 = vpop.f32.mrb[0].mxu0
      %v482 = vadd.f32 0.0, %v481
      %v483 = vpop.f32.mrb[0].mxu0
      %484 = vmatprep.mubr.bf16.mxu0 0
      %485 = vmatmul.mubr.bf16.gmra.mrb[0].mxu0 %v274
      %v486 = vpop.f32.mrb[0].mxu0
      %v487 = vadd.f32 0.0, %v486
      %v488 = vpop.f32.mrb[0].mxu0
      %v489 = vpop.f32.mrb[0].mxu0
      %v490 = vadd.f32 0.0, %v489
      %v491 = vpop.f32.mrb[0].mxu0
      %492 = vmatprep.mubr.bf16.mxu0 0
      %493 = vmatmul.mubr.bf16.gmra.mrb[0].mxu0 %v275
      %v494 = vpop.f32.mrb[0].mxu0
      %v495 = vadd.f32 0.0, %v494
      %v496 = vpop.f32.mrb[0].mxu0
      %v497 = vpop.f32.mrb[0].mxu0
      %v498 = vadd.f32 0.0, %v497
      %v499 = vpop.f32.mrb[0].mxu0
      %500 = vdwg.mxu0
      %v501 = vpack.c.bf16 %v378, %v375
      %v502 = vpack.c.bf16 %v386, %v383
      %v503 = vpack.c.bf16 %v394, %v391
      %v504 = vpack.c.bf16 %v402, %v399
      %v505 = vpack.c.bf16 %v410, %v407
      %v506 = vpack.c.bf16 %v418, %v415
      %v507 = vpack.c.bf16 %v426, %v423
      %v508 = vpack.c.bf16 %v434, %v431
      %v509 = vpack.c.bf16 %v442, %v439
      %v510 = vpack.c.bf16 %v450, %v447
      %v511 = vpack.c.bf16 %v458, %v455
      %v512 = vpack.c.bf16 %v466, %v463
      %v513 = vpack.c.bf16 %v474, %v471
      %v514 = vpack.c.bf16 %v482, %v479
      %v515 = vpack.c.bf16 %v490, %v487
      %v516 = vpack.c.bf16 %v498, %v495
      %v533 = vunpack.c.l.b16 %v501
      %v534 = vunpack.c.h.b16 %v501
      %v535 = vunpack.c.l.b16 %v502
      %v536 = vunpack.c.h.b16 %v502
      %v537 = vunpack.c.l.b16 %v503
      %v538 = vunpack.c.h.b16 %v503
      %v539 = vunpack.c.l.b16 %v504
      %v540 = vunpack.c.h.b16 %v504
      %v541 = vunpack.c.l.b16 %v505
      %v542 = vunpack.c.h.b16 %v505
      %v543 = vunpack.c.l.b16 %v506
      %v544 = vunpack.c.h.b16 %v506
      %v545 = vunpack.c.l.b16 %v507
      %v546 = vunpack.c.h.b16 %v507
      %v547 = vunpack.c.l.b16 %v508
      %v548 = vunpack.c.h.b16 %v508
      %v549 = vunpack.c.l.b16 %v509
      %v550 = vunpack.c.h.b16 %v509
      %v551 = vunpack.c.l.b16 %v510
      %v552 = vunpack.c.h.b16 %v510
      %v553 = vunpack.c.l.b16 %v511
      %v554 = vunpack.c.h.b16 %v511
      %v555 = vunpack.c.l.b16 %v512
      %v556 = vunpack.c.h.b16 %v512
      %v557 = vunpack.c.l.b16 %v513
      %v558 = vunpack.c.h.b16 %v513
      %v559 = vunpack.c.l.b16 %v514
      %v560 = vunpack.c.h.b16 %v514
      %v561 = vunpack.c.l.b16 %v515
      %v562 = vunpack.c.h.b16 %v515
      %v563 = vunpack.c.l.b16 %v516
      %v564 = vunpack.c.h.b16 %v516
      %v565 = vpack.c.b16 %v533, %v533
      %v566 = vpack.c.b16 %v534, %v534
      %v567 = vpack.c.b16 %v535, %v535
      %v568 = vpack.c.b16 %v536, %v536
      %v569 = vpack.c.b16 %v537, %v537
      %v570 = vpack.c.b16 %v538, %v538
      %v571 = vpack.c.b16 %v539, %v539
      %v572 = vpack.c.b16 %v540, %v540
      %v573 = vpack.c.b16 %v541, %v541
      %v574 = vpack.c.b16 %v542, %v542
      %v575 = vpack.c.b16 %v543, %v543
      %v576 = vpack.c.b16 %v544, %v544
      %v577 = vpack.c.b16 %v545, %v545
      %v578 = vpack.c.b16 %v546, %v546
      %v579 = vpack.c.b16 %v547, %v547
      %v580 = vpack.c.b16 %v548, %v548
      %v581 = vpack.c.b16 %v549, %v549
      %v582 = vpack.c.b16 %v550, %v550
      %v583 = vpack.c.b16 %v551, %v551
      %v584 = vpack.c.b16 %v552, %v552
      %v585 = vpack.c.b16 %v553, %v553
      %v586 = vpack.c.b16 %v554, %v554
      %v587 = vpack.c.b16 %v555, %v555
      %v588 = vpack.c.b16 %v556, %v556
      %v589 = vpack.c.b16 %v557, %v557
      %v590 = vpack.c.b16 %v558, %v558
      %v591 = vpack.c.b16 %v559, %v559
      %v592 = vpack.c.b16 %v560, %v560
      %v593 = vpack.c.b16 %v561, %v561
      %v594 = vpack.c.b16 %v562, %v562
      %v595 = vpack.c.b16 %v563, %v563
      %v596 = vpack.c.b16 %v564, %v564
      %629 = vst [vmem:[%s145] sm:$0xf] %v565
      %630 = vst [vmem:[%s145 + $0x4] sm:$0xf] %v566
      %631 = vst [vmem:[%s145 + $0x8] sm:$0xf] %v567
      %632 = vst [vmem:[%s145 + $0xc] sm:$0xf] %v568
      %633 = vst [vmem:[%s145 + $0x10] sm:$0xf] %v569
      %634 = vst [vmem:[%s145 + $0x14] sm:$0xf] %v570
      %635 = vst [vmem:[%s145 + $0x18] sm:$0xf] %v571
      %636 = vst [vmem:[%s145 + $0x1c] sm:$0xf] %v572
      %637 = vst [vmem:[%s145 + $0x20] sm:$0xf] %v573
      %638 = vst [vmem:[%s145 + $0x24] sm:$0xf] %v574
      %639 = vst [vmem:[%s145 + $0x28] sm:$0xf] %v575
      %640 = vst [vmem:[%s145 + $0x2c] sm:$0xf] %v576
      %641 = vst [vmem:[%s145 + $0x30] sm:$0xf] %v577
      %642 = vst [vmem:[%s145 + $0x34] sm:$0xf] %v578
      %643 = vst [vmem:[%s145 + $0x38] sm:$0xf] %v579
      %644 = vst [vmem:[%s145 + $0x3c] sm:$0xf] %v580
      %645 = vst [vmem:[%s145 + $0x40] sm:$0xf] %v581
      %646 = vst [vmem:[%s145 + $0x44] sm:$0xf] %v582
      %647 = vst [vmem:[%s145 + $0x48] sm:$0xf] %v583
      %648 = vst [vmem:[%s145 + $0x4c] sm:$0xf] %v584
      %649 = vst [vmem:[%s145 + $0x50] sm:$0xf] %v585
      %650 = vst [vmem:[%s145 + $0x54] sm:$0xf] %v586
      %651 = vst [vmem:[%s145 + $0x58] sm:$0xf] %v587
      %652 = vst [vmem:[%s145 + $0x5c] sm:$0xf] %v588
      %653 = vst [vmem:[%s145 + $0x60] sm:$0xf] %v589
      %654 = vst [vmem:[%s145 + $0x64] sm:$0xf] %v590
      %655 = vst [vmem:[%s145 + $0x68] sm:$0xf] %v591
      %656 = vst [vmem:[%s145 + $0x6c] sm:$0xf] %v592
      %657 = vst [vmem:[%s145 + $0x70] sm:$0xf] %v593
      %658 = vst [vmem:[%s145 + $0x74] sm:$0xf] %v594
      %659 = vst [vmem:[%s145 + $0x78] sm:$0xf] %v595
      %660 = vst [vmem:[%s145 + $0x7c] sm:$0xf] %v596
      %s661 = smul.u32 32, %s13
      %p662 = scmp.lt.s32.totalorder %s661, 63
      %s663 = scalar_select %p662, %s661, 63
      %s664 = smul.addr %s663, 4
      %s665 = scalar_lea.vmem %s2, %s664
      // Predicated region
      $region29: #{gcn_forward.4} parent=27 // pred_check
        %p666 = pneg %p78
      $region30: #{gcn_forward.4} parent=27 // pred_check_branch
        %668 = sbr.rel (%p666) target = $region32
      $region31: #{gcn_forward.4} parent=27 // pred_region
        %s669 = smul.u32 32, %s13
      $region32: #{gcn_forward.4} parent=27 // pred_fallthru
        _
    $region28: #{gcn_forward.4} parent=5 // pred_fallthru
      _
    %p670 = scmp.le.s32.totalorder 2, %s8
    // Predicated region
    $region33: #{gcn_forward.4} parent=5 // pred_check
      %p671 = pneg %p670
    $region34: #{gcn_forward.4} parent=5 // pred_check_branch
      %673 = sbr.rel (%p671) target = $region36
    $region35: #{gcn_forward.4} parent=5 // pred_region
      %s674 = ssub.s32 %s8, 2
      // Predicated region
      $region37: #{gcn_forward.4} parent=35 // pred_check
        %p675 = pneg %p84
      $region38: #{gcn_forward.4} parent=35 // pred_check_branch
        %677 = sbr.rel (%p675) target = $region40
      $region39: #{gcn_forward.4} parent=35 // pred_region
        %s678 = smul.u32 32, %s14
        %p679 = scmp.lt.s32.totalorder %s678, 63
        %s680 = scalar_select %p679, %s678, 63
        %s681 = smul.addr %s680, 4
        %s682 = scalar_lea.vmem %s2, %s681
      $region40: #{gcn_forward.4} parent=35 // pred_fallthru
        _
    $region36: #{gcn_forward.4} parent=5 // pred_fallthru
      _
  $region6: #{gcn_forward.4} parent=0 // loop_footer
    %s12 = sadd.s32 1, %s8
  $region7: #{gcn_forward.4} parent=0 // loop_footer_branch
    %7 = sbr.rel target = $region3
  $region8: #{gcn_forward.4} parent=0 // loop_exit
    _

// kernel: gcn_forward.5
$region0: #{gcn_forward.5}
  #allocation0 [shape = 'u32[]', space=smem, size = 0x4, offset = 0x4, fixed_abs, tag = 'smem constant byte address 0x4 - core index']
  #allocation1 [shape = 'u32[144,128]{1,0:T(1,128)}', space=vmem, size = 0x12000, scoped, tag = 'internal scratch']
  #allocation2 [shape = 'f32[256,128]{1,0:T(8,128)}', space=vmem, size = 0x20000, scoped, tag = 'scratch operand']
  %s0 = inlined_call_operand.vmem [shape: bf16[512,512], index: 0, kind: input, shape index: {}]
  %s1 = inlined_call_operand.vmem [shape: bf16[512,128], index: 1, kind: input, shape index: {}]
  %s2 = inlined_call_operand.vmem [shape: f32[1,128], index: 2, kind: input, shape index: {}]
  %s3 = inlined_call_operand.vmem [shape: bf16[512,128], index: 3, kind: output, shape index: {}]
  %s4 = sld [smem:[#allocation0]]
  $region91: #{gcn_forward.5} parent=0
    _
  %s6 = ssub.s32 1, %s4
  %s7 = scalar_select 0, %s6, %s4
  $region1: #{gcn_forward.5} parent=0
    #allocation3 [shape = 'u8[262144]{0}', space=vmem, size = 0x40000, scoped, tag = 'input window, operand 0']
    loop: start=0, step=1, limit=6
    $region2: #{gcn_forward.5} parent=1 // loop_pre_header
      _
    $region3: #{gcn_forward.5} parent=1 // loop_header
      %s9 = sphi 0, %s13
      %p10 = scmp.ge.s32.totalorder %s9, 6
      %s16 = sphi 0, %s28
      %s17 = sphi 0, %s24
      %s18 = sphi 0, %s16
      %s19 = sphi 0, %s17
      %s20 = sphi 0, %s18
      %s21 = sphi 0, %s19
      %s33 = sphi 0, %s35
      %s36 = sphi 0, %s33
      %s37 = sphi 0, %s36
      %s53 = sphi 0, %s37
      %s59 = sphi 0, %s61
      %s62 = sphi 0, %s59
      %s63 = sphi 0, %s62
      %s79 = sphi 0, %s63
      %s83 = sphi 0, %s83
      %s85 = sphi 0, %s83
      %s86 = sphi 0, %s85
      %s100 = sphi 0, %s86
      %s106 = sphi 0, %s108
      %s109 = sphi 0, %s106
      %s110 = sphi 0, %s109
      %s126 = sphi 0, %s110
    $region4: #{gcn_forward.5} parent=1 // loop_header_branch
      %12 = sbr.rel (%p10) target = $region8
    $region5: #{gcn_forward.5} parent=1 // loop_body
      %s14 = ssub.s32 %s9, 1
      %s15 = ssub.s32 %s9, 2
      %s22 = sadd.s32 1, %s17
      %p23 = scmp.ge.s32.totalorder %s22, 2
      %s24 = scalar_select %p23, 0, %s22
      %s25 = sadd.s32 1, %s16
      %s26 = scalar_select %p23, %s25, %s16
      %p27 = scmp.ge.s32.totalorder %s26, 2
      %s28 = scalar_select %p27, 0, %s26
      %s29 = ssub.s32 %s16, %s28
      %s30 = ssub.s32 %s17, %s24
      %s31 = sor.u32 %s29, %s30
      %p32 = scmp.eq.s32.totalorder %s31, 0
      %s34 = sadd.s32 %s33, 1
      %s35 = scalar_select %p32, %s33, %s34
      %p38 = pneg %p32
      %p39 = scmp.eq.s32.totalorder %s9, 3
      %p40 = por %p38, %p39
      %p41 = scmp.ne.s32.totalorder %s33, %s36
      %p42 = scmp.eq.s32.totalorder %s9, 0
      %p43 = por %p41, %p42
      %p44 = scmp.ne.s32.totalorder %s33, %s36
      %p45 = scmp.eq.s32.totalorder %s14, 3
      %p46 = por %p44, %p45
      %p47 = scmp.ne.s32.totalorder %s36, %s37
      %p48 = scmp.eq.s32.totalorder %s14, 0
      %p49 = por %p47, %p48
      %p50 = scmp.ne.s32.totalorder %s36, %s37
      %p51 = scmp.eq.s32.totalorder %s15, 3
      %p52 = por %p50, %p51
      %p54 = scmp.ne.s32.totalorder %s37, %s53
      %p55 = scmp.eq.s32.totalorder %s15, 0
      %p56 = por %p54, %p55
      %s57 = ssub.s32 %s17, %s24
      %p58 = scmp.eq.s32.totalorder %s57, 0
      %s60 = sadd.s32 %s59, 1
      %s61 = scalar_select %p58, %s59, %s60
      %p64 = pneg %p58
      %p65 = scmp.eq.s32.totalorder %s9, 3
      %p66 = por %p64, %p65
      %p67 = scmp.ne.s32.totalorder %s59, %s62
      %p68 = scmp.eq.s32.totalorder %s9, 0
      %p69 = por %p67, %p68
      %p70 = scmp.ne.s32.totalorder %s59, %s62
      %p71 = scmp.eq.s32.totalorder %s14, 3
      %p72 = por %p70, %p71
      %p73 = scmp.ne.s32.totalorder %s62, %s63
      %p74 = scmp.eq.s32.totalorder %s14, 0
      %p75 = por %p73, %p74
      %p76 = scmp.ne.s32.totalorder %s62, %s63
      %p77 = scmp.eq.s32.totalorder %s15, 3
      %p78 = por %p76, %p77
      %p80 = scmp.ne.s32.totalorder %s63, %s79
      %p81 = scmp.eq.s32.totalorder %s15, 0
      %p82 = por %p80, %p81
      %s84 = sadd.s32 %s83, 1
      %p87 = scmp.eq.s32.totalorder %s9, 3
      %p88 = scmp.ne.s32.totalorder %s83, %s85
      %p89 = scmp.eq.s32.totalorder %s9, 0
      %p90 = por %p88, %p89
      %p91 = scmp.ne.s32.totalorder %s83, %s85
      %p92 = scmp.eq.s32.totalorder %s14, 3
      %p93 = por %p91, %p92
      %p94 = scmp.ne.s32.totalorder %s85, %s86
      %p95 = scmp.eq.s32.totalorder %s14, 0
      %p96 = por %p94, %p95
      %p97 = scmp.ne.s32.totalorder %s85, %s86
      %p98 = scmp.eq.s32.totalorder %s15, 3
      %p99 = por %p97, %p98
      %p101 = scmp.ne.s32.totalorder %s86, %s100
      %p102 = scmp.eq.s32.totalorder %s15, 0
      %p103 = por %p101, %p102
      %s104 = ssub.s32 %s16, %s28
      %p105 = scmp.eq.s32.totalorder %s104, 0
      %s107 = sadd.s32 %s106, 1
      %s108 = scalar_select %p105, %s106, %s107
      %p111 = pneg %p105
      %p112 = scmp.eq.s32.totalorder %s9, 3
      %p113 = por %p111, %p112
      %p114 = scmp.ne.s32.totalorder %s106, %s109
      %p115 = scmp.eq.s32.totalorder %s9, 0
      %p116 = por %p114, %p115
      %p117 = scmp.ne.s32.totalorder %s106, %s109
      %p118 = scmp.eq.s32.totalorder %s14, 3
      %p119 = por %p117, %p118
      %p120 = scmp.ne.s32.totalorder %s109, %s110
      %p121 = scmp.eq.s32.totalorder %s14, 0
      %p122 = por %p120, %p121
      %p123 = scmp.ne.s32.totalorder %s109, %s110
      %p124 = scmp.eq.s32.totalorder %s15, 3
      %p125 = por %p123, %p124
      %p127 = scmp.ne.s32.totalorder %s110, %s126
      %p128 = scmp.eq.s32.totalorder %s15, 0
      %p129 = por %p127, %p128
      %p130 = scmp.le.s32.totalorder 1, %s9
      %p131 = scmp.lt.s32.totalorder %s9, 5
      %p132 = pnand %p130, %p131
      %p133 = pneg %p132
      // Predicated region
      $region9: #{gcn_forward.5} parent=5 // pred_check
        _
      $region10: #{gcn_forward.5} parent=5 // pred_check_branch
        %135 = sbr.rel (%p132) target = $region12
      $region11: #{gcn_forward.5} parent=5 // pred_region
        %s136 = ssub.s32 %s9, 1
        // Predicated region
        $region13: #{gcn_forward.5} parent=11 // pred_check
          %p137 = pneg %p96
        $region14: #{gcn_forward.5} parent=11 // pred_check_branch
          %139 = sbr.rel (%p137) target = $region16
        $region15: #{gcn_forward.5} parent=11 // pred_region
          _
        $region16: #{gcn_forward.5} parent=11 // pred_fallthru
          _
      $region12: #{gcn_forward.5} parent=5 // pred_fallthru
        _
      %p140 = scmp.lt.s32.totalorder %s9, 4
      // Predicated region
      $region17: #{gcn_forward.5} parent=5 // pred_check
        %p141 = pneg %p140
      $region18: #{gcn_forward.5} parent=5 // pred_check_branch
        %143 = sbr.rel (%p141) target = $region20
      $region19: #{gcn_forward.5} parent=5 // pred_region
        // Predicated region
        $region21: #{gcn_forward.5} parent=19 // pred_check
          %p144 = pneg %p43
        $region22: #{gcn_forward.5} parent=19 // pred_check_branch
          %146 = sbr.rel (%p144) target = $region24
        $region23: #{gcn_forward.5} parent=19 // pred_region
          %s147 = sand.u32 %s33, 1
          %s148 = sand.u32 %s33, 1
          %s149 = smul.addr %s148, 256
          %s150 = scalar_lea.vmem [#allocation3], %s149
          %s151 = smul.u32 32, %s16
          %s152 = smul.u32 2, %s17
          %s153 = smul.addr %s151, 4
          %s154 = sadd.s32 %s152, %s153
          %s155 = smul.addr %s154, 4
          %s156 = scalar_lea.vmem %s0, %s155
          // Predicated region
          $region25: #{gcn_forward.5} parent=23 // pred_check
            _
          $region26: #{gcn_forward.5} parent=23 // pred_check_branch
            %158 = sbr.rel (0) target = $region28
          $region27: #{gcn_forward.5} parent=23 // pred_region
            // Predicated region
            $region29: #{gcn_forward.5} parent=27 // pred_check
              _
            $region30: #{gcn_forward.5} parent=27 // pred_check_branch
              %160 = sbr.rel (0) target = $region32
            $region31: #{gcn_forward.5} parent=27 // pred_region
              // Predicated region
              $region44: #{gcn_forward.5} parent=31 // pred_check
                _
              $region45: #{gcn_forward.5} parent=31 // pred_check_branch
                %237 = sbr.rel (0) target = $region47
              $region46: #{gcn_forward.5} parent=31 // pred_region
                loop: start=0, step=1, limit=1
                $region48: #{gcn_forward.5} parent=46 // loop_pre_header
                  _
                $region49: #{gcn_forward.5} parent=46 // loop_header
                  %s239 = sphi 0, %s243
                  %p240 = scmp.ge.s32.totalorder %s239, 1
                  %s244 = sphi %s156, %s156
                  %s245 = sphi %s150, %s150
                $region50: #{gcn_forward.5} parent=46 // loop_header_branch
                  %242 = sbr.rel (%p240) target = $region54
                $region51: #{gcn_forward.5} parent=46 // loop_body
                  %v246 = vld [vmem:[%s244] sm:$0xff]
                  %247 = vst [vmem:[%s245] sm:$0xff] %v246
                  %v248 = vld [vmem:[%s244 + $0x10] sm:$0xff]
                  %249 = vst [vmem:[%s245 + $0x8] sm:$0xff] %v248
                  %v250 = vld [vmem:[%s244 + $0x20] sm:$0xff]
                  %251 = vst [vmem:[%s245 + $0x10] sm:$0xff] %v250
                  %v252 = vld [vmem:[%s244 + $0x30] sm:$0xff]
                  %253 = vst [vmem:[%s245 + $0x18] sm:$0xff] %v252
                  %v254 = vld [vmem:[%s244 + $0x40] sm:$0xff]
                  %255 = vst [vmem:[%s245 + $0x20] sm:$0xff] %v254
                  %v256 = vld [vmem:[%s244 + $0x50] sm:$0xff]
                  %257 = vst [vmem:[%s245 + $0x28] sm:$0xff] %v256
                  %v258 = vld [vmem:[%s244 + $0x60] sm:$0xff]
                  %259 = vst [vmem:[%s245 + $0x30] sm:$0xff] %v258
                  %v260 = vld [vmem:[%s244 + $0x70] sm:$0xff]
                  %261 = vst [vmem:[%s245 + $0x38] sm:$0xff] %v260
                  %v262 = vld [vmem:[%s244 + $0x80] sm:$0xff]
                  %263 = vst [vmem:[%s245 + $0x40] sm:$0xff] %v262
                  %v264 = vld [vmem:[%s244 + $0x90] sm:$0xff]
                  %265 = vst [vmem:[%s245 + $0x48] sm:$0xff] %v264
                  %v266 = vld [vmem:[%s244 + $0xa0] sm:$0xff]
                  %267 = vst [vmem:[%s245 + $0x50] sm:$0xff] %v266
                  %v268 = vld [vmem:[%s244 + $0xb0] sm:$0xff]
                  %269 = vst [vmem:[%s245 + $0x58] sm:$0xff] %v268
                  %v270 = vld [vmem:[%s244 + $0xc0] sm:$0xff]
                  %271 = vst [vmem:[%s245 + $0x60] sm:$0xff] %v270
                  %v272 = vld [vmem:[%s244 + $0xd0] sm:$0xff]
                  %273 = vst [vmem:[%s245 + $0x68] sm:$0xff] %v272
                  %v274 = vld [vmem:[%s244 + $0xe0] sm:$0xff]
                  %275 = vst [vmem:[%s245 + $0x70] sm:$0xff] %v274
                  %v276 = vld [vmem:[%s244 + $0xf0] sm:$0xff]
                  %277 = vst [vmem:[%s245 + $0x78] sm:$0xff] %v276
                  %v278 = vld [vmem:[%s244 + $0x100] sm:$0xff]
                  %279 = vst [vmem:[%s245 + $0x80] sm:$0xff] %v278
                  %v280 = vld [vmem:[%s244 + $0x110] sm:$0xff]
                  %281 = vst [vmem:[%s245 + $0x88] sm:$0xff] %v280
                  %v282 = vld [vmem:[%s244 + $0x120] sm:$0xff]
                  %283 = vst [vmem:[%s245 + $0x90] sm:$0xff] %v282
                  %v284 = vld [vmem:[%s244 + $0x130] sm:$0xff]
                  %285 = vst [vmem:[%s245 + $0x98] sm:$0xff] %v284
                  %v286 = vld [vmem:[%s244 + $0x140] sm:$0xff]
                  %287 = vst [vmem:[%s245 + $0xa0] sm:$0xff] %v286
                  %v288 = vld [vmem:[%s244 + $0x150] sm:$0xff]
                  %289 = vst [vmem:[%s245 + $0xa8] sm:$0xff] %v288
                  %v290 = vld [vmem:[%s244 + $0x160] sm:$0xff]
                  %291 = vst [vmem:[%s245 + $0xb0] sm:$0xff] %v290
                  %v292 = vld [vmem:[%s244 + $0x170] sm:$0xff]
                  %293 = vst [vmem:[%s245 + $0xb8] sm:$0xff] %v292
                  %v294 = vld [vmem:[%s244 + $0x180] sm:$0xff]
                  %295 = vst [vmem:[%s245 + $0xc0] sm:$0xff] %v294
                  %v296 = vld [vmem:[%s244 + $0x190] sm:$0xff]
                  %297 = vst [vmem:[%s245 + $0xc8] sm:$0xff] %v296
                  %v298 = vld [vmem:[%s244 + $0x1a0] sm:$0xff]
                  %299 = vst [vmem:[%s245 + $0xd0] sm:$0xff] %v298
                  %v300 = vld [vmem:[%s244 + $0x1b0] sm:$0xff]
                  %301 = vst [vmem:[%s245 + $0xd8] sm:$0xff] %v300
                  %v302 = vld [vmem:[%s244 + $0x1c0] sm:$0xff]
                  %303 = vst [vmem:[%s245 + $0xe0] sm:$0xff] %v302
                  %v304 = vld [vmem:[%s244 + $0x1d0] sm:$0xff]
                  %305 = vst [vmem:[%s245 + $0xe8] sm:$0xff] %v304
                  %v306 = vld [vmem:[%s244 + $0x1e0] sm:$0xff]
                  %307 = vst [vmem:[%s245 + $0xf0] sm:$0xff] %v306
                  %v308 = vld [vmem:[%s244 + $0x1f0] sm:$0xff]
                  %309 = vst [vmem:[%s245 + $0xf8] sm:$0xff] %v308
                $region52: #{gcn_forward.5} parent=46 // loop_footer
                  %s243 = sadd.s32 1, %s239
                $region53: #{gcn_forward.5} parent=46 // loop_footer_branch
                  %238 = sbr.rel target = $region49
                $region54: #{gcn_forward.5} parent=46 // loop_exit
                  _
              $region47: #{gcn_forward.5} parent=31 // pred_fallthru
                _
              // Predicated region
              $region55: #{gcn_forward.5} parent=31 // pred_check
                _
              $region56: #{gcn_forward.5} parent=31 // pred_check_branch
                %311 = sbr.rel target = $region58
              $region57: #{gcn_forward.5} parent=31 // pred_region
                _
              $region58: #{gcn_forward.5} parent=31 // pred_fallthru
                _
            $region32: #{gcn_forward.5} parent=27 // pred_fallthru
              _
            // Predicated region
            $region33: #{gcn_forward.5} parent=27 // pred_check
              _
            $region34: #{gcn_forward.5} parent=27 // pred_check_branch
              %162 = sbr.rel target = $region36
            $region35: #{gcn_forward.5} parent=27 // pred_region
              loop: start=0, step=1, limit=1
              $region37: #{gcn_forward.5} parent=35 // loop_pre_header
                _
              $region38: #{gcn_forward.5} parent=35 // loop_header
                %s165 = sphi 0, %s169
                %p166 = scmp.ge.s32.totalorder %s165, 1
                %s170 = sphi %s156, %s156
                %s171 = sphi %s150, %s150
              $region39: #{gcn_forward.5} parent=35 // loop_header_branch
                %168 = sbr.rel (%p166) target = $region43
              $region40: #{gcn_forward.5} parent=35 // loop_body
                %v172 = vld [vmem:[%s170] sm:$0xff]
                %173 = vst [vmem:[%s171] sm:$0xff] %v172
                %v174 = vld [vmem:[%s170 + $0x10] sm:$0xff]
                %175 = vst [vmem:[%s171 + $0x8] sm:$0xff] %v174
                %v176 = vld [vmem:[%s170 + $0x20] sm:$0xff]
                %177 = vst [vmem:[%s171 + $0x10] sm:$0xff] %v176
                %v178 = vld [vmem:[%s170 + $0x30] sm:$0xff]
                %179 = vst [vmem:[%s171 + $0x18] sm:$0xff] %v178
                %v180 = vld [vmem:[%s170 + $0x40] sm:$0xff]
                %181 = vst [vmem:[%s171 + $0x20] sm:$0xff] %v180
                %v182 = vld [vmem:[%s170 + $0x50] sm:$0xff]
                %183 = vst [vmem:[%s171 + $0x28] sm:$0xff] %v182
                %v184 = vld [vmem:[%s170 + $0x60] sm:$0xff]
                %185 = vst [vmem:[%s171 + $0x30] sm:$0xff] %v184
                %v186 = vld [vmem:[%s170 + $0x70] sm:$0xff]
                %187 = vst [vmem:[%s171 + $0x38] sm:$0xff] %v186
                %v188 = vld [vmem:[%s170 + $0x80] sm:$0xff]
                %189 = vst [vmem:[%s171 + $0x40] sm:$0xff] %v188
                %v190 = vld [vmem:[%s170 + $0x90] sm:$0xff]
                %191 = vst [vmem:[%s171 + $0x48] sm:$0xff] %v190
                %v192 = vld [vmem:[%s170 + $0xa0] sm:$0xff]
                %193 = vst [vmem:[%s171 + $0x50] sm:$0xff] %v192
                %v194 = vld [vmem:[%s170 + $0xb0] sm:$0xff]
                %195 = vst [vmem:[%s171 + $0x58] sm:$0xff] %v194
                %v196 = vld [vmem:[%s170 + $0xc0] sm:$0xff]
                %197 = vst [vmem:[%s171 + $0x60] sm:$0xff] %v196
                %v198 = vld [vmem:[%s170 + $0xd0] sm:$0xff]
                %199 = vst [vmem:[%s171 + $0x68] sm:$0xff] %v198
                %v200 = vld [vmem:[%s170 + $0xe0] sm:$0xff]
                %201 = vst [vmem:[%s171 + $0x70] sm:$0xff] %v200
                %v202 = vld [vmem:[%s170 + $0xf0] sm:$0xff]
                %203 = vst [vmem:[%s171 + $0x78] sm:$0xff] %v202
                %v204 = vld [vmem:[%s170 + $0x100] sm:$0xff]
                %205 = vst [vmem:[%s171 + $0x80] sm:$0xff] %v204
                %v206 = vld [vmem:[%s170 + $0x110] sm:$0xff]
                %207 = vst [vmem:[%s171 + $0x88] sm:$0xff] %v206
                %v208 = vld [vmem:[%s170 + $0x120] sm:$0xff]
                %209 = vst [vmem:[%s171 + $0x90] sm:$0xff] %v208
                %v210 = vld [vmem:[%s170 + $0x130] sm:$0xff]
                %211 = vst [vmem:[%s171 + $0x98] sm:$0xff] %v210
                %v212 = vld [vmem:[%s170 + $0x140] sm:$0xff]
                %213 = vst [vmem:[%s171 + $0xa0] sm:$0xff] %v212
                %v214 = vld [vmem:[%s170 + $0x150] sm:$0xff]
                %215 = vst [vmem:[%s171 + $0xa8] sm:$0xff] %v214
                %v216 = vld [vmem:[%s170 + $0x160] sm:$0xff]
                %217 = vst [vmem:[%s171 + $0xb0] sm:$0xff] %v216
                %v218 = vld [vmem:[%s170 + $0x170] sm:$0xff]
                %219 = vst [vmem:[%s171 + $0xb8] sm:$0xff] %v218
                %v220 = vld [vmem:[%s170 + $0x180] sm:$0xff]
                %221 = vst [vmem:[%s171 + $0xc0] sm:$0xff] %v220
                %v222 = vld [vmem:[%s170 + $0x190] sm:$0xff]
                %223 = vst [vmem:[%s171 + $0xc8] sm:$0xff] %v222
                %v224 = vld [vmem:[%s170 + $0x1a0] sm:$0xff]
                %225 = vst [vmem:[%s171 + $0xd0] sm:$0xff] %v224
                %v226 = vld [vmem:[%s170 + $0x1b0] sm:$0xff]
                %227 = vst [vmem:[%s171 + $0xd8] sm:$0xff] %v226
                %v228 = vld [vmem:[%s170 + $0x1c0] sm:$0xff]
                %229 = vst [vmem:[%s171 + $0xe0] sm:$0xff] %v228
                %v230 = vld [vmem:[%s170 + $0x1d0] sm:$0xff]
                %231 = vst [vmem:[%s171 + $0xe8] sm:$0xff] %v230
                %v232 = vld [vmem:[%s170 + $0x1e0] sm:$0xff]
                %233 = vst [vmem:[%s171 + $0xf0] sm:$0xff] %v232
                %v234 = vld [vmem:[%s170 + $0x1f0] sm:$0xff]
                %235 = vst [vmem:[%s171 + $0xf8] sm:$0xff] %v234
              $region41: #{gcn_forward.5} parent=35 // loop_footer
                %s169 = sadd.s32 1, %s165
              $region42: #{gcn_forward.5} parent=35 // loop_footer_branch
                %164 = sbr.rel target = $region38
              $region43: #{gcn_forward.5} parent=35 // loop_exit
                _
            $region36: #{gcn_forward.5} parent=27 // pred_fallthru
              _
          $region28: #{gcn_forward.5} parent=23 // pred_fallthru
            _
          %312 = vnop
        $region24: #{gcn_forward.5} parent=19 // pred_fallthru
          _
        // Predicated region
        $region59: #{gcn_forward.5} parent=19 // pred_check
          %p313 = pneg %p69
        $region60: #{gcn_forward.5} parent=19 // pred_check_branch
          %315 = sbr.rel (%p313) target = $region62
        $region61: #{gcn_forward.5} parent=19 // pred_region
          %s316 = smul.u32 32, %s17
          %p317 = scmp.lt.s32.totalorder %s316, 63
          %s318 = scalar_select %p317, %s316, 63
          %s319 = smul.addr %s318, 4
          %s320 = scalar_lea.vmem %s1, %s319
          %s321 = smul.u32 32, %s17
        $region62: #{gcn_forward.5} parent=19 // pred_fallthru
          _
      $region20: #{gcn_forward.5} parent=5 // pred_fallthru
        _
      %p322 = scmp.le.s32.totalorder 1, %s9
      %p323 = scmp.lt.s32.totalorder %s9, 5
      %p324 = pnand %p322, %p323
      %p325 = pneg %p324
      // Predicated region
      $region63: #{gcn_forward.5} parent=5 // pred_check
        _
      $region64: #{gcn_forward.5} parent=5 // pred_check_branch
        %327 = sbr.rel (%p324) target = $region66
      $region65: #{gcn_forward.5} parent=5 // pred_region
        %s328 = ssub.s32 %s9, 1
        %s329 = sand.u32 %s36, 1
        %s330 = sand.u32 %s36, 1
        %s331 = smul.addr %s330, 256
        %s332 = scalar_lea.vmem [#allocation3], %s331
        // Predicated region
        $region67: #{gcn_forward.5} parent=65 // pred_check
          %p333 = pneg %p49
        $region68: #{gcn_forward.5} parent=65 // pred_check_branch
          %335 = sbr.rel (%p333) target = $region70
        $region69: #{gcn_forward.5} parent=65 // pred_region
          _
        $region70: #{gcn_forward.5} parent=65 // pred_fallthru
          _
        %s336 = sand.u32 %s36, 1
        %s337 = sand.u32 %s36, 1
        %s338 = smul.addr %s337, 256
        %s339 = scalar_lea.vmem [#allocation3], %s338
        %p340 = pneg %p49
        %p341 = pneg %p46
        %s342 = smul.u32 32, %s19
        %p343 = scmp.lt.s32.totalorder %s342, 63
        %s344 = scalar_select %p343, %s342, 63
        %s345 = smul.addr %s344, 4
        %s346 = scalar_lea.vmem %s1, %s345
        %p347 = pneg %p75
        %p348 = pneg %p72
        %p349 = pneg %p96
        %p350 = pneg %p93
        %p351 = pneg %p122
        %p352 = pneg %p119
        %s353 = smul.u32 32, %s18
        %p354 = scmp.lt.s32.totalorder %s353, 63
        %s355 = scalar_select %p354, %s353, 63
        %s356 = smul.addr %s355, 4
        %s357 = scalar_lea.vmem %s3, %s356
        %s358 = smul.u32 32, %s18
        %s359 = smul.u32 2, %s19
        %s360 = smul.u32 32, %s19
        %p361 = scmp.lt.s32.totalorder %s360, 63
        %s362 = scalar_select %p361, %s360, 63
        %s363 = smul.addr %s362, 4
        %s364 = scalar_lea.vmem %s1, %s363
        %s365 = smul.u32 32, %s19
        %s366 = smul.u32 32, %s18
        %p367 = scmp.lt.s32.totalorder %s366, 63
        %s368 = scalar_select %p367, %s366, 63
        %s369 = smul.addr %s368, 4
        %s370 = scalar_lea.vmem %s3, %s369
        %s371 = smul.u32 32, %s18
        %p373 = scmp.eq.s32.totalorder %s19, 0
        // Predicated region
        $region71: #{gcn_forward.5} parent=65 // pred_check
          %p374 = pneg %p373
        $region72: #{gcn_forward.5} parent=65 // pred_check_branch
          %376 = sbr.rel (%p374) target = $region74
        $region73: #{gcn_forward.5} parent=65 // pred_region
          %377 = vst [vmem:[#allocation2] sm:$0xff] 0.0
          %378 = vst [vmem:[#allocation2 + $0x8] sm:$0xff] 0.0
          %379 = vst [vmem:[#allocation2 + $0x10] sm:$0xff] 0.0
          %380 = vst [vmem:[#allocation2 + $0x18] sm:$0xff] 0.0
          %381 = vst [vmem:[#allocation2 + $0x20] sm:$0xff] 0.0
          %382 = vst [vmem:[#allocation2 + $0x28] sm:$0xff] 0.0
          %383 = vst [vmem:[#allocation2 + $0x30] sm:$0xff] 0.0
          %384 = vst [vmem:[#allocation2 + $0x38] sm:$0xff] 0.0
          %385 = vst [vmem:[#allocation2 + $0x40] sm:$0xff] 0.0
          %386 = vst [vmem:[#allocation2 + $0x48] sm:$0xff] 0.0
          %387 = vst [vmem:[#allocation2 + $0x50] sm:$0xff] 0.0
          %388 = vst [vmem:[#allocation2 + $0x58] sm:$0xff] 0.0
          %389 = vst [vmem:[#allocation2 + $0x60] sm:$0xff] 0.0
          %390 = vst [vmem:[#allocation2 + $0x68] sm:$0xff] 0.0
          %391 = vst [vmem:[#allocation2 + $0x70] sm:$0xff] 0.0
          %392 = vst [vmem:[#allocation2 + $0x78] sm:$0xff] 0.0
          %393 = vst [vmem:[#allocation2 + $0x80] sm:$0xff] 0.0
          %394 = vst [vmem:[#allocation2 + $0x88] sm:$0xff] 0.0
          %395 = vst [vmem:[#allocation2 + $0x90] sm:$0xff] 0.0
          %396 = vst [vmem:[#allocation2 + $0x98] sm:$0xff] 0.0
          %397 = vst [vmem:[#allocation2 + $0xa0] sm:$0xff] 0.0
          %398 = vst [vmem:[#allocation2 + $0xa8] sm:$0xff] 0.0
          %399 = vst [vmem:[#allocation2 + $0xb0] sm:$0xff] 0.0
          %400 = vst [vmem:[#allocation2 + $0xb8] sm:$0xff] 0.0
          %401 = vst [vmem:[#allocation2 + $0xc0] sm:$0xff] 0.0
          %402 = vst [vmem:[#allocation2 + $0xc8] sm:$0xff] 0.0
          %403 = vst [vmem:[#allocation2 + $0xd0] sm:$0xff] 0.0
          %404 = vst [vmem:[#allocation2 + $0xd8] sm:$0xff] 0.0
          %405 = vst [vmem:[#allocation2 + $0xe0] sm:$0xff] 0.0
          %406 = vst [vmem:[#allocation2 + $0xe8] sm:$0xff] 0.0
          %407 = vst [vmem:[#allocation2 + $0xf0] sm:$0xff] 0.0
          %408 = vst [vmem:[#allocation2 + $0xf8] sm:$0xff] 0.0
        $region74: #{gcn_forward.5} parent=65 // pred_fallthru
          _
        %v409 = vld [vmem:[#allocation2] sm:$0xff]
        %v410 = vld [vmem:[#allocation2 + $0x8] sm:$0xff]
        %v411 = vld [vmem:[#allocation2 + $0x10] sm:$0xff]
        %v412 = vld [vmem:[#allocation2 + $0x18] sm:$0xff]
        %v413 = vld [vmem:[#allocation2 + $0x20] sm:$0xff]
        %v414 = vld [vmem:[#allocation2 + $0x28] sm:$0xff]
        %v415 = vld [vmem:[#allocation2 + $0x30] sm:$0xff]
        %v416 = vld [vmem:[#allocation2 + $0x38] sm:$0xff]
        %v417 = vld [vmem:[#allocation2 + $0x40] sm:$0xff]
        %v418 = vld [vmem:[#allocation2 + $0x48] sm:$0xff]
        %v419 = vld [vmem:[#allocation2 + $0x50] sm:$0xff]
        %v420 = vld [vmem:[#allocation2 + $0x58] sm:$0xff]
        %v421 = vld [vmem:[#allocation2 + $0x60] sm:$0xff]
        %v422 = vld [vmem:[#allocation2 + $0x68] sm:$0xff]
        %v423 = vld [vmem:[#allocation2 + $0x70] sm:$0xff]
        %v424 = vld [vmem:[#allocation2 + $0x78] sm:$0xff]
        %v425 = vld [vmem:[#allocation2 + $0x80] sm:$0xff]
        %v426 = vld [vmem:[#allocation2 + $0x88] sm:$0xff]
        %v427 = vld [vmem:[#allocation2 + $0x90] sm:$0xff]
        %v428 = vld [vmem:[#allocation2 + $0x98] sm:$0xff]
        %v429 = vld [vmem:[#allocation2 + $0xa0] sm:$0xff]
        %v430 = vld [vmem:[#allocation2 + $0xa8] sm:$0xff]
        %v431 = vld [vmem:[#allocation2 + $0xb0] sm:$0xff]
        %v432 = vld [vmem:[#allocation2 + $0xb8] sm:$0xff]
        %v433 = vld [vmem:[#allocation2 + $0xc0] sm:$0xff]
        %v434 = vld [vmem:[#allocation2 + $0xc8] sm:$0xff]
        %v435 = vld [vmem:[#allocation2 + $0xd0] sm:$0xff]
        %v436 = vld [vmem:[#allocation2 + $0xd8] sm:$0xff]
        %v437 = vld [vmem:[#allocation2 + $0xe0] sm:$0xff]
        %v438 = vld [vmem:[#allocation2 + $0xe8] sm:$0xff]
        %v439 = vld [vmem:[#allocation2 + $0xf0] sm:$0xff]
        %v440 = vld [vmem:[#allocation2 + $0xf8] sm:$0xff]
        %v441 = vld [vmem:[%s332] sm:$0xff]
        %v442 = vld [vmem:[%s332 + $0x8] sm:$0xff]
        %v443 = vld [vmem:[%s332 + $0x10] sm:$0xff]
        %v444 = vld [vmem:[%s332 + $0x18] sm:$0xff]
        %v445 = vld [vmem:[%s332 + $0x20] sm:$0xff]
        %v446 = vld [vmem:[%s332 + $0x28] sm:$0xff]
        %v447 = vld [vmem:[%s332 + $0x30] sm:$0xff]
        %v448 = vld [vmem:[%s332 + $0x38] sm:$0xff]
        %v449 = vld [vmem:[%s332 + $0x40] sm:$0xff]
        %v450 = vld [vmem:[%s332 + $0x48] sm:$0xff]
        %v451 = vld [vmem:[%s332 + $0x50] sm:$0xff]
        %v452 = vld [vmem:[%s332 + $0x58] sm:$0xff]
        %v453 = vld [vmem:[%s332 + $0x60] sm:$0xff]
        %v454 = vld [vmem:[%s332 + $0x68] sm:$0xff]
        %v455 = vld [vmem:[%s332 + $0x70] sm:$0xff]
        %v456 = vld [vmem:[%s332 + $0x78] sm:$0xff]
        %v457 = vld [vmem:[%s332 + $0x80] sm:$0xff]
        %v458 = vld [vmem:[%s332 + $0x88] sm:$0xff]
        %v459 = vld [vmem:[%s332 + $0x90] sm:$0xff]
        %v460 = vld [vmem:[%s332 + $0x98] sm:$0xff]
        %v461 = vld [vmem:[%s332 + $0xa0] sm:$0xff]
        %v462 = vld [vmem:[%s332 + $0xa8] sm:$0xff]
        %v463 = vld [vmem:[%s332 + $0xb0] sm:$0xff]
        %v464 = vld [vmem:[%s332 + $0xb8] sm:$0xff]
        %v465 = vld [vmem:[%s332 + $0xc0] sm:$0xff]
        %v466 = vld [vmem:[%s332 + $0xc8] sm:$0xff]
        %v467 = vld [vmem:[%s332 + $0xd0] sm:$0xff]
        %v468 = vld [vmem:[%s332 + $0xd8] sm:$0xff]
        %v469 = vld [vmem:[%s332 + $0xe0] sm:$0xff]
        %v470 = vld [vmem:[%s332 + $0xe8] sm:$0xff]
        %v471 = vld [vmem:[%s332 + $0xf0] sm:$0xff]
        %v472 = vld [vmem:[%s332 + $0xf8] sm:$0xff]
        %v473 = vld [vmem:[%s364] sm:$0xf]
        %v474 = vld [vmem:[%s364 + $0x4] sm:$0xf]
        %v475 = vld [vmem:[%s364 + $0x8] sm:$0xf]
        %v476 = vld [vmem:[%s364 + $0xc] sm:$0xf]
        %v477 = vld [vmem:[%s364 + $0x10] sm:$0xf]
        %v478 = vld [vmem:[%s364 + $0x14] sm:$0xf]
        %v479 = vld [vmem:[%s364 + $0x18] sm:$0xf]
        %v480 = vld [vmem:[%s364 + $0x1c] sm:$0xf]
        %v481 = vld [vmem:[%s364 + $0x20] sm:$0xf]
        %v482 = vld [vmem:[%s364 + $0x24] sm:$0xf]
        %v483 = vld [vmem:[%s364 + $0x28] sm:$0xf]
        %v484 = vld [vmem:[%s364 + $0x2c] sm:$0xf]
        %v485 = vld [vmem:[%s364 + $0x30] sm:$0xf]
        %v486 = vld [vmem:[%s364 + $0x34] sm:$0xf]
        %v487 = vld [vmem:[%s364 + $0x38] sm:$0xf]
        %v488 = vld [vmem:[%s364 + $0x3c] sm:$0xf]
        %v489 = vld [vmem:[%s364 + $0x40] sm:$0xf]
        %v490 = vld [vmem:[%s364 + $0x44] sm:$0xf]
        %v491 = vld [vmem:[%s364 + $0x48] sm:$0xf]
        %v492 = vld [vmem:[%s364 + $0x4c] sm:$0xf]
        %v493 = vld [vmem:[%s364 + $0x50] sm:$0xf]
        %v494 = vld [vmem:[%s364 + $0x54] sm:$0xf]
        %v495 = vld [vmem:[%s364 + $0x58] sm:$0xf]
        %v496 = vld [vmem:[%s364 + $0x5c] sm:$0xf]
        %v497 = vld [vmem:[%s364 + $0x60] sm:$0xf]
        %v498 = vld [vmem:[%s364 + $0x64] sm:$0xf]
        %v499 = vld [vmem:[%s364 + $0x68] sm:$0xf]
        %v500 = vld [vmem:[%s364 + $0x6c] sm:$0xf]
        %v501 = vld [vmem:[%s364 + $0x70] sm:$0xf]
        %v502 = vld [vmem:[%s364 + $0x74] sm:$0xf]
        %v503 = vld [vmem:[%s364 + $0x78] sm:$0xf]
        %v504 = vld [vmem:[%s364 + $0x7c] sm:$0xf]
        %v537 = vunpack.c.l.b16 %v441
        %v538 = vunpack.c.h.b16 %v441
        %v539 = vunpack.c.l.b16 %v442
        %v540 = vunpack.c.h.b16 %v442
        %v541 = vunpack.c.l.b16 %v443
        %v542 = vunpack.c.h.b16 %v443
        %v543 = vunpack.c.l.b16 %v444
        %v544 = vunpack.c.h.b16 %v444
        %v545 = vunpack.c.l.b16 %v445
        %v546 = vunpack.c.h.b16 %v445
        %v547 = vunpack.c.l.b16 %v446
        %v548 = vunpack.c.h.b16 %v446
        %v549 = vunpack.c.l.b16 %v447
        %v550 = vunpack.c.h.b16 %v447
        %v551 = vunpack.c.l.b16 %v448
        %v552 = vunpack.c.h.b16 %v448
        %v553 = vunpack.c.l.b16 %v449
        %v554 = vunpack.c.h.b16 %v449
        %v555 = vunpack.c.l.b16 %v450
        %v556 = vunpack.c.h.b16 %v450
        %v557 = vunpack.c.l.b16 %v451
        %v558 = vunpack.c.h.b16 %v451
        %v559 = vunpack.c.l.b16 %v452
        %v560 = vunpack.c.h.b16 %v452
        %v561 = vunpack.c.l.b16 %v453
        %v562 = vunpack.c.h.b16 %v453
        %v563 = vunpack.c.l.b16 %v454
        %v564 = vunpack.c.h.b16 %v454
        %v565 = vunpack.c.l.b16 %v455
        %v566 = vunpack.c.h.b16 %v455
        %v567 = vunpack.c.l.b16 %v456
        %v568 = vunpack.c.h.b16 %v456
        %v569 = vunpack.c.l.b16 %v457
        %v570 = vunpack.c.h.b16 %v457
        %v571 = vunpack.c.l.b16 %v458
        %v572 = vunpack.c.h.b16 %v458
        %v573 = vunpack.c.l.b16 %v459
        %v574 = vunpack.c.h.b16 %v459
        %v575 = vunpack.c.l.b16 %v460
        %v576 = vunpack.c.h.b16 %v460
        %v577 = vunpack.c.l.b16 %v461
        %v578 = vunpack.c.h.b16 %v461
        %v579 = vunpack.c.l.b16 %v462
        %v580 = vunpack.c.h.b16 %v462
        %v581 = vunpack.c.l.b16 %v463
        %v582 = vunpack.c.h.b16 %v463
        %v583 = vunpack.c.l.b16 %v464
        %v584 = vunpack.c.h.b16 %v464
        %v585 = vunpack.c.l.b16 %v465
        %v586 = vunpack.c.h.b16 %v465
        %v587 = vunpack.c.l.b16 %v466
        %v588 = vunpack.c.h.b16 %v466
        %v589 = vunpack.c.l.b16 %v467
        %v590 = vunpack.c.h.b16 %v467
        %v591 = vunpack.c.l.b16 %v468
        %v592 = vunpack.c.h.b16 %v468
        %v593 = vunpack.c.l.b16 %v469
        %v594 = vunpack.c.h.b16 %v469
        %v595 = vunpack.c.l.b16 %v470
        %v596 = vunpack.c.h.b16 %v470
        %v597 = vunpack.c.l.b16 %v471
        %v598 = vunpack.c.h.b16 %v471
        %v599 = vunpack.c.l.b16 %v472
        %v600 = vunpack.c.h.b16 %v472
        %v601 = vpack.c.b16 %v539, %v537
        %v602 = vpack.c.b16 %v540, %v538
        %v603 = vpack.c.b16 %v543, %v541
        %v604 = vpack.c.b16 %v544, %v542
        %v605 = vpack.c.b16 %v547, %v545
        %v606 = vpack.c.b16 %v548, %v546
        %v607 = vpack.c.b16 %v551, %v549
        %v608 = vpack.c.b16 %v552, %v550
        %v609 = vpack.c.b16 %v555, %v553
        %v610 = vpack.c.b16 %v556, %v554
        %v611 = vpack.c.b16 %v559, %v557
        %v612 = vpack.c.b16 %v560, %v558
        %v613 = vpack.c.b16 %v563, %v561
        %v614 = vpack.c.b16 %v564, %v562
        %v615 = vpack.c.b16 %v567, %v565
        %v616 = vpack.c.b16 %v568, %v566
        %v617 = vpack.c.b16 %v571, %v569
        %v618 = vpack.c.b16 %v572, %v570
        %v619 = vpack.c.b16 %v575, %v573
        %v620 = vpack.c.b16 %v576, %v574
        %v621 = vpack.c.b16 %v579, %v577
        %v622 = vpack.c.b16 %v580, %v578
        %v623 = vpack.c.b16 %v583, %v581
        %v624 = vpack.c.b16 %v584, %v582
        %v625 = vpack.c.b16 %v587, %v585
        %v626 = vpack.c.b16 %v588, %v586
        %v627 = vpack.c.b16 %v591, %v589
        %v628 = vpack.c.b16 %v592, %v590
        %v629 = vpack.c.b16 %v595, %v593
        %v630 = vpack.c.b16 %v596, %v594
        %v631 = vpack.c.b16 %v599, %v597
        %v632 = vpack.c.b16 %v600, %v598
        %v697 = vunpack.c.l.b16 %v473
        %v698 = vunpack.c.l.b16 %v474
        %v699 = vunpack.c.l.b16 %v475
        %v700 = vunpack.c.l.b16 %v476
        %v701 = vunpack.c.l.b16 %v477
        %v702 = vunpack.c.l.b16 %v478
        %v703 = vunpack.c.l.b16 %v479
        %v704 = vunpack.c.l.b16 %v480
        %v705 = vunpack.c.l.b16 %v481
        %v706 = vunpack.c.l.b16 %v482
        %v707 = vunpack.c.l.b16 %v483
        %v708 = vunpack.c.l.b16 %v484
        %v709 = vunpack.c.l.b16 %v485
        %v710 = vunpack.c.l.b16 %v486
        %v711 = vunpack.c.l.b16 %v487
        %v712 = vunpack.c.l.b16 %v488
        %v713 = vunpack.c.l.b16 %v489
        %v714 = vunpack.c.l.b16 %v490
        %v715 = vunpack.c.l.b16 %v491
        %v716 = vunpack.c.l.b16 %v492
        %v717 = vunpack.c.l.b16 %v493
        %v718 = vunpack.c.l.b16 %v494
        %v719 = vunpack.c.l.b16 %v495
        %v720 = vunpack.c.l.b16 %v496
        %v721 = vunpack.c.l.b16 %v497
        %v722 = vunpack.c.l.b16 %v498
        %v723 = vunpack.c.l.b16 %v499
        %v724 = vunpack.c.l.b16 %v500
        %v725 = vunpack.c.l.b16 %v501
        %v726 = vunpack.c.l.b16 %v502
        %v727 = vunpack.c.l.b16 %v503
        %v728 = vunpack.c.l.b16 %v504
        %v729 = vpack.c.b16 %v698, %v697
        %v730 = vpack.c.b16 %v700, %v699
        %v731 = vpack.c.b16 %v702, %v701
        %v732 = vpack.c.b16 %v704, %v703
        %v733 = vpack.c.b16 %v706, %v705
        %v734 = vpack.c.b16 %v708, %v707
        %v735 = vpack.c.b16 %v710, %v709
        %v736 = vpack.c.b16 %v712, %v711
        %v737 = vpack.c.b16 %v714, %v713
        %v738 = vpack.c.b16 %v716, %v715
        %v739 = vpack.c.b16 %v718, %v717
        %v740 = vpack.c.b16 %v720, %v719
        %v741 = vpack.c.b16 %v722, %v721
        %v742 = vpack.c.b16 %v724, %v723
        %v743 = vpack.c.b16 %v726, %v725
        %v744 = vpack.c.b16 %v728, %v727
        %761 = vmatprep.subr.bf16.mxu0 0
        %762 = vmatpush1.bf16.msra.mxu0 %v729
        %763 = vmatprep.subr.bf16.mxu0 0
        %764 = vmatpush1.bf16.msra.mxu0 %v730
        %765 = vmatprep.subr.bf16.mxu0 0
        %766 = vmatpush1.bf16.msra.mxu0 %v731
        %767 = vmatprep.subr.bf16.mxu0 0
        %768 = vmatpush1.bf16.msra.mxu0 %v732
        %769 = vmatprep.subr.bf16.mxu0 0
        %770 = vmatpush1.bf16.msra.mxu0 %v733
        %771 = vmatprep.subr.bf16.mxu0 0
        %772 = vmatpush1.bf16.msra.mxu0 %v734
        %773 = vmatprep.subr.bf16.mxu0 0
        %774 = vmatpush1.bf16.msra.mxu0 %v735
        %775 = vmatprep.subr.bf16.mxu0 0
        %776 = vmatpush1.bf16.msra.mxu0 %v736
        %777 = vmatprep.subr.bf16.mxu0 0
        %778 = vmatpush1.bf16.msra.mxu0 %v737
        %779 = vmatprep.subr.bf16.mxu0 0
        %780 = vmatpush1.bf16.msra.mxu0 %v738
        %781 = vmatprep.subr.bf16.mxu0 0
        %782 = vmatpush1.bf16.msra.mxu0 %v739
        %783 = vmatprep.subr.bf16.mxu0 0
        %784 = vmatpush1.bf16.msra.mxu0 %v740
        %785 = vmatprep.subr.bf16.mxu0 0
        %786 = vmatpush1.bf16.msra.mxu0 %v741
        %787 = vmatprep.subr.bf16.mxu0 0
        %788 = vmatpush1.bf16.msra.mxu0 %v742
        %789 = vmatprep.subr.bf16.mxu0 0
        %790 = vmatpush1.bf16.msra.mxu0 %v743
        %791 = vmatprep.subr.bf16.mxu0 0
        %792 = vmatpush1.bf16.msra.mxu0 %v744
        %793 = vmatprep.mubr.bf16.mxu0 %v602
        %794 = vmatmul.mubr.bf16.gmra.mrb[0].mxu0 %v601
        %v795 = vpop.f32.mrb[0].mxu0
        %v796 = vadd.f32 0.0, %v795
        %v797 = vpop.f32.mrb[0].mxu0
        %v798 = vpop.f32.mrb[0].mxu0
        %v799 = vadd.f32 0.0, %v798
        %v800 = vpop.f32.mrb[0].mxu0
        %801 = vmatprep.mubr.bf16.mxu0 %v604
        %802 = vmatmul.mubr.bf16.gmra.mrb[0].mxu0 %v603
        %v803 = vpop.f32.mrb[0].mxu0
        %v804 = vadd.f32 0.0, %v803
        %v805 = vpop.f32.mrb[0].mxu0
        %v806 = vpop.f32.mrb[0].mxu0
        %v807 = vadd.f32 0.0, %v806
        %v808 = vpop.f32.mrb[0].mxu0
        %809 = vmatprep.mubr.bf16.mxu0 %v606
        %810 = vmatmul.mubr.bf16.gmra.mrb[0].mxu0 %v605
        %v811 = vpop.f32.mrb[0].mxu0
        %v812 = vadd.f32 0.0, %v811
        %v813 = vpop.f32.mrb[0].mxu0
        %v814 = vpop.f32.mrb[0].mxu0
        %v815 = vadd.f32 0.0, %v814
        %v816 = vpop.f32.mrb[0].mxu0
        %817 = vmatprep.mubr.bf16.mxu0 %v608
        %818 = vmatmul.mubr.bf16.gmra.mrb[0].mxu0 %v607
        %v819 = vpop.f32.mrb[0].mxu0
        %v820 = vadd.f32 0.0, %v819
        %v821 = vpop.f32.mrb[0].mxu0
        %v822 = vpop.f32.mrb[0].mxu0
        %v823 = vadd.f32 0.0, %v822
        %v824 = vpop.f32.mrb[0].mxu0
        %825 = vmatprep.mubr.bf16.mxu0 %v610
        %826 = vmatmul.mubr.bf16.gmra.mrb[0].mxu0 %v609
        %v827 = vpop.f32.mrb[0].mxu0
        %v828 = vadd.f32 0.0, %v827
        %v829 = vpop.f32.mrb[0].mxu0
        %v830 = vpop.f32.mrb[0].mxu0
        %v831 = vadd.f32 0.0, %v830
        %v832 = vpop.f32.mrb[0].mxu0
        %833 = vmatprep.mubr.bf16.mxu0 %v612
        %834 = vmatmul.mubr.bf16.gmra.mrb[0].mxu0 %v611
        %v835 = vpop.f32.mrb[0].mxu0
        %v836 = vadd.f32 0.0, %v835
        %v837 = vpop.f32.mrb[0].mxu0
        %v838 = vpop.f32.mrb[0].mxu0
        %v839 = vadd.f32 0.0, %v838
        %v840 = vpop.f32.mrb[0].mxu0
        %841 = vmatprep.mubr.bf16.mxu0 %v614
        %842 = vmatmul.mubr.bf16.gmra.mrb[0].mxu0 %v613
        %v843 = vpop.f32.mrb[0].mxu0
        %v844 = vadd.f32 0.0, %v843
        %v845 = vpop.f32.mrb[0].mxu0
        %v846 = vpop.f32.mrb[0].mxu0
        %v847 = vadd.f32 0.0, %v846
        %v848 = vpop.f32.mrb[0].mxu0
        %849 = vmatprep.mubr.bf16.mxu0 %v616
        %850 = vmatmul.mubr.bf16.gmra.mrb[0].mxu0 %v615
        %v851 = vpop.f32.mrb[0].mxu0
        %v852 = vadd.f32 0.0, %v851
        %v853 = vpop.f32.mrb[0].mxu0
        %v854 = vpop.f32.mrb[0].mxu0
        %v855 = vadd.f32 0.0, %v854
        %v856 = vpop.f32.mrb[0].mxu0
        %857 = vmatprep.mubr.bf16.mxu0 %v618
        %858 = vmatmul.mubr.bf16.gmra.mrb[0].mxu0 %v617
        %v859 = vpop.f32.mrb[0].mxu0
        %v860 = vadd.f32 0.0, %v859
        %v861 = vpop.f32.mrb[0].mxu0
        %v862 = vpop.f32.mrb[0].mxu0
        %v863 = vadd.f32 0.0, %v862
        %v864 = vpop.f32.mrb[0].mxu0
        %865 = vmatprep.mubr.bf16.mxu0 %v620
        %866 = vmatmul.mubr.bf16.gmra.mrb[0].mxu0 %v619
        %v867 = vpop.f32.mrb[0].mxu0
        %v868 = vadd.f32 0.0, %v867
        %v869 = vpop.f32.mrb[0].mxu0
        %v870 = vpop.f32.mrb[0].mxu0
        %v871 = vadd.f32 0.0, %v870
        %v872 = vpop.f32.mrb[0].mxu0
        %873 = vmatprep.mubr.bf16.mxu0 %v622
        %874 = vmatmul.mubr.bf16.gmra.mrb[0].mxu0 %v621
        %v875 = vpop.f32.mrb[0].mxu0
        %v876 = vadd.f32 0.0, %v875
        %v877 = vpop.f32.mrb[0].mxu0
        %v878 = vpop.f32.mrb[0].mxu0
        %v879 = vadd.f32 0.0, %v878
        %v880 = vpop.f32.mrb[0].mxu0
        %881 = vmatprep.mubr.bf16.mxu0 %v624
        %882 = vmatmul.mubr.bf16.gmra.mrb[0].mxu0 %v623
        %v883 = vpop.f32.mrb[0].mxu0
        %v884 = vadd.f32 0.0, %v883
        %v885 = vpop.f32.mrb[0].mxu0
        %v886 = vpop.f32.mrb[0].mxu0
        %v887 = vadd.f32 0.0, %v886
        %v888 = vpop.f32.mrb[0].mxu0
        %889 = vmatprep.mubr.bf16.mxu0 %v626
        %890 = vmatmul.mubr.bf16.gmra.mrb[0].mxu0 %v625
        %v891 = vpop.f32.mrb[0].mxu0
        %v892 = vadd.f32 0.0, %v891
        %v893 = vpop.f32.mrb[0].mxu0
        %v894 = vpop.f32.mrb[0].mxu0
        %v895 = vadd.f32 0.0, %v894
        %v896 = vpop.f32.mrb[0].mxu0
        %897 = vmatprep.mubr.bf16.mxu0 %v628
        %898 = vmatmul.mubr.bf16.gmra.mrb[0].mxu0 %v627
        %v899 = vpop.f32.mrb[0].mxu0
        %v900 = vadd.f32 0.0, %v899
        %v901 = vpop.f32.mrb[0].mxu0
        %v902 = vpop.f32.mrb[0].mxu0
        %v903 = vadd.f32 0.0, %v902
        %v904 = vpop.f32.mrb[0].mxu0
        %905 = vmatprep.mubr.bf16.mxu0 %v630
        %906 = vmatmul.mubr.bf16.gmra.mrb[0].mxu0 %v629
        %v907 = vpop.f32.mrb[0].mxu0
        %v908 = vadd.f32 0.0, %v907
        %v909 = vpop.f32.mrb[0].mxu0
        %v910 = vpop.f32.mrb[0].mxu0
        %v911 = vadd.f32 0.0, %v910
        %v912 = vpop.f32.mrb[0].mxu0
        %913 = vmatprep.mubr.bf16.mxu0 %v632
        %914 = vmatmul.mubr.bf16.gmra.mrb[0].mxu0 %v631
        %v915 = vpop.f32.mrb[0].mxu0
        %v916 = vadd.f32 0.0, %v915
        %v917 = vpop.f32.mrb[0].mxu0
        %v918 = vpop.f32.mrb[0].mxu0
        %v919 = vadd.f32 0.0, %v918
        %v920 = vpop.f32.mrb[0].mxu0
        %921 = vdwg.mxu0
        %v922 = vadd.f32 %v409, %v796
        %v923 = vadd.f32 %v410, %v799
        %v924 = vadd.f32 %v411, %v804
        %v925 = vadd.f32 %v412, %v807
        %v926 = vadd.f32 %v413, %v812
        %v927 = vadd.f32 %v414, %v815
        %v928 = vadd.f32 %v415, %v820
        %v929 = vadd.f32 %v416, %v823
        %v930 = vadd.f32 %v417, %v828
        %v931 = vadd.f32 %v418, %v831
        %v932 = vadd.f32 %v419, %v836
        %v933 = vadd.f32 %v420, %v839
        %v934 = vadd.f32 %v421, %v844
        %v935 = vadd.f32 %v422, %v847
        %v936 = vadd.f32 %v423, %v852
        %v937 = vadd.f32 %v424, %v855
        %v938 = vadd.f32 %v425, %v860
        %v939 = vadd.f32 %v426, %v863
        %v940 = vadd.f32 %v427, %v868
        %v941 = vadd.f32 %v428, %v871
        %v942 = vadd.f32 %v429, %v876
        %v943 = vadd.f32 %v430, %v879
        %v944 = vadd.f32 %v431, %v884
        %v945 = vadd.f32 %v432, %v887
        %v946 = vadd.f32 %v433, %v892
        %v947 = vadd.f32 %v434, %v895
        %v948 = vadd.f32 %v435, %v900
        %v949 = vadd.f32 %v436, %v903
        %v950 = vadd.f32 %v437, %v908
        %v951 = vadd.f32 %v438, %v911
        %v952 = vadd.f32 %v439, %v916
        %v953 = vadd.f32 %v440, %v919
        %954 = vst [vmem:[#allocation2] sm:$0xff] %v922
        %955 = vst [vmem:[#allocation2 + $0x8] sm:$0xff] %v923
        %956 = vst [vmem:[#allocation2 + $0x10] sm:$0xff] %v924
        %957 = vst [vmem:[#allocation2 + $0x18] sm:$0xff] %v925
        %958 = vst [vmem:[#allocation2 + $0x20] sm:$0xff] %v926
        %959 = vst [vmem:[#allocation2 + $0x28] sm:$0xff] %v927
        %960 = vst [vmem:[#allocation2 + $0x30] sm:$0xff] %v928
        %961 = vst [vmem:[#allocation2 + $0x38] sm:$0xff] %v929
        %962 = vst [vmem:[#allocation2 + $0x40] sm:$0xff] %v930
        %963 = vst [vmem:[#allocation2 + $0x48] sm:$0xff] %v931
        %964 = vst [vmem:[#allocation2 + $0x50] sm:$0xff] %v932
        %965 = vst [vmem:[#allocation2 + $0x58] sm:$0xff] %v933
        %966 = vst [vmem:[#allocation2 + $0x60] sm:$0xff] %v934
        %967 = vst [vmem:[#allocation2 + $0x68] sm:$0xff] %v935
        %968 = vst [vmem:[#allocation2 + $0x70] sm:$0xff] %v936
        %969 = vst [vmem:[#allocation2 + $0x78] sm:$0xff] %v937
        %970 = vst [vmem:[#allocation2 + $0x80] sm:$0xff] %v938
        %971 = vst [vmem:[#allocation2 + $0x88] sm:$0xff] %v939
        %972 = vst [vmem:[#allocation2 + $0x90] sm:$0xff] %v940
        %973 = vst [vmem:[#allocation2 + $0x98] sm:$0xff] %v941
        %974 = vst [vmem:[#allocation2 + $0xa0] sm:$0xff] %v942
        %975 = vst [vmem:[#allocation2 + $0xa8] sm:$0xff] %v943
        %976 = vst [vmem:[#allocation2 + $0xb0] sm:$0xff] %v944
        %977 = vst [vmem:[#allocation2 + $0xb8] sm:$0xff] %v945
        %978 = vst [vmem:[#allocation2 + $0xc0] sm:$0xff] %v946
        %979 = vst [vmem:[#allocation2 + $0xc8] sm:$0xff] %v947
        %980 = vst [vmem:[#allocation2 + $0xd0] sm:$0xff] %v948
        %981 = vst [vmem:[#allocation2 + $0xd8] sm:$0xff] %v949
        %982 = vst [vmem:[#allocation2 + $0xe0] sm:$0xff] %v950
        %983 = vst [vmem:[#allocation2 + $0xe8] sm:$0xff] %v951
        %984 = vst [vmem:[#allocation2 + $0xf0] sm:$0xff] %v952
        %985 = vst [vmem:[#allocation2 + $0xf8] sm:$0xff] %v953
        %p986 = scmp.eq.s32.totalorder %s19, 1
        // Predicated region
        $region75: #{gcn_forward.5} parent=65 // pred_check
          %p987 = pneg %p986
        $region76: #{gcn_forward.5} parent=65 // pred_check_branch
          %989 = sbr.rel (%p987) target = $region78
        $region77: #{gcn_forward.5} parent=65 // pred_region
          %v990 = vld [vmem:[#allocation2] sm:$0xff]
          %v991 = vld [vmem:[#allocation2 + $0x8] sm:$0xff]
          %v992 = vld [vmem:[#allocation2 + $0x10] sm:$0xff]
          %v993 = vld [vmem:[#allocation2 + $0x18] sm:$0xff]
          %v994 = vld [vmem:[#allocation2 + $0x20] sm:$0xff]
          %v995 = vld [vmem:[#allocation2 + $0x28] sm:$0xff]
          %v996 = vld [vmem:[#allocation2 + $0x30] sm:$0xff]
          %v997 = vld [vmem:[#allocation2 + $0x38] sm:$0xff]
          %v998 = vld [vmem:[#allocation2 + $0x40] sm:$0xff]
          %v999 = vld [vmem:[#allocation2 + $0x48] sm:$0xff]
          %v1000 = vld [vmem:[#allocation2 + $0x50] sm:$0xff]
          %v1001 = vld [vmem:[#allocation2 + $0x58] sm:$0xff]
          %v1002 = vld [vmem:[#allocation2 + $0x60] sm:$0xff]
          %v1003 = vld [vmem:[#allocation2 + $0x68] sm:$0xff]
          %v1004 = vld [vmem:[#allocation2 + $0x70] sm:$0xff]
          %v1005 = vld [vmem:[#allocation2 + $0x78] sm:$0xff]
          %v1006 = vld [vmem:[#allocation2 + $0x80] sm:$0xff]
          %v1007 = vld [vmem:[#allocation2 + $0x88] sm:$0xff]
          %v1008 = vld [vmem:[#allocation2 + $0x90] sm:$0xff]
          %v1009 = vld [vmem:[#allocation2 + $0x98] sm:$0xff]
          %v1010 = vld [vmem:[#allocation2 + $0xa0] sm:$0xff]
          %v1011 = vld [vmem:[#allocation2 + $0xa8] sm:$0xff]
          %v1012 = vld [vmem:[#allocation2 + $0xb0] sm:$0xff]
          %v1013 = vld [vmem:[#allocation2 + $0xb8] sm:$0xff]
          %v1014 = vld [vmem:[#allocation2 + $0xc0] sm:$0xff]
          %v1015 = vld [vmem:[#allocation2 + $0xc8] sm:$0xff]
          %v1016 = vld [vmem:[#allocation2 + $0xd0] sm:$0xff]
          %v1017 = vld [vmem:[#allocation2 + $0xd8] sm:$0xff]
          %v1018 = vld [vmem:[#allocation2 + $0xe0] sm:$0xff]
          %v1019 = vld [vmem:[#allocation2 + $0xe8] sm:$0xff]
          %v1020 = vld [vmem:[#allocation2 + $0xf0] sm:$0xff]
          %v1021 = vld [vmem:[#allocation2 + $0xf8] sm:$0xff]
          %v1022 = vld [vmem:[%s2] sm:$0x1]
          %v1024 = vlaneseq
          %v1025 = vshrl.u32 %v1024, 7
          %v1026 = vsub.s32 0, %v1025
          %v1027 = vrot.slane %v1022, %v1026
          %v1029 = vadd.f32 %v990, %v1027
          %v1030 = vadd.f32 %v991, %v1027
          %v1031 = vadd.f32 %v992, %v1027
          %v1032 = vadd.f32 %v993, %v1027
          %v1033 = vadd.f32 %v994, %v1027
          %v1034 = vadd.f32 %v995, %v1027
          %v1035 = vadd.f32 %v996, %v1027
          %v1036 = vadd.f32 %v997, %v1027
          %v1037 = vadd.f32 %v998, %v1027
          %v1038 = vadd.f32 %v999, %v1027
          %v1039 = vadd.f32 %v1000, %v1027
          %v1040 = vadd.f32 %v1001, %v1027
          %v1041 = vadd.f32 %v1002, %v1027
          %v1042 = vadd.f32 %v1003, %v1027
          %v1043 = vadd.f32 %v1004, %v1027
          %v1044 = vadd.f32 %v1005, %v1027
          %v1045 = vadd.f32 %v1006, %v1027
          %v1046 = vadd.f32 %v1007, %v1027
          %v1047 = vadd.f32 %v1008, %v1027
          %v1048 = vadd.f32 %v1009, %v1027
          %v1049 = vadd.f32 %v1010, %v1027
          %v1050 = vadd.f32 %v1011, %v1027
          %v1051 = vadd.f32 %v1012, %v1027
          %v1052 = vadd.f32 %v1013, %v1027
          %v1053 = vadd.f32 %v1014, %v1027
          %v1054 = vadd.f32 %v1015, %v1027
          %v1055 = vadd.f32 %v1016, %v1027
          %v1056 = vadd.f32 %v1017, %v1027
          %v1057 = vadd.f32 %v1018, %v1027
          %v1058 = vadd.f32 %v1019, %v1027
          %v1059 = vadd.f32 %v1020, %v1027
          %v1060 = vadd.f32 %v1021, %v1027
          %v1061 = vmax.f32 %v1029, 0.0
          %v1062 = vmax.f32 %v1030, 0.0
          %v1063 = vmax.f32 %v1031, 0.0
          %v1064 = vmax.f32 %v1032, 0.0
          %v1065 = vmax.f32 %v1033, 0.0
          %v1066 = vmax.f32 %v1034, 0.0
          %v1067 = vmax.f32 %v1035, 0.0
          %v1068 = vmax.f32 %v1036, 0.0
          %v1069 = vmax.f32 %v1037, 0.0
          %v1070 = vmax.f32 %v1038, 0.0
          %v1071 = vmax.f32 %v1039, 0.0
          %v1072 = vmax.f32 %v1040, 0.0
          %v1073 = vmax.f32 %v1041, 0.0
          %v1074 = vmax.f32 %v1042, 0.0
          %v1075 = vmax.f32 %v1043, 0.0
          %v1076 = vmax.f32 %v1044, 0.0
          %v1077 = vmax.f32 %v1045, 0.0
          %v1078 = vmax.f32 %v1046, 0.0
          %v1079 = vmax.f32 %v1047, 0.0
          %v1080 = vmax.f32 %v1048, 0.0
          %v1081 = vmax.f32 %v1049, 0.0
          %v1082 = vmax.f32 %v1050, 0.0
          %v1083 = vmax.f32 %v1051, 0.0
          %v1084 = vmax.f32 %v1052, 0.0
          %v1085 = vmax.f32 %v1053, 0.0
          %v1086 = vmax.f32 %v1054, 0.0
          %v1087 = vmax.f32 %v1055, 0.0
          %v1088 = vmax.f32 %v1056, 0.0
          %v1089 = vmax.f32 %v1057, 0.0
          %v1090 = vmax.f32 %v1058, 0.0
          %v1091 = vmax.f32 %v1059, 0.0
          %v1092 = vmax.f32 %v1060, 0.0
          %v1093 = vpack.c.bf16 %v1062, %v1061
          %v1094 = vpack.c.bf16 %v1064, %v1063
          %v1095 = vpack.c.bf16 %v1066, %v1065
          %v1096 = vpack.c.bf16 %v1068, %v1067
          %v1097 = vpack.c.bf16 %v1070, %v1069
          %v1098 = vpack.c.bf16 %v1072, %v1071
          %v1099 = vpack.c.bf16 %v1074, %v1073
          %v1100 = vpack.c.bf16 %v1076, %v1075
          %v1101 = vpack.c.bf16 %v1078, %v1077
          %v1102 = vpack.c.bf16 %v1080, %v1079
          %v1103 = vpack.c.bf16 %v1082, %v1081
          %v1104 = vpack.c.bf16 %v1084, %v1083
          %v1105 = vpack.c.bf16 %v1086, %v1085
          %v1106 = vpack.c.bf16 %v1088, %v1087
          %v1107 = vpack.c.bf16 %v1090, %v1089
          %v1108 = vpack.c.bf16 %v1092, %v1091
          %v1125 = vunpack.c.l.b16 %v1093
          %v1126 = vunpack.c.h.b16 %v1093
          %v1127 = vunpack.c.l.b16 %v1094
          %v1128 = vunpack.c.h.b16 %v1094
          %v1129 = vunpack.c.l.b16 %v1095
          %v1130 = vunpack.c.h.b16 %v1095
          %v1131 = vunpack.c.l.b16 %v1096
          %v1132 = vunpack.c.h.b16 %v1096
          %v1133 = vunpack.c.l.b16 %v1097
          %v1134 = vunpack.c.h.b16 %v1097
          %v1135 = vunpack.c.l.b16 %v1098
          %v1136 = vunpack.c.h.b16 %v1098
          %v1137 = vunpack.c.l.b16 %v1099
          %v1138 = vunpack.c.h.b16 %v1099
          %v1139 = vunpack.c.l.b16 %v1100
          %v1140 = vunpack.c.h.b16 %v1100
          %v1141 = vunpack.c.l.b16 %v1101
          %v1142 = vunpack.c.h.b16 %v1101
          %v1143 = vunpack.c.l.b16 %v1102
          %v1144 = vunpack.c.h.b16 %v1102
          %v1145 = vunpack.c.l.b16 %v1103
          %v1146 = vunpack.c.h.b16 %v1103
          %v1147 = vunpack.c.l.b16 %v1104
          %v1148 = vunpack.c.h.b16 %v1104
          %v1149 = vunpack.c.l.b16 %v1105
          %v1150 = vunpack.c.h.b16 %v1105
          %v1151 = vunpack.c.l.b16 %v1106
          %v1152 = vunpack.c.h.b16 %v1106
          %v1153 = vunpack.c.l.b16 %v1107
          %v1154 = vunpack.c.h.b16 %v1107
          %v1155 = vunpack.c.l.b16 %v1108
          %v1156 = vunpack.c.h.b16 %v1108
          %v1157 = vpack.c.b16 %v1125, %v1125
          %v1158 = vpack.c.b16 %v1126, %v1126
          %v1159 = vpack.c.b16 %v1127, %v1127
          %v1160 = vpack.c.b16 %v1128, %v1128
          %v1161 = vpack.c.b16 %v1129, %v1129
          %v1162 = vpack.c.b16 %v1130, %v1130
          %v1163 = vpack.c.b16 %v1131, %v1131
          %v1164 = vpack.c.b16 %v1132, %v1132
          %v1165 = vpack.c.b16 %v1133, %v1133
          %v1166 = vpack.c.b16 %v1134, %v1134
          %v1167 = vpack.c.b16 %v1135, %v1135
          %v1168 = vpack.c.b16 %v1136, %v1136
          %v1169 = vpack.c.b16 %v1137, %v1137
          %v1170 = vpack.c.b16 %v1138, %v1138
          %v1171 = vpack.c.b16 %v1139, %v1139
          %v1172 = vpack.c.b16 %v1140, %v1140
          %v1173 = vpack.c.b16 %v1141, %v1141
          %v1174 = vpack.c.b16 %v1142, %v1142
          %v1175 = vpack.c.b16 %v1143, %v1143
          %v1176 = vpack.c.b16 %v1144, %v1144
          %v1177 = vpack.c.b16 %v1145, %v1145
          %v1178 = vpack.c.b16 %v1146, %v1146
          %v1179 = vpack.c.b16 %v1147, %v1147
          %v1180 = vpack.c.b16 %v1148, %v1148
          %v1181 = vpack.c.b16 %v1149, %v1149
          %v1182 = vpack.c.b16 %v1150, %v1150
          %v1183 = vpack.c.b16 %v1151, %v1151
          %v1184 = vpack.c.b16 %v1152, %v1152
          %v1185 = vpack.c.b16 %v1153, %v1153
          %v1186 = vpack.c.b16 %v1154, %v1154
          %v1187 = vpack.c.b16 %v1155, %v1155
          %v1188 = vpack.c.b16 %v1156, %v1156
          %1221 = vst [vmem:[%s370] sm:$0xf] %v1157
          %1222 = vst [vmem:[%s370 + $0x4] sm:$0xf] %v1158
          %1223 = vst [vmem:[%s370 + $0x8] sm:$0xf] %v1159
          %1224 = vst [vmem:[%s370 + $0xc] sm:$0xf] %v1160
          %1225 = vst [vmem:[%s370 + $0x10] sm:$0xf] %v1161
          %1226 = vst [vmem:[%s370 + $0x14] sm:$0xf] %v1162
          %1227 = vst [vmem:[%s370 + $0x18] sm:$0xf] %v1163
          %1228 = vst [vmem:[%s370 + $0x1c] sm:$0xf] %v1164
          %1229 = vst [vmem:[%s370 + $0x20] sm:$0xf] %v1165
          %1230 = vst [vmem:[%s370 + $0x24] sm:$0xf] %v1166
          %1231 = vst [vmem:[%s370 + $0x28] sm:$0xf] %v1167
          %1232 = vst [vmem:[%s370 + $0x2c] sm:$0xf] %v1168
          %1233 = vst [vmem:[%s370 + $0x30] sm:$0xf] %v1169
          %1234 = vst [vmem:[%s370 + $0x34] sm:$0xf] %v1170
          %1235 = vst [vmem:[%s370 + $0x38] sm:$0xf] %v1171
          %1236 = vst [vmem:[%s370 + $0x3c] sm:$0xf] %v1172
          %1237 = vst [vmem:[%s370 + $0x40] sm:$0xf] %v1173
          %1238 = vst [vmem:[%s370 + $0x44] sm:$0xf] %v1174
          %1239 = vst [vmem:[%s370 + $0x48] sm:$0xf] %v1175
          %1240 = vst [vmem:[%s370 + $0x4c] sm:$0xf] %v1176
          %1241 = vst [vmem:[%s370 + $0x50] sm:$0xf] %v1177
          %1242 = vst [vmem:[%s370 + $0x54] sm:$0xf] %v1178
          %1243 = vst [vmem:[%s370 + $0x58] sm:$0xf] %v1179
          %1244 = vst [vmem:[%s370 + $0x5c] sm:$0xf] %v1180
          %1245 = vst [vmem:[%s370 + $0x60] sm:$0xf] %v1181
          %1246 = vst [vmem:[%s370 + $0x64] sm:$0xf] %v1182
          %1247 = vst [vmem:[%s370 + $0x68] sm:$0xf] %v1183
          %1248 = vst [vmem:[%s370 + $0x6c] sm:$0xf] %v1184
          %1249 = vst [vmem:[%s370 + $0x70] sm:$0xf] %v1185
          %1250 = vst [vmem:[%s370 + $0x74] sm:$0xf] %v1186
          %1251 = vst [vmem:[%s370 + $0x78] sm:$0xf] %v1187
          %1252 = vst [vmem:[%s370 + $0x7c] sm:$0xf] %v1188
        $region78: #{gcn_forward.5} parent=65 // pred_fallthru
          _
        %s1253 = smul.u32 32, %s18
        %p1254 = scmp.lt.s32.totalorder %s1253, 63
        %s1255 = scalar_select %p1254, %s1253, 63
        %s1256 = smul.addr %s1255, 4
        %s1257 = scalar_lea.vmem %s3, %s1256
        // Predicated region
        $region79: #{gcn_forward.5} parent=65 // pred_check
          %p1258 = pneg %p119
        $region80: #{gcn_forward.5} parent=65 // pred_check_branch
          %1260 = sbr.rel (%p1258) target = $region82
        $region81: #{gcn_forward.5} parent=65 // pred_region
          %s1261 = smul.u32 32, %s18
        $region82: #{gcn_forward.5} parent=65 // pred_fallthru
          _
      $region66: #{gcn_forward.5} parent=5 // pred_fallthru
        _
      %p1262 = scmp.le.s32.totalorder 2, %s9
      // Predicated region
      $region83: #{gcn_forward.5} parent=5 // pred_check
        %p1263 = pneg %p1262
      $region84: #{gcn_forward.5} parent=5 // pred_check_branch
        %1265 = sbr.rel (%p1263) target = $region86
      $region85: #{gcn_forward.5} parent=5 // pred_region
        %s1266 = ssub.s32 %s9, 2
        // Predicated region
        $region87: #{gcn_forward.5} parent=85 // pred_check
          %p1267 = pneg %p125
        $region88: #{gcn_forward.5} parent=85 // pred_check_branch
          %1269 = sbr.rel (%p1267) target = $region90
        $region89: #{gcn_forward.5} parent=85 // pred_region
          %s1270 = smul.u32 32, %s20
          %p1271 = scmp.lt.s32.totalorder %s1270, 63
          %s1272 = scalar_select %p1271, %s1270, 63
          %s1273 = smul.addr %s1272, 4
          %s1274 = scalar_lea.vmem %s3, %s1273
        $region90: #{gcn_forward.5} parent=85 // pred_fallthru
          _
      $region86: #{gcn_forward.5} parent=5 // pred_fallthru
        _
    $region6: #{gcn_forward.5} parent=1 // loop_footer
      %s13 = sadd.s32 1, %s9
    $region7: #{gcn_forward.5} parent=1 // loop_footer_branch
      %8 = sbr.rel target = $region3
    $region8: #{gcn_forward.5} parent=1 // loop_exit
      _

// kernel: gcn_forward.7
$region0: #{gcn_forward.7}
  #allocation0 [shape = 'u32[]', space=smem, size = 0x4, offset = 0x4, fixed_abs, tag = 'smem constant byte address 0x4 - core index']
  #allocation1 [shape = 'u32[144,128]{1,0:T(1,128)}', space=vmem, size = 0x12000, scoped, tag = 'internal scratch']
  #allocation2 [shape = 'f32[256,128]{1,0:T(8,128)}', space=vmem, size = 0x20000, scoped, tag = 'scratch operand']
  %s0 = inlined_call_operand.vmem [shape: bf16[512,512], index: 0, kind: input, shape index: {}]
  %s1 = inlined_call_operand.vmem [shape: bf16[512,128], index: 1, kind: input, shape index: {}]
  %s2 = inlined_call_operand.vmem [shape: f32[1,128], index: 2, kind: input, shape index: {}]
  %s3 = inlined_call_operand.vmem [shape: f32[512,128], index: 3, kind: output, shape index: {}]
  %s4 = sld [smem:[#allocation0]]
  $region91: #{gcn_forward.7} parent=0
    _
  %s6 = ssub.s32 1, %s4
  %s7 = scalar_select 0, %s6, %s4
  $region1: #{gcn_forward.7} parent=0
    #allocation3 [shape = 'u8[262144]{0}', space=vmem, size = 0x40000, scoped, tag = 'input window, operand 0']
    loop: start=0, step=1, limit=6
    $region2: #{gcn_forward.7} parent=1 // loop_pre_header
      _
    $region3: #{gcn_forward.7} parent=1 // loop_header
      %s9 = sphi 0, %s13
      %p10 = scmp.ge.s32.totalorder %s9, 6
      %s16 = sphi 0, %s28
      %s17 = sphi 0, %s24
      %s18 = sphi 0, %s16
      %s19 = sphi 0, %s17
      %s20 = sphi 0, %s18
      %s21 = sphi 0, %s19
      %s33 = sphi 0, %s35
      %s36 = sphi 0, %s33
      %s37 = sphi 0, %s36
      %s53 = sphi 0, %s37
      %s59 = sphi 0, %s61
      %s62 = sphi 0, %s59
      %s63 = sphi 0, %s62
      %s79 = sphi 0, %s63
      %s83 = sphi 0, %s83
      %s85 = sphi 0, %s83
      %s86 = sphi 0, %s85
      %s100 = sphi 0, %s86
      %s106 = sphi 0, %s108
      %s109 = sphi 0, %s106
      %s110 = sphi 0, %s109
      %s126 = sphi 0, %s110
    $region4: #{gcn_forward.7} parent=1 // loop_header_branch
      %12 = sbr.rel (%p10) target = $region8
    $region5: #{gcn_forward.7} parent=1 // loop_body
      %s14 = ssub.s32 %s9, 1
      %s15 = ssub.s32 %s9, 2
      %s22 = sadd.s32 1, %s17
      %p23 = scmp.ge.s32.totalorder %s22, 2
      %s24 = scalar_select %p23, 0, %s22
      %s25 = sadd.s32 1, %s16
      %s26 = scalar_select %p23, %s25, %s16
      %p27 = scmp.ge.s32.totalorder %s26, 2
      %s28 = scalar_select %p27, 0, %s26
      %s29 = ssub.s32 %s16, %s28
      %s30 = ssub.s32 %s17, %s24
      %s31 = sor.u32 %s29, %s30
      %p32 = scmp.eq.s32.totalorder %s31, 0
      %s34 = sadd.s32 %s33, 1
      %s35 = scalar_select %p32, %s33, %s34
      %p38 = pneg %p32
      %p39 = scmp.eq.s32.totalorder %s9, 3
      %p40 = por %p38, %p39
      %p41 = scmp.ne.s32.totalorder %s33, %s36
      %p42 = scmp.eq.s32.totalorder %s9, 0
      %p43 = por %p41, %p42
      %p44 = scmp.ne.s32.totalorder %s33, %s36
      %p45 = scmp.eq.s32.totalorder %s14, 3
      %p46 = por %p44, %p45
      %p47 = scmp.ne.s32.totalorder %s36, %s37
      %p48 = scmp.eq.s32.totalorder %s14, 0
      %p49 = por %p47, %p48
      %p50 = scmp.ne.s32.totalorder %s36, %s37
      %p51 = scmp.eq.s32.totalorder %s15, 3
      %p52 = por %p50, %p51
      %p54 = scmp.ne.s32.totalorder %s37, %s53
      %p55 = scmp.eq.s32.totalorder %s15, 0
      %p56 = por %p54, %p55
      %s57 = ssub.s32 %s17, %s24
      %p58 = scmp.eq.s32.totalorder %s57, 0
      %s60 = sadd.s32 %s59, 1
      %s61 = scalar_select %p58, %s59, %s60
      %p64 = pneg %p58
      %p65 = scmp.eq.s32.totalorder %s9, 3
      %p66 = por %p64, %p65
      %p67 = scmp.ne.s32.totalorder %s59, %s62
      %p68 = scmp.eq.s32.totalorder %s9, 0
      %p69 = por %p67, %p68
      %p70 = scmp.ne.s32.totalorder %s59, %s62
      %p71 = scmp.eq.s32.totalorder %s14, 3
      %p72 = por %p70, %p71
      %p73 = scmp.ne.s32.totalorder %s62, %s63
      %p74 = scmp.eq.s32.totalorder %s14, 0
      %p75 = por %p73, %p74
      %p76 = scmp.ne.s32.totalorder %s62, %s63
      %p77 = scmp.eq.s32.totalorder %s15, 3
      %p78 = por %p76, %p77
      %p80 = scmp.ne.s32.totalorder %s63, %s79
      %p81 = scmp.eq.s32.totalorder %s15, 0
      %p82 = por %p80, %p81
      %s84 = sadd.s32 %s83, 1
      %p87 = scmp.eq.s32.totalorder %s9, 3
      %p88 = scmp.ne.s32.totalorder %s83, %s85
      %p89 = scmp.eq.s32.totalorder %s9, 0
      %p90 = por %p88, %p89
      %p91 = scmp.ne.s32.totalorder %s83, %s85
      %p92 = scmp.eq.s32.totalorder %s14, 3
      %p93 = por %p91, %p92
      %p94 = scmp.ne.s32.totalorder %s85, %s86
      %p95 = scmp.eq.s32.totalorder %s14, 0
      %p96 = por %p94, %p95
      %p97 = scmp.ne.s32.totalorder %s85, %s86
      %p98 = scmp.eq.s32.totalorder %s15, 3
      %p99 = por %p97, %p98
      %p101 = scmp.ne.s32.totalorder %s86, %s100
      %p102 = scmp.eq.s32.totalorder %s15, 0
      %p103 = por %p101, %p102
      %s104 = ssub.s32 %s16, %s28
      %p105 = scmp.eq.s32.totalorder %s104, 0
      %s107 = sadd.s32 %s106, 1
      %s108 = scalar_select %p105, %s106, %s107
      %p111 = pneg %p105
      %p112 = scmp.eq.s32.totalorder %s9, 3
      %p113 = por %p111, %p112
      %p114 = scmp.ne.s32.totalorder %s106, %s109
      %p115 = scmp.eq.s32.totalorder %s9, 0
      %p116 = por %p114, %p115
      %p117 = scmp.ne.s32.totalorder %s106, %s109
      %p118 = scmp.eq.s32.totalorder %s14, 3
      %p119 = por %p117, %p118
      %p120 = scmp.ne.s32.totalorder %s109, %s110
      %p121 = scmp.eq.s32.totalorder %s14, 0
      %p122 = por %p120, %p121
      %p123 = scmp.ne.s32.totalorder %s109, %s110
      %p124 = scmp.eq.s32.totalorder %s15, 3
      %p125 = por %p123, %p124
      %p127 = scmp.ne.s32.totalorder %s110, %s126
      %p128 = scmp.eq.s32.totalorder %s15, 0
      %p129 = por %p127, %p128
      %p130 = scmp.le.s32.totalorder 1, %s9
      %p131 = scmp.lt.s32.totalorder %s9, 5
      %p132 = pnand %p130, %p131
      %p133 = pneg %p132
      // Predicated region
      $region9: #{gcn_forward.7} parent=5 // pred_check
        _
      $region10: #{gcn_forward.7} parent=5 // pred_check_branch
        %135 = sbr.rel (%p132) target = $region12
      $region11: #{gcn_forward.7} parent=5 // pred_region
        %s136 = ssub.s32 %s9, 1
        // Predicated region
        $region13: #{gcn_forward.7} parent=11 // pred_check
          %p137 = pneg %p96
        $region14: #{gcn_forward.7} parent=11 // pred_check_branch
          %139 = sbr.rel (%p137) target = $region16
        $region15: #{gcn_forward.7} parent=11 // pred_region
          _
        $region16: #{gcn_forward.7} parent=11 // pred_fallthru
          _
      $region12: #{gcn_forward.7} parent=5 // pred_fallthru
        _
      %p140 = scmp.lt.s32.totalorder %s9, 4
      // Predicated region
      $region17: #{gcn_forward.7} parent=5 // pred_check
        %p141 = pneg %p140
      $region18: #{gcn_forward.7} parent=5 // pred_check_branch
        %143 = sbr.rel (%p141) target = $region20
      $region19: #{gcn_forward.7} parent=5 // pred_region
        // Predicated region
        $region21: #{gcn_forward.7} parent=19 // pred_check
          %p144 = pneg %p43
        $region22: #{gcn_forward.7} parent=19 // pred_check_branch
          %146 = sbr.rel (%p144) target = $region24
        $region23: #{gcn_forward.7} parent=19 // pred_region
          %s147 = sand.u32 %s33, 1
          %s148 = sand.u32 %s33, 1
          %s149 = smul.addr %s148, 256
          %s150 = scalar_lea.vmem [#allocation3], %s149
          %s151 = smul.u32 32, %s16
          %s152 = smul.u32 2, %s17
          %s153 = smul.addr %s151, 4
          %s154 = sadd.s32 %s152, %s153
          %s155 = smul.addr %s154, 4
          %s156 = scalar_lea.vmem %s0, %s155
          // Predicated region
          $region25: #{gcn_forward.7} parent=23 // pred_check
            _
          $region26: #{gcn_forward.7} parent=23 // pred_check_branch
            %158 = sbr.rel (0) target = $region28
          $region27: #{gcn_forward.7} parent=23 // pred_region
            // Predicated region
            $region29: #{gcn_forward.7} parent=27 // pred_check
              _
            $region30: #{gcn_forward.7} parent=27 // pred_check_branch
              %160 = sbr.rel (0) target = $region32
            $region31: #{gcn_forward.7} parent=27 // pred_region
              // Predicated region
              $region44: #{gcn_forward.7} parent=31 // pred_check
                _
              $region45: #{gcn_forward.7} parent=31 // pred_check_branch
                %237 = sbr.rel (0) target = $region47
              $region46: #{gcn_forward.7} parent=31 // pred_region
                loop: start=0, step=1, limit=1
                $region48: #{gcn_forward.7} parent=46 // loop_pre_header
                  _
                $region49: #{gcn_forward.7} parent=46 // loop_header
                  %s239 = sphi 0, %s243
                  %p240 = scmp.ge.s32.totalorder %s239, 1
                  %s244 = sphi %s156, %s156
                  %s245 = sphi %s150, %s150
                $region50: #{gcn_forward.7} parent=46 // loop_header_branch
                  %242 = sbr.rel (%p240) target = $region54
                $region51: #{gcn_forward.7} parent=46 // loop_body
                  %v246 = vld [vmem:[%s244] sm:$0xff]
                  %247 = vst [vmem:[%s245] sm:$0xff] %v246
                  %v248 = vld [vmem:[%s244 + $0x10] sm:$0xff]
                  %249 = vst [vmem:[%s245 + $0x8] sm:$0xff] %v248
                  %v250 = vld [vmem:[%s244 + $0x20] sm:$0xff]
                  %251 = vst [vmem:[%s245 + $0x10] sm:$0xff] %v250
                  %v252 = vld [vmem:[%s244 + $0x30] sm:$0xff]
                  %253 = vst [vmem:[%s245 + $0x18] sm:$0xff] %v252
                  %v254 = vld [vmem:[%s244 + $0x40] sm:$0xff]
                  %255 = vst [vmem:[%s245 + $0x20] sm:$0xff] %v254
                  %v256 = vld [vmem:[%s244 + $0x50] sm:$0xff]
                  %257 = vst [vmem:[%s245 + $0x28] sm:$0xff] %v256
                  %v258 = vld [vmem:[%s244 + $0x60] sm:$0xff]
                  %259 = vst [vmem:[%s245 + $0x30] sm:$0xff] %v258
                  %v260 = vld [vmem:[%s244 + $0x70] sm:$0xff]
                  %261 = vst [vmem:[%s245 + $0x38] sm:$0xff] %v260
                  %v262 = vld [vmem:[%s244 + $0x80] sm:$0xff]
                  %263 = vst [vmem:[%s245 + $0x40] sm:$0xff] %v262
                  %v264 = vld [vmem:[%s244 + $0x90] sm:$0xff]
                  %265 = vst [vmem:[%s245 + $0x48] sm:$0xff] %v264
                  %v266 = vld [vmem:[%s244 + $0xa0] sm:$0xff]
                  %267 = vst [vmem:[%s245 + $0x50] sm:$0xff] %v266
                  %v268 = vld [vmem:[%s244 + $0xb0] sm:$0xff]
                  %269 = vst [vmem:[%s245 + $0x58] sm:$0xff] %v268
                  %v270 = vld [vmem:[%s244 + $0xc0] sm:$0xff]
                  %271 = vst [vmem:[%s245 + $0x60] sm:$0xff] %v270
                  %v272 = vld [vmem:[%s244 + $0xd0] sm:$0xff]
                  %273 = vst [vmem:[%s245 + $0x68] sm:$0xff] %v272
                  %v274 = vld [vmem:[%s244 + $0xe0] sm:$0xff]
                  %275 = vst [vmem:[%s245 + $0x70] sm:$0xff] %v274
                  %v276 = vld [vmem:[%s244 + $0xf0] sm:$0xff]
                  %277 = vst [vmem:[%s245 + $0x78] sm:$0xff] %v276
                  %v278 = vld [vmem:[%s244 + $0x100] sm:$0xff]
                  %279 = vst [vmem:[%s245 + $0x80] sm:$0xff] %v278
                  %v280 = vld [vmem:[%s244 + $0x110] sm:$0xff]
                  %281 = vst [vmem:[%s245 + $0x88] sm:$0xff] %v280
                  %v282 = vld [vmem:[%s244 + $0x120] sm:$0xff]
                  %283 = vst [vmem:[%s245 + $0x90] sm:$0xff] %v282
                  %v284 = vld [vmem:[%s244 + $0x130] sm:$0xff]
                  %285 = vst [vmem:[%s245 + $0x98] sm:$0xff] %v284
                  %v286 = vld [vmem:[%s244 + $0x140] sm:$0xff]
                  %287 = vst [vmem:[%s245 + $0xa0] sm:$0xff] %v286
                  %v288 = vld [vmem:[%s244 + $0x150] sm:$0xff]
                  %289 = vst [vmem:[%s245 + $0xa8] sm:$0xff] %v288
                  %v290 = vld [vmem:[%s244 + $0x160] sm:$0xff]
                  %291 = vst [vmem:[%s245 + $0xb0] sm:$0xff] %v290
                  %v292 = vld [vmem:[%s244 + $0x170] sm:$0xff]
                  %293 = vst [vmem:[%s245 + $0xb8] sm:$0xff] %v292
                  %v294 = vld [vmem:[%s244 + $0x180] sm:$0xff]
                  %295 = vst [vmem:[%s245 + $0xc0] sm:$0xff] %v294
                  %v296 = vld [vmem:[%s244 + $0x190] sm:$0xff]
                  %297 = vst [vmem:[%s245 + $0xc8] sm:$0xff] %v296
                  %v298 = vld [vmem:[%s244 + $0x1a0] sm:$0xff]
                  %299 = vst [vmem:[%s245 + $0xd0] sm:$0xff] %v298
                  %v300 = vld [vmem:[%s244 + $0x1b0] sm:$0xff]
                  %301 = vst [vmem:[%s245 + $0xd8] sm:$0xff] %v300
                  %v302 = vld [vmem:[%s244 + $0x1c0] sm:$0xff]
                  %303 = vst [vmem:[%s245 + $0xe0] sm:$0xff] %v302
                  %v304 = vld [vmem:[%s244 + $0x1d0] sm:$0xff]
                  %305 = vst [vmem:[%s245 + $0xe8] sm:$0xff] %v304
                  %v306 = vld [vmem:[%s244 + $0x1e0] sm:$0xff]
                  %307 = vst [vmem:[%s245 + $0xf0] sm:$0xff] %v306
                  %v308 = vld [vmem:[%s244 + $0x1f0] sm:$0xff]
                  %309 = vst [vmem:[%s245 + $0xf8] sm:$0xff] %v308
                $region52: #{gcn_forward.7} parent=46 // loop_footer
                  %s243 = sadd.s32 1, %s239
                $region53: #{gcn_forward.7} parent=46 // loop_footer_branch
                  %238 = sbr.rel target = $region49
                $region54: #{gcn_forward.7} parent=46 // loop_exit
                  _
              $region47: #{gcn_forward.7} parent=31 // pred_fallthru
                _
              // Predicated region
              $region55: #{gcn_forward.7} parent=31 // pred_check
                _
              $region56: #{gcn_forward.7} parent=31 // pred_check_branch
                %311 = sbr.rel target = $region58
              $region57: #{gcn_forward.7} parent=31 // pred_region
                _
              $region58: #{gcn_forward.7} parent=31 // pred_fallthru
                _
            $region32: #{gcn_forward.7} parent=27 // pred_fallthru
              _
            // Predicated region
            $region33: #{gcn_forward.7} parent=27 // pred_check
              _
            $region34: #{gcn_forward.7} parent=27 // pred_check_branch
              %162 = sbr.rel target = $region36
            $region35: #{gcn_forward.7} parent=27 // pred_region
              loop: start=0, step=1, limit=1
              $region37: #{gcn_forward.7} parent=35 // loop_pre_header
                _
              $region38: #{gcn_forward.7} parent=35 // loop_header
                %s165 = sphi 0, %s169
                %p166 = scmp.ge.s32.totalorder %s165, 1
                %s170 = sphi %s156, %s156
                %s171 = sphi %s150, %s150
              $region39: #{gcn_forward.7} parent=35 // loop_header_branch
                %168 = sbr.rel (%p166) target = $region43
              $region40: #{gcn_forward.7} parent=35 // loop_body
                %v172 = vld [vmem:[%s170] sm:$0xff]
                %173 = vst [vmem:[%s171] sm:$0xff] %v172
                %v174 = vld [vmem:[%s170 + $0x10] sm:$0xff]
                %175 = vst [vmem:[%s171 + $0x8] sm:$0xff] %v174
                %v176 = vld [vmem:[%s170 + $0x20] sm:$0xff]
                %177 = vst [vmem:[%s171 + $0x10] sm:$0xff] %v176
                %v178 = vld [vmem:[%s170 + $0x30] sm:$0xff]
                %179 = vst [vmem:[%s171 + $0x18] sm:$0xff] %v178
                %v180 = vld [vmem:[%s170 + $0x40] sm:$0xff]
                %181 = vst [vmem:[%s171 + $0x20] sm:$0xff] %v180
                %v182 = vld [vmem:[%s170 + $0x50] sm:$0xff]
                %183 = vst [vmem:[%s171 + $0x28] sm:$0xff] %v182
                %v184 = vld [vmem:[%s170 + $0x60] sm:$0xff]
                %185 = vst [vmem:[%s171 + $0x30] sm:$0xff] %v184
                %v186 = vld [vmem:[%s170 + $0x70] sm:$0xff]
                %187 = vst [vmem:[%s171 + $0x38] sm:$0xff] %v186
                %v188 = vld [vmem:[%s170 + $0x80] sm:$0xff]
                %189 = vst [vmem:[%s171 + $0x40] sm:$0xff] %v188
                %v190 = vld [vmem:[%s170 + $0x90] sm:$0xff]
                %191 = vst [vmem:[%s171 + $0x48] sm:$0xff] %v190
                %v192 = vld [vmem:[%s170 + $0xa0] sm:$0xff]
                %193 = vst [vmem:[%s171 + $0x50] sm:$0xff] %v192
                %v194 = vld [vmem:[%s170 + $0xb0] sm:$0xff]
                %195 = vst [vmem:[%s171 + $0x58] sm:$0xff] %v194
                %v196 = vld [vmem:[%s170 + $0xc0] sm:$0xff]
                %197 = vst [vmem:[%s171 + $0x60] sm:$0xff] %v196
                %v198 = vld [vmem:[%s170 + $0xd0] sm:$0xff]
                %199 = vst [vmem:[%s171 + $0x68] sm:$0xff] %v198
                %v200 = vld [vmem:[%s170 + $0xe0] sm:$0xff]
                %201 = vst [vmem:[%s171 + $0x70] sm:$0xff] %v200
                %v202 = vld [vmem:[%s170 + $0xf0] sm:$0xff]
                %203 = vst [vmem:[%s171 + $0x78] sm:$0xff] %v202
                %v204 = vld [vmem:[%s170 + $0x100] sm:$0xff]
                %205 = vst [vmem:[%s171 + $0x80] sm:$0xff] %v204
                %v206 = vld [vmem:[%s170 + $0x110] sm:$0xff]
                %207 = vst [vmem:[%s171 + $0x88] sm:$0xff] %v206
                %v208 = vld [vmem:[%s170 + $0x120] sm:$0xff]
                %209 = vst [vmem:[%s171 + $0x90] sm:$0xff] %v208
                %v210 = vld [vmem:[%s170 + $0x130] sm:$0xff]
                %211 = vst [vmem:[%s171 + $0x98] sm:$0xff] %v210
                %v212 = vld [vmem:[%s170 + $0x140] sm:$0xff]
                %213 = vst [vmem:[%s171 + $0xa0] sm:$0xff] %v212
                %v214 = vld [vmem:[%s170 + $0x150] sm:$0xff]
                %215 = vst [vmem:[%s171 + $0xa8] sm:$0xff] %v214
                %v216 = vld [vmem:[%s170 + $0x160] sm:$0xff]
                %217 = vst [vmem:[%s171 + $0xb0] sm:$0xff] %v216
                %v218 = vld [vmem:[%s170 + $0x170] sm:$0xff]
                %219 = vst [vmem:[%s171 + $0xb8] sm:$0xff] %v218
                %v220 = vld [vmem:[%s170 + $0x180] sm:$0xff]
                %221 = vst [vmem:[%s171 + $0xc0] sm:$0xff] %v220
                %v222 = vld [vmem:[%s170 + $0x190] sm:$0xff]
                %223 = vst [vmem:[%s171 + $0xc8] sm:$0xff] %v222
                %v224 = vld [vmem:[%s170 + $0x1a0] sm:$0xff]
                %225 = vst [vmem:[%s171 + $0xd0] sm:$0xff] %v224
                %v226 = vld [vmem:[%s170 + $0x1b0] sm:$0xff]
                %227 = vst [vmem:[%s171 + $0xd8] sm:$0xff] %v226
                %v228 = vld [vmem:[%s170 + $0x1c0] sm:$0xff]
                %229 = vst [vmem:[%s171 + $0xe0] sm:$0xff] %v228
                %v230 = vld [vmem:[%s170 + $0x1d0] sm:$0xff]
                %231 = vst [vmem:[%s171 + $0xe8] sm:$0xff] %v230
                %v232 = vld [vmem:[%s170 + $0x1e0] sm:$0xff]
                %233 = vst [vmem:[%s171 + $0xf0] sm:$0xff] %v232
                %v234 = vld [vmem:[%s170 + $0x1f0] sm:$0xff]
                %235 = vst [vmem:[%s171 + $0xf8] sm:$0xff] %v234
              $region41: #{gcn_forward.7} parent=35 // loop_footer
                %s169 = sadd.s32 1, %s165
              $region42: #{gcn_forward.7} parent=35 // loop_footer_branch
                %164 = sbr.rel target = $region38
              $region43: #{gcn_forward.7} parent=35 // loop_exit
                _
            $region36: #{gcn_forward.7} parent=27 // pred_fallthru
              _
          $region28: #{gcn_forward.7} parent=23 // pred_fallthru
            _
          %312 = vnop
        $region24: #{gcn_forward.7} parent=19 // pred_fallthru
          _
        // Predicated region
        $region59: #{gcn_forward.7} parent=19 // pred_check
          %p313 = pneg %p69
        $region60: #{gcn_forward.7} parent=19 // pred_check_branch
          %315 = sbr.rel (%p313) target = $region62
        $region61: #{gcn_forward.7} parent=19 // pred_region
          %s316 = smul.u32 32, %s17
          %p317 = scmp.lt.s32.totalorder %s316, 63
          %s318 = scalar_select %p317, %s316, 63
          %s319 = smul.addr %s318, 4
          %s320 = scalar_lea.vmem %s1, %s319
          %s321 = smul.u32 32, %s17
        $region62: #{gcn_forward.7} parent=19 // pred_fallthru
          _
      $region20: #{gcn_forward.7} parent=5 // pred_fallthru
        _
      %p322 = scmp.le.s32.totalorder 1, %s9
      %p323 = scmp.lt.s32.totalorder %s9, 5
      %p324 = pnand %p322, %p323
      %p325 = pneg %p324
      // Predicated region
      $region63: #{gcn_forward.7} parent=5 // pred_check
        _
      $region64: #{gcn_forward.7} parent=5 // pred_check_branch
        %327 = sbr.rel (%p324) target = $region66
      $region65: #{gcn_forward.7} parent=5 // pred_region
        %s328 = ssub.s32 %s9, 1
        %s329 = sand.u32 %s36, 1
        %s330 = sand.u32 %s36, 1
        %s331 = smul.addr %s330, 256
        %s332 = scalar_lea.vmem [#allocation3], %s331
        // Predicated region
        $region67: #{gcn_forward.7} parent=65 // pred_check
          %p333 = pneg %p49
        $region68: #{gcn_forward.7} parent=65 // pred_check_branch
          %335 = sbr.rel (%p333) target = $region70
        $region69: #{gcn_forward.7} parent=65 // pred_region
          _
        $region70: #{gcn_forward.7} parent=65 // pred_fallthru
          _
        %s336 = sand.u32 %s36, 1
        %s337 = sand.u32 %s36, 1
        %s338 = smul.addr %s337, 256
        %s339 = scalar_lea.vmem [#allocation3], %s338
        %p340 = pneg %p49
        %p341 = pneg %p46
        %s342 = smul.u32 32, %s19
        %p343 = scmp.lt.s32.totalorder %s342, 63
        %s344 = scalar_select %p343, %s342, 63
        %s345 = smul.addr %s344, 4
        %s346 = scalar_lea.vmem %s1, %s345
        %p347 = pneg %p75
        %p348 = pneg %p72
        %p349 = pneg %p96
        %p350 = pneg %p93
        %p351 = pneg %p122
        %p352 = pneg %p119
        %s353 = smul.u32 32, %s18
        %p354 = scmp.lt.s32.totalorder %s353, 63
        %s355 = scalar_select %p354, %s353, 63
        %s356 = smul.addr %s355, 8
        %s357 = scalar_lea.vmem %s3, %s356
        %s358 = smul.u32 32, %s18
        %s359 = smul.u32 2, %s19
        %s360 = smul.u32 32, %s19
        %p361 = scmp.lt.s32.totalorder %s360, 63
        %s362 = scalar_select %p361, %s360, 63
        %s363 = smul.addr %s362, 4
        %s364 = scalar_lea.vmem %s1, %s363
        %s365 = smul.u32 32, %s19
        %s366 = smul.u32 32, %s18
        %p367 = scmp.lt.s32.totalorder %s366, 63
        %s368 = scalar_select %p367, %s366, 63
        %s369 = smul.addr %s368, 8
        %s370 = scalar_lea.vmem %s3, %s369
        %s371 = smul.u32 32, %s18
        %p373 = scmp.eq.s32.totalorder %s19, 0
        // Predicated region
        $region71: #{gcn_forward.7} parent=65 // pred_check
          %p374 = pneg %p373
        $region72: #{gcn_forward.7} parent=65 // pred_check_branch
          %376 = sbr.rel (%p374) target = $region74
        $region73: #{gcn_forward.7} parent=65 // pred_region
          %377 = vst [vmem:[#allocation2] sm:$0xff] 0.0
          %378 = vst [vmem:[#allocation2 + $0x8] sm:$0xff] 0.0
          %379 = vst [vmem:[#allocation2 + $0x10] sm:$0xff] 0.0
          %380 = vst [vmem:[#allocation2 + $0x18] sm:$0xff] 0.0
          %381 = vst [vmem:[#allocation2 + $0x20] sm:$0xff] 0.0
          %382 = vst [vmem:[#allocation2 + $0x28] sm:$0xff] 0.0
          %383 = vst [vmem:[#allocation2 + $0x30] sm:$0xff] 0.0
          %384 = vst [vmem:[#allocation2 + $0x38] sm:$0xff] 0.0
          %385 = vst [vmem:[#allocation2 + $0x40] sm:$0xff] 0.0
          %386 = vst [vmem:[#allocation2 + $0x48] sm:$0xff] 0.0
          %387 = vst [vmem:[#allocation2 + $0x50] sm:$0xff] 0.0
          %388 = vst [vmem:[#allocation2 + $0x58] sm:$0xff] 0.0
          %389 = vst [vmem:[#allocation2 + $0x60] sm:$0xff] 0.0
          %390 = vst [vmem:[#allocation2 + $0x68] sm:$0xff] 0.0
          %391 = vst [vmem:[#allocation2 + $0x70] sm:$0xff] 0.0
          %392 = vst [vmem:[#allocation2 + $0x78] sm:$0xff] 0.0
          %393 = vst [vmem:[#allocation2 + $0x80] sm:$0xff] 0.0
          %394 = vst [vmem:[#allocation2 + $0x88] sm:$0xff] 0.0
          %395 = vst [vmem:[#allocation2 + $0x90] sm:$0xff] 0.0
          %396 = vst [vmem:[#allocation2 + $0x98] sm:$0xff] 0.0
          %397 = vst [vmem:[#allocation2 + $0xa0] sm:$0xff] 0.0
          %398 = vst [vmem:[#allocation2 + $0xa8] sm:$0xff] 0.0
          %399 = vst [vmem:[#allocation2 + $0xb0] sm:$0xff] 0.0
          %400 = vst [vmem:[#allocation2 + $0xb8] sm:$0xff] 0.0
          %401 = vst [vmem:[#allocation2 + $0xc0] sm:$0xff] 0.0
          %402 = vst [vmem:[#allocation2 + $0xc8] sm:$0xff] 0.0
          %403 = vst [vmem:[#allocation2 + $0xd0] sm:$0xff] 0.0
          %404 = vst [vmem:[#allocation2 + $0xd8] sm:$0xff] 0.0
          %405 = vst [vmem:[#allocation2 + $0xe0] sm:$0xff] 0.0
          %406 = vst [vmem:[#allocation2 + $0xe8] sm:$0xff] 0.0
          %407 = vst [vmem:[#allocation2 + $0xf0] sm:$0xff] 0.0
          %408 = vst [vmem:[#allocation2 + $0xf8] sm:$0xff] 0.0
        $region74: #{gcn_forward.7} parent=65 // pred_fallthru
          _
        %v409 = vld [vmem:[#allocation2] sm:$0xff]
        %v410 = vld [vmem:[#allocation2 + $0x8] sm:$0xff]
        %v411 = vld [vmem:[#allocation2 + $0x10] sm:$0xff]
        %v412 = vld [vmem:[#allocation2 + $0x18] sm:$0xff]
        %v413 = vld [vmem:[#allocation2 + $0x20] sm:$0xff]
        %v414 = vld [vmem:[#allocation2 + $0x28] sm:$0xff]
        %v415 = vld [vmem:[#allocation2 + $0x30] sm:$0xff]
        %v416 = vld [vmem:[#allocation2 + $0x38] sm:$0xff]
        %v417 = vld [vmem:[#allocation2 + $0x40] sm:$0xff]
        %v418 = vld [vmem:[#allocation2 + $0x48] sm:$0xff]
        %v419 = vld [vmem:[#allocation2 + $0x50] sm:$0xff]
        %v420 = vld [vmem:[#allocation2 + $0x58] sm:$0xff]
        %v421 = vld [vmem:[#allocation2 + $0x60] sm:$0xff]
        %v422 = vld [vmem:[#allocation2 + $0x68] sm:$0xff]
        %v423 = vld [vmem:[#allocation2 + $0x70] sm:$0xff]
        %v424 = vld [vmem:[#allocation2 + $0x78] sm:$0xff]
        %v425 = vld [vmem:[#allocation2 + $0x80] sm:$0xff]
        %v426 = vld [vmem:[#allocation2 + $0x88] sm:$0xff]
        %v427 = vld [vmem:[#allocation2 + $0x90] sm:$0xff]
        %v428 = vld [vmem:[#allocation2 + $0x98] sm:$0xff]
        %v429 = vld [vmem:[#allocation2 + $0xa0] sm:$0xff]
        %v430 = vld [vmem:[#allocation2 + $0xa8] sm:$0xff]
        %v431 = vld [vmem:[#allocation2 + $0xb0] sm:$0xff]
        %v432 = vld [vmem:[#allocation2 + $0xb8] sm:$0xff]
        %v433 = vld [vmem:[#allocation2 + $0xc0] sm:$0xff]
        %v434 = vld [vmem:[#allocation2 + $0xc8] sm:$0xff]
        %v435 = vld [vmem:[#allocation2 + $0xd0] sm:$0xff]
        %v436 = vld [vmem:[#allocation2 + $0xd8] sm:$0xff]
        %v437 = vld [vmem:[#allocation2 + $0xe0] sm:$0xff]
        %v438 = vld [vmem:[#allocation2 + $0xe8] sm:$0xff]
        %v439 = vld [vmem:[#allocation2 + $0xf0] sm:$0xff]
        %v440 = vld [vmem:[#allocation2 + $0xf8] sm:$0xff]
        %v441 = vld [vmem:[%s332] sm:$0xff]
        %v442 = vld [vmem:[%s332 + $0x8] sm:$0xff]
        %v443 = vld [vmem:[%s332 + $0x10] sm:$0xff]
        %v444 = vld [vmem:[%s332 + $0x18] sm:$0xff]
        %v445 = vld [vmem:[%s332 + $0x20] sm:$0xff]
        %v446 = vld [vmem:[%s332 + $0x28] sm:$0xff]
        %v447 = vld [vmem:[%s332 + $0x30] sm:$0xff]
        %v448 = vld [vmem:[%s332 + $0x38] sm:$0xff]
        %v449 = vld [vmem:[%s332 + $0x40] sm:$0xff]
        %v450 = vld [vmem:[%s332 + $0x48] sm:$0xff]
        %v451 = vld [vmem:[%s332 + $0x50] sm:$0xff]
        %v452 = vld [vmem:[%s332 + $0x58] sm:$0xff]
        %v453 = vld [vmem:[%s332 + $0x60] sm:$0xff]
        %v454 = vld [vmem:[%s332 + $0x68] sm:$0xff]
        %v455 = vld [vmem:[%s332 + $0x70] sm:$0xff]
        %v456 = vld [vmem:[%s332 + $0x78] sm:$0xff]
        %v457 = vld [vmem:[%s332 + $0x80] sm:$0xff]
        %v458 = vld [vmem:[%s332 + $0x88] sm:$0xff]
        %v459 = vld [vmem:[%s332 + $0x90] sm:$0xff]
        %v460 = vld [vmem:[%s332 + $0x98] sm:$0xff]
        %v461 = vld [vmem:[%s332 + $0xa0] sm:$0xff]
        %v462 = vld [vmem:[%s332 + $0xa8] sm:$0xff]
        %v463 = vld [vmem:[%s332 + $0xb0] sm:$0xff]
        %v464 = vld [vmem:[%s332 + $0xb8] sm:$0xff]
        %v465 = vld [vmem:[%s332 + $0xc0] sm:$0xff]
        %v466 = vld [vmem:[%s332 + $0xc8] sm:$0xff]
        %v467 = vld [vmem:[%s332 + $0xd0] sm:$0xff]
        %v468 = vld [vmem:[%s332 + $0xd8] sm:$0xff]
        %v469 = vld [vmem:[%s332 + $0xe0] sm:$0xff]
        %v470 = vld [vmem:[%s332 + $0xe8] sm:$0xff]
        %v471 = vld [vmem:[%s332 + $0xf0] sm:$0xff]
        %v472 = vld [vmem:[%s332 + $0xf8] sm:$0xff]
        %v473 = vld [vmem:[%s364] sm:$0xf]
        %v474 = vld [vmem:[%s364 + $0x4] sm:$0xf]
        %v475 = vld [vmem:[%s364 + $0x8] sm:$0xf]
        %v476 = vld [vmem:[%s364 + $0xc] sm:$0xf]
        %v477 = vld [vmem:[%s364 + $0x10] sm:$0xf]
        %v478 = vld [vmem:[%s364 + $0x14] sm:$0xf]
        %v479 = vld [vmem:[%s364 + $0x18] sm:$0xf]
        %v480 = vld [vmem:[%s364 + $0x1c] sm:$0xf]
        %v481 = vld [vmem:[%s364 + $0x20] sm:$0xf]
        %v482 = vld [vmem:[%s364 + $0x24] sm:$0xf]
        %v483 = vld [vmem:[%s364 + $0x28] sm:$0xf]
        %v484 = vld [vmem:[%s364 + $0x2c] sm:$0xf]
        %v485 = vld [vmem:[%s364 + $0x30] sm:$0xf]
        %v486 = vld [vmem:[%s364 + $0x34] sm:$0xf]
        %v487 = vld [vmem:[%s364 + $0x38] sm:$0xf]
        %v488 = vld [vmem:[%s364 + $0x3c] sm:$0xf]
        %v489 = vld [vmem:[%s364 + $0x40] sm:$0xf]
        %v490 = vld [vmem:[%s364 + $0x44] sm:$0xf]
        %v491 = vld [vmem:[%s364 + $0x48] sm:$0xf]
        %v492 = vld [vmem:[%s364 + $0x4c] sm:$0xf]
        %v493 = vld [vmem:[%s364 + $0x50] sm:$0xf]
        %v494 = vld [vmem:[%s364 + $0x54] sm:$0xf]
        %v495 = vld [vmem:[%s364 + $0x58] sm:$0xf]
        %v496 = vld [vmem:[%s364 + $0x5c] sm:$0xf]
        %v497 = vld [vmem:[%s364 + $0x60] sm:$0xf]
        %v498 = vld [vmem:[%s364 + $0x64] sm:$0xf]
        %v499 = vld [vmem:[%s364 + $0x68] sm:$0xf]
        %v500 = vld [vmem:[%s364 + $0x6c] sm:$0xf]
        %v501 = vld [vmem:[%s364 + $0x70] sm:$0xf]
        %v502 = vld [vmem:[%s364 + $0x74] sm:$0xf]
        %v503 = vld [vmem:[%s364 + $0x78] sm:$0xf]
        %v504 = vld [vmem:[%s364 + $0x7c] sm:$0xf]
        %v537 = vunpack.c.l.b16 %v441
        %v538 = vunpack.c.h.b16 %v441
        %v539 = vunpack.c.l.b16 %v442
        %v540 = vunpack.c.h.b16 %v442
        %v541 = vunpack.c.l.b16 %v443
        %v542 = vunpack.c.h.b16 %v443
        %v543 = vunpack.c.l.b16 %v444
        %v544 = vunpack.c.h.b16 %v444
        %v545 = vunpack.c.l.b16 %v445
        %v546 = vunpack.c.h.b16 %v445
        %v547 = vunpack.c.l.b16 %v446
        %v548 = vunpack.c.h.b16 %v446
        %v549 = vunpack.c.l.b16 %v447
        %v550 = vunpack.c.h.b16 %v447
        %v551 = vunpack.c.l.b16 %v448
        %v552 = vunpack.c.h.b16 %v448
        %v553 = vunpack.c.l.b16 %v449
        %v554 = vunpack.c.h.b16 %v449
        %v555 = vunpack.c.l.b16 %v450
        %v556 = vunpack.c.h.b16 %v450
        %v557 = vunpack.c.l.b16 %v451
        %v558 = vunpack.c.h.b16 %v451
        %v559 = vunpack.c.l.b16 %v452
        %v560 = vunpack.c.h.b16 %v452
        %v561 = vunpack.c.l.b16 %v453
        %v562 = vunpack.c.h.b16 %v453
        %v563 = vunpack.c.l.b16 %v454
        %v564 = vunpack.c.h.b16 %v454
        %v565 = vunpack.c.l.b16 %v455
        %v566 = vunpack.c.h.b16 %v455
        %v567 = vunpack.c.l.b16 %v456
        %v568 = vunpack.c.h.b16 %v456
        %v569 = vunpack.c.l.b16 %v457
        %v570 = vunpack.c.h.b16 %v457
        %v571 = vunpack.c.l.b16 %v458
        %v572 = vunpack.c.h.b16 %v458
        %v573 = vunpack.c.l.b16 %v459
        %v574 = vunpack.c.h.b16 %v459
        %v575 = vunpack.c.l.b16 %v460
        %v576 = vunpack.c.h.b16 %v460
        %v577 = vunpack.c.l.b16 %v461
        %v578 = vunpack.c.h.b16 %v461
        %v579 = vunpack.c.l.b16 %v462
        %v580 = vunpack.c.h.b16 %v462
        %v581 = vunpack.c.l.b16 %v463
        %v582 = vunpack.c.h.b16 %v463
        %v583 = vunpack.c.l.b16 %v464
        %v584 = vunpack.c.h.b16 %v464
        %v585 = vunpack.c.l.b16 %v465
        %v586 = vunpack.c.h.b16 %v465
        %v587 = vunpack.c.l.b16 %v466
        %v588 = vunpack.c.h.b16 %v466
        %v589 = vunpack.c.l.b16 %v467
        %v590 = vunpack.c.h.b16 %v467
        %v591 = vunpack.c.l.b16 %v468
        %v592 = vunpack.c.h.b16 %v468
        %v593 = vunpack.c.l.b16 %v469
        %v594 = vunpack.c.h.b16 %v469
        %v595 = vunpack.c.l.b16 %v470
        %v596 = vunpack.c.h.b16 %v470
        %v597 = vunpack.c.l.b16 %v471
        %v598 = vunpack.c.h.b16 %v471
        %v599 = vunpack.c.l.b16 %v472
        %v600 = vunpack.c.h.b16 %v472
        %v601 = vpack.c.b16 %v539, %v537
        %v602 = vpack.c.b16 %v540, %v538
        %v603 = vpack.c.b16 %v543, %v541
        %v604 = vpack.c.b16 %v544, %v542
        %v605 = vpack.c.b16 %v547, %v545
        %v606 = vpack.c.b16 %v548, %v546
        %v607 = vpack.c.b16 %v551, %v549
        %v608 = vpack.c.b16 %v552, %v550
        %v609 = vpack.c.b16 %v555, %v553
        %v610 = vpack.c.b16 %v556, %v554
        %v611 = vpack.c.b16 %v559, %v557
        %v612 = vpack.c.b16 %v560, %v558
        %v613 = vpack.c.b16 %v563, %v561
        %v614 = vpack.c.b16 %v564, %v562
        %v615 = vpack.c.b16 %v567, %v565
        %v616 = vpack.c.b16 %v568, %v566
        %v617 = vpack.c.b16 %v571, %v569
        %v618 = vpack.c.b16 %v572, %v570
        %v619 = vpack.c.b16 %v575, %v573
        %v620 = vpack.c.b16 %v576, %v574
        %v621 = vpack.c.b16 %v579, %v577
        %v622 = vpack.c.b16 %v580, %v578
        %v623 = vpack.c.b16 %v583, %v581
        %v624 = vpack.c.b16 %v584, %v582
        %v625 = vpack.c.b16 %v587, %v585
        %v626 = vpack.c.b16 %v588, %v586
        %v627 = vpack.c.b16 %v591, %v589
        %v628 = vpack.c.b16 %v592, %v590
        %v629 = vpack.c.b16 %v595, %v593
        %v630 = vpack.c.b16 %v596, %v594
        %v631 = vpack.c.b16 %v599, %v597
        %v632 = vpack.c.b16 %v600, %v598
        %v697 = vunpack.c.l.b16 %v473
        %v698 = vunpack.c.l.b16 %v474
        %v699 = vunpack.c.l.b16 %v475
        %v700 = vunpack.c.l.b16 %v476
        %v701 = vunpack.c.l.b16 %v477
        %v702 = vunpack.c.l.b16 %v478
        %v703 = vunpack.c.l.b16 %v479
        %v704 = vunpack.c.l.b16 %v480
        %v705 = vunpack.c.l.b16 %v481
        %v706 = vunpack.c.l.b16 %v482
        %v707 = vunpack.c.l.b16 %v483
        %v708 = vunpack.c.l.b16 %v484
        %v709 = vunpack.c.l.b16 %v485
        %v710 = vunpack.c.l.b16 %v486
        %v711 = vunpack.c.l.b16 %v487
        %v712 = vunpack.c.l.b16 %v488
        %v713 = vunpack.c.l.b16 %v489
        %v714 = vunpack.c.l.b16 %v490
        %v715 = vunpack.c.l.b16 %v491
        %v716 = vunpack.c.l.b16 %v492
        %v717 = vunpack.c.l.b16 %v493
        %v718 = vunpack.c.l.b16 %v494
        %v719 = vunpack.c.l.b16 %v495
        %v720 = vunpack.c.l.b16 %v496
        %v721 = vunpack.c.l.b16 %v497
        %v722 = vunpack.c.l.b16 %v498
        %v723 = vunpack.c.l.b16 %v499
        %v724 = vunpack.c.l.b16 %v500
        %v725 = vunpack.c.l.b16 %v501
        %v726 = vunpack.c.l.b16 %v502
        %v727 = vunpack.c.l.b16 %v503
        %v728 = vunpack.c.l.b16 %v504
        %v729 = vpack.c.b16 %v698, %v697
        %v730 = vpack.c.b16 %v700, %v699
        %v731 = vpack.c.b16 %v702, %v701
        %v732 = vpack.c.b16 %v704, %v703
        %v733 = vpack.c.b16 %v706, %v705
        %v734 = vpack.c.b16 %v708, %v707
        %v735 = vpack.c.b16 %v710, %v709
        %v736 = vpack.c.b16 %v712, %v711
        %v737 = vpack.c.b16 %v714, %v713
        %v738 = vpack.c.b16 %v716, %v715
        %v739 = vpack.c.b16 %v718, %v717
        %v740 = vpack.c.b16 %v720, %v719
        %v741 = vpack.c.b16 %v722, %v721
        %v742 = vpack.c.b16 %v724, %v723
        %v743 = vpack.c.b16 %v726, %v725
        %v744 = vpack.c.b16 %v728, %v727
        %761 = vmatprep.subr.bf16.mxu0 0
        %762 = vmatpush1.bf16.msra.mxu0 %v729
        %763 = vmatprep.subr.bf16.mxu0 0
        %764 = vmatpush1.bf16.msra.mxu0 %v730
        %765 = vmatprep.subr.bf16.mxu0 0
        %766 = vmatpush1.bf16.msra.mxu0 %v731
        %767 = vmatprep.subr.bf16.mxu0 0
        %768 = vmatpush1.bf16.msra.mxu0 %v732
        %769 = vmatprep.subr.bf16.mxu0 0
        %770 = vmatpush1.bf16.msra.mxu0 %v733
        %771 = vmatprep.subr.bf16.mxu0 0
        %772 = vmatpush1.bf16.msra.mxu0 %v734
        %773 = vmatprep.subr.bf16.mxu0 0
        %774 = vmatpush1.bf16.msra.mxu0 %v735
        %775 = vmatprep.subr.bf16.mxu0 0
        %776 = vmatpush1.bf16.msra.mxu0 %v736
        %777 = vmatprep.subr.bf16.mxu0 0
        %778 = vmatpush1.bf16.msra.mxu0 %v737
        %779 = vmatprep.subr.bf16.mxu0 0
        %780 = vmatpush1.bf16.msra.mxu0 %v738
        %781 = vmatprep.subr.bf16.mxu0 0
        %782 = vmatpush1.bf16.msra.mxu0 %v739
        %783 = vmatprep.subr.bf16.mxu0 0
        %784 = vmatpush1.bf16.msra.mxu0 %v740
        %785 = vmatprep.subr.bf16.mxu0 0
        %786 = vmatpush1.bf16.msra.mxu0 %v741
        %787 = vmatprep.subr.bf16.mxu0 0
        %788 = vmatpush1.bf16.msra.mxu0 %v742
        %789 = vmatprep.subr.bf16.mxu0 0
        %790 = vmatpush1.bf16.msra.mxu0 %v743
        %791 = vmatprep.subr.bf16.mxu0 0
        %792 = vmatpush1.bf16.msra.mxu0 %v744
        %793 = vmatprep.mubr.bf16.mxu0 %v602
        %794 = vmatmul.mubr.bf16.gmra.mrb[0].mxu0 %v601
        %v795 = vpop.f32.mrb[0].mxu0
        %v796 = vadd.f32 0.0, %v795
        %v797 = vpop.f32.mrb[0].mxu0
        %v798 = vpop.f32.mrb[0].mxu0
        %v799 = vadd.f32 0.0, %v798
        %v800 = vpop.f32.mrb[0].mxu0
        %801 = vmatprep.mubr.bf16.mxu0 %v604
        %802 = vmatmul.mubr.bf16.gmra.mrb[0].mxu0 %v603
        %v803 = vpop.f32.mrb[0].mxu0
        %v804 = vadd.f32 0.0, %v803
        %v805 = vpop.f32.mrb[0].mxu0
        %v806 = vpop.f32.mrb[0].mxu0
        %v807 = vadd.f32 0.0, %v806
        %v808 = vpop.f32.mrb[0].mxu0
        %809 = vmatprep.mubr.bf16.mxu0 %v606
        %810 = vmatmul.mubr.bf16.gmra.mrb[0].mxu0 %v605
        %v811 = vpop.f32.mrb[0].mxu0
        %v812 = vadd.f32 0.0, %v811
        %v813 = vpop.f32.mrb[0].mxu0
        %v814 = vpop.f32.mrb[0].mxu0
        %v815 = vadd.f32 0.0, %v814
        %v816 = vpop.f32.mrb[0].mxu0
        %817 = vmatprep.mubr.bf16.mxu0 %v608
        %818 = vmatmul.mubr.bf16.gmra.mrb[0].mxu0 %v607
        %v819 = vpop.f32.mrb[0].mxu0
        %v820 = vadd.f32 0.0, %v819
        %v821 = vpop.f32.mrb[0].mxu0
        %v822 = vpop.f32.mrb[0].mxu0
        %v823 = vadd.f32 0.0, %v822
        %v824 = vpop.f32.mrb[0].mxu0
        %825 = vmatprep.mubr.bf16.mxu0 %v610
        %826 = vmatmul.mubr.bf16.gmra.mrb[0].mxu0 %v609
        %v827 = vpop.f32.mrb[0].mxu0
        %v828 = vadd.f32 0.0, %v827
        %v829 = vpop.f32.mrb[0].mxu0
        %v830 = vpop.f32.mrb[0].mxu0
        %v831 = vadd.f32 0.0, %v830
        %v832 = vpop.f32.mrb[0].mxu0
        %833 = vmatprep.mubr.bf16.mxu0 %v612
        %834 = vmatmul.mubr.bf16.gmra.mrb[0].mxu0 %v611
        %v835 = vpop.f32.mrb[0].mxu0
        %v836 = vadd.f32 0.0, %v835
        %v837 = vpop.f32.mrb[0].mxu0
        %v838 = vpop.f32.mrb[0].mxu0
        %v839 = vadd.f32 0.0, %v838
        %v840 = vpop.f32.mrb[0].mxu0
        %841 = vmatprep.mubr.bf16.mxu0 %v614
        %842 = vmatmul.mubr.bf16.gmra.mrb[0].mxu0 %v613
        %v843 = vpop.f32.mrb[0].mxu0
        %v844 = vadd.f32 0.0, %v843
        %v845 = vpop.f32.mrb[0].mxu0
        %v846 = vpop.f32.mrb[0].mxu0
        %v847 = vadd.f32 0.0, %v846
        %v848 = vpop.f32.mrb[0].mxu0
        %849 = vmatprep.mubr.bf16.mxu0 %v616
        %850 = vmatmul.mubr.bf16.gmra.mrb[0].mxu0 %v615
        %v851 = vpop.f32.mrb[0].mxu0
        %v852 = vadd.f32 0.0, %v851
        %v853 = vpop.f32.mrb[0].mxu0
        %v854 = vpop.f32.mrb[0].mxu0
        %v855 = vadd.f32 0.0, %v854
        %v856 = vpop.f32.mrb[0].mxu0
        %857 = vmatprep.mubr.bf16.mxu0 %v618
        %858 = vmatmul.mubr.bf16.gmra.mrb[0].mxu0 %v617
        %v859 = vpop.f32.mrb[0].mxu0
        %v860 = vadd.f32 0.0, %v859
        %v861 = vpop.f32.mrb[0].mxu0
        %v862 = vpop.f32.mrb[0].mxu0
        %v863 = vadd.f32 0.0, %v862
        %v864 = vpop.f32.mrb[0].mxu0
        %865 = vmatprep.mubr.bf16.mxu0 %v620
        %866 = vmatmul.mubr.bf16.gmra.mrb[0].mxu0 %v619
        %v867 = vpop.f32.mrb[0].mxu0
        %v868 = vadd.f32 0.0, %v867
        %v869 = vpop.f32.mrb[0].mxu0
        %v870 = vpop.f32.mrb[0].mxu0
        %v871 = vadd.f32 0.0, %v870
        %v872 = vpop.f32.mrb[0].mxu0
        %873 = vmatprep.mubr.bf16.mxu0 %v622
        %874 = vmatmul.mubr.bf16.gmra.mrb[0].mxu0 %v621
        %v875 = vpop.f32.mrb[0].mxu0
        %v876 = vadd.f32 0.0, %v875
        %v877 = vpop.f32.mrb[0].mxu0
        %v878 = vpop.f32.mrb[0].mxu0
        %v879 = vadd.f32 0.0, %v878
        %v880 = vpop.f32.mrb[0].mxu0
        %881 = vmatprep.mubr.bf16.mxu0 %v624
        %882 = vmatmul.mubr.bf16.gmra.mrb[0].mxu0 %v623
        %v883 = vpop.f32.mrb[0].mxu0
        %v884 = vadd.f32 0.0, %v883
        %v885 = vpop.f32.mrb[0].mxu0
        %v886 = vpop.f32.mrb[0].mxu0
        %v887 = vadd.f32 0.0, %v886
        %v888 = vpop.f32.mrb[0].mxu0
        %889 = vmatprep.mubr.bf16.mxu0 %v626
        %890 = vmatmul.mubr.bf16.gmra.mrb[0].mxu0 %v625
        %v891 = vpop.f32.mrb[0].mxu0
        %v892 = vadd.f32 0.0, %v891
        %v893 = vpop.f32.mrb[0].mxu0
        %v894 = vpop.f32.mrb[0].mxu0
        %v895 = vadd.f32 0.0, %v894
        %v896 = vpop.f32.mrb[0].mxu0
        %897 = vmatprep.mubr.bf16.mxu0 %v628
        %898 = vmatmul.mubr.bf16.gmra.mrb[0].mxu0 %v627
        %v899 = vpop.f32.mrb[0].mxu0
        %v900 = vadd.f32 0.0, %v899
        %v901 = vpop.f32.mrb[0].mxu0
        %v902 = vpop.f32.mrb[0].mxu0
        %v903 = vadd.f32 0.0, %v902
        %v904 = vpop.f32.mrb[0].mxu0
        %905 = vmatprep.mubr.bf16.mxu0 %v630
        %906 = vmatmul.mubr.bf16.gmra.mrb[0].mxu0 %v629
        %v907 = vpop.f32.mrb[0].mxu0
        %v908 = vadd.f32 0.0, %v907
        %v909 = vpop.f32.mrb[0].mxu0
        %v910 = vpop.f32.mrb[0].mxu0
        %v911 = vadd.f32 0.0, %v910
        %v912 = vpop.f32.mrb[0].mxu0
        %913 = vmatprep.mubr.bf16.mxu0 %v632
        %914 = vmatmul.mubr.bf16.gmra.mrb[0].mxu0 %v631
        %v915 = vpop.f32.mrb[0].mxu0
        %v916 = vadd.f32 0.0, %v915
        %v917 = vpop.f32.mrb[0].mxu0
        %v918 = vpop.f32.mrb[0].mxu0
        %v919 = vadd.f32 0.0, %v918
        %v920 = vpop.f32.mrb[0].mxu0
        %921 = vdwg.mxu0
        %v922 = vadd.f32 %v409, %v796
        %v923 = vadd.f32 %v410, %v799
        %v924 = vadd.f32 %v411, %v804
        %v925 = vadd.f32 %v412, %v807
        %v926 = vadd.f32 %v413, %v812
        %v927 = vadd.f32 %v414, %v815
        %v928 = vadd.f32 %v415, %v820
        %v929 = vadd.f32 %v416, %v823
        %v930 = vadd.f32 %v417, %v828
        %v931 = vadd.f32 %v418, %v831
        %v932 = vadd.f32 %v419, %v836
        %v933 = vadd.f32 %v420, %v839
        %v934 = vadd.f32 %v421, %v844
        %v935 = vadd.f32 %v422, %v847
        %v936 = vadd.f32 %v423, %v852
        %v937 = vadd.f32 %v424, %v855
        %v938 = vadd.f32 %v425, %v860
        %v939 = vadd.f32 %v426, %v863
        %v940 = vadd.f32 %v427, %v868
        %v941 = vadd.f32 %v428, %v871
        %v942 = vadd.f32 %v429, %v876
        %v943 = vadd.f32 %v430, %v879
        %v944 = vadd.f32 %v431, %v884
        %v945 = vadd.f32 %v432, %v887
        %v946 = vadd.f32 %v433, %v892
        %v947 = vadd.f32 %v434, %v895
        %v948 = vadd.f32 %v435, %v900
        %v949 = vadd.f32 %v436, %v903
        %v950 = vadd.f32 %v437, %v908
        %v951 = vadd.f32 %v438, %v911
        %v952 = vadd.f32 %v439, %v916
        %v953 = vadd.f32 %v440, %v919
        %954 = vst [vmem:[#allocation2] sm:$0xff] %v922
        %955 = vst [vmem:[#allocation2 + $0x8] sm:$0xff] %v923
        %956 = vst [vmem:[#allocation2 + $0x10] sm:$0xff] %v924
        %957 = vst [vmem:[#allocation2 + $0x18] sm:$0xff] %v925
        %958 = vst [vmem:[#allocation2 + $0x20] sm:$0xff] %v926
        %959 = vst [vmem:[#allocation2 + $0x28] sm:$0xff] %v927
        %960 = vst [vmem:[#allocation2 + $0x30] sm:$0xff] %v928
        %961 = vst [vmem:[#allocation2 + $0x38] sm:$0xff] %v929
        %962 = vst [vmem:[#allocation2 + $0x40] sm:$0xff] %v930
        %963 = vst [vmem:[#allocation2 + $0x48] sm:$0xff] %v931
        %964 = vst [vmem:[#allocation2 + $0x50] sm:$0xff] %v932
        %965 = vst [vmem:[#allocation2 + $0x58] sm:$0xff] %v933
        %966 = vst [vmem:[#allocation2 + $0x60] sm:$0xff] %v934
        %967 = vst [vmem:[#allocation2 + $0x68] sm:$0xff] %v935
        %968 = vst [vmem:[#allocation2 + $0x70] sm:$0xff] %v936
        %969 = vst [vmem:[#allocation2 + $0x78] sm:$0xff] %v937
        %970 = vst [vmem:[#allocation2 + $0x80] sm:$0xff] %v938
        %971 = vst [vmem:[#allocation2 + $0x88] sm:$0xff] %v939
        %972 = vst [vmem:[#allocation2 + $0x90] sm:$0xff] %v940
        %973 = vst [vmem:[#allocation2 + $0x98] sm:$0xff] %v941
        %974 = vst [vmem:[#allocation2 + $0xa0] sm:$0xff] %v942
        %975 = vst [vmem:[#allocation2 + $0xa8] sm:$0xff] %v943
        %976 = vst [vmem:[#allocation2 + $0xb0] sm:$0xff] %v944
        %977 = vst [vmem:[#allocation2 + $0xb8] sm:$0xff] %v945
        %978 = vst [vmem:[#allocation2 + $0xc0] sm:$0xff] %v946
        %979 = vst [vmem:[#allocation2 + $0xc8] sm:$0xff] %v947
        %980 = vst [vmem:[#allocation2 + $0xd0] sm:$0xff] %v948
        %981 = vst [vmem:[#allocation2 + $0xd8] sm:$0xff] %v949
        %982 = vst [vmem:[#allocation2 + $0xe0] sm:$0xff] %v950
        %983 = vst [vmem:[#allocation2 + $0xe8] sm:$0xff] %v951
        %984 = vst [vmem:[#allocation2 + $0xf0] sm:$0xff] %v952
        %985 = vst [vmem:[#allocation2 + $0xf8] sm:$0xff] %v953
        %p986 = scmp.eq.s32.totalorder %s19, 1
        // Predicated region
        $region75: #{gcn_forward.7} parent=65 // pred_check
          %p987 = pneg %p986
        $region76: #{gcn_forward.7} parent=65 // pred_check_branch
          %989 = sbr.rel (%p987) target = $region78
        $region77: #{gcn_forward.7} parent=65 // pred_region
          %v990 = vld [vmem:[#allocation2] sm:$0xff]
          %v991 = vld [vmem:[#allocation2 + $0x8] sm:$0xff]
          %v992 = vld [vmem:[#allocation2 + $0x10] sm:$0xff]
          %v993 = vld [vmem:[#allocation2 + $0x18] sm:$0xff]
          %v994 = vld [vmem:[#allocation2 + $0x20] sm:$0xff]
          %v995 = vld [vmem:[#allocation2 + $0x28] sm:$0xff]
          %v996 = vld [vmem:[#allocation2 + $0x30] sm:$0xff]
          %v997 = vld [vmem:[#allocation2 + $0x38] sm:$0xff]
          %v998 = vld [vmem:[#allocation2 + $0x40] sm:$0xff]
          %v999 = vld [vmem:[#allocation2 + $0x48] sm:$0xff]
          %v1000 = vld [vmem:[#allocation2 + $0x50] sm:$0xff]
          %v1001 = vld [vmem:[#allocation2 + $0x58] sm:$0xff]
          %v1002 = vld [vmem:[#allocation2 + $0x60] sm:$0xff]
          %v1003 = vld [vmem:[#allocation2 + $0x68] sm:$0xff]
          %v1004 = vld [vmem:[#allocation2 + $0x70] sm:$0xff]
          %v1005 = vld [vmem:[#allocation2 + $0x78] sm:$0xff]
          %v1006 = vld [vmem:[#allocation2 + $0x80] sm:$0xff]
          %v1007 = vld [vmem:[#allocation2 + $0x88] sm:$0xff]
          %v1008 = vld [vmem:[#allocation2 + $0x90] sm:$0xff]
          %v1009 = vld [vmem:[#allocation2 + $0x98] sm:$0xff]
          %v1010 = vld [vmem:[#allocation2 + $0xa0] sm:$0xff]
          %v1011 = vld [vmem:[#allocation2 + $0xa8] sm:$0xff]
          %v1012 = vld [vmem:[#allocation2 + $0xb0] sm:$0xff]
          %v1013 = vld [vmem:[#allocation2 + $0xb8] sm:$0xff]
          %v1014 = vld [vmem:[#allocation2 + $0xc0] sm:$0xff]
          %v1015 = vld [vmem:[#allocation2 + $0xc8] sm:$0xff]
          %v1016 = vld [vmem:[#allocation2 + $0xd0] sm:$0xff]
          %v1017 = vld [vmem:[#allocation2 + $0xd8] sm:$0xff]
          %v1018 = vld [vmem:[#allocation2 + $0xe0] sm:$0xff]
          %v1019 = vld [vmem:[#allocation2 + $0xe8] sm:$0xff]
          %v1020 = vld [vmem:[#allocation2 + $0xf0] sm:$0xff]
          %v1021 = vld [vmem:[#allocation2 + $0xf8] sm:$0xff]
          %v1022 = vld [vmem:[%s2] sm:$0x1]
          %v1024 = vlaneseq
          %v1025 = vshrl.u32 %v1024, 7
          %v1026 = vsub.s32 0, %v1025
          %v1027 = vrot.slane %v1022, %v1026
          %v1029 = vadd.f32 %v990, %v1027
          %v1030 = vadd.f32 %v991, %v1027
          %v1031 = vadd.f32 %v992, %v1027
          %v1032 = vadd.f32 %v993, %v1027
          %v1033 = vadd.f32 %v994, %v1027
          %v1034 = vadd.f32 %v995, %v1027
          %v1035 = vadd.f32 %v996, %v1027
          %v1036 = vadd.f32 %v997, %v1027
          %v1037 = vadd.f32 %v998, %v1027
          %v1038 = vadd.f32 %v999, %v1027
          %v1039 = vadd.f32 %v1000, %v1027
          %v1040 = vadd.f32 %v1001, %v1027
          %v1041 = vadd.f32 %v1002, %v1027
          %v1042 = vadd.f32 %v1003, %v1027
          %v1043 = vadd.f32 %v1004, %v1027
          %v1044 = vadd.f32 %v1005, %v1027
          %v1045 = vadd.f32 %v1006, %v1027
          %v1046 = vadd.f32 %v1007, %v1027
          %v1047 = vadd.f32 %v1008, %v1027
          %v1048 = vadd.f32 %v1009, %v1027
          %v1049 = vadd.f32 %v1010, %v1027
          %v1050 = vadd.f32 %v1011, %v1027
          %v1051 = vadd.f32 %v1012, %v1027
          %v1052 = vadd.f32 %v1013, %v1027
          %v1053 = vadd.f32 %v1014, %v1027
          %v1054 = vadd.f32 %v1015, %v1027
          %v1055 = vadd.f32 %v1016, %v1027
          %v1056 = vadd.f32 %v1017, %v1027
          %v1057 = vadd.f32 %v1018, %v1027
          %v1058 = vadd.f32 %v1019, %v1027
          %v1059 = vadd.f32 %v1020, %v1027
          %v1060 = vadd.f32 %v1021, %v1027
          %v1061 = vlaneseq
          %v1062 = vand.u32 %v1061, 127
          %vm1063 = vcmp.lt.s32.totalorder %v1062, 4
          %v1064 = vsel %vm1063, %v1029, -inf
          %v1065 = vsel %vm1063, %v1030, -inf
          %v1066 = vsel %vm1063, %v1031, -inf
          %v1067 = vsel %vm1063, %v1032, -inf
          %v1068 = vsel %vm1063, %v1033, -inf
          %v1069 = vsel %vm1063, %v1034, -inf
          %v1070 = vsel %vm1063, %v1035, -inf
          %v1071 = vsel %vm1063, %v1036, -inf
          %v1072 = vsel %vm1063, %v1037, -inf
          %v1073 = vsel %vm1063, %v1038, -inf
          %v1074 = vsel %vm1063, %v1039, -inf
          %v1075 = vsel %vm1063, %v1040, -inf
          %v1076 = vsel %vm1063, %v1041, -inf
          %v1077 = vsel %vm1063, %v1042, -inf
          %v1078 = vsel %vm1063, %v1043, -inf
          %v1079 = vsel %vm1063, %v1044, -inf
          %v1080 = vsel %vm1063, %v1045, -inf
          %v1081 = vsel %vm1063, %v1046, -inf
          %v1082 = vsel %vm1063, %v1047, -inf
          %v1083 = vsel %vm1063, %v1048, -inf
          %v1084 = vsel %vm1063, %v1049, -inf
          %v1085 = vsel %vm1063, %v1050, -inf
          %v1086 = vsel %vm1063, %v1051, -inf
          %v1087 = vsel %vm1063, %v1052, -inf
          %v1088 = vsel %vm1063, %v1053, -inf
          %v1089 = vsel %vm1063, %v1054, -inf
          %v1090 = vsel %vm1063, %v1055, -inf
          %v1091 = vsel %vm1063, %v1056, -inf
          %v1092 = vsel %vm1063, %v1057, -inf
          %v1093 = vsel %vm1063, %v1058, -inf
          %v1094 = vsel %vm1063, %v1059, -inf
          %v1095 = vsel %vm1063, %v1060, -inf
          %1096 = vmax.xlane.f32.xlu0 %v1064
          %v1097 = vpop.xlane.xlu0 %1096
          %1098 = vmax.xlane.f32.xlu0 %v1065
          %v1099 = vpop.xlane.xlu0 %1098
          %1100 = vmax.xlane.f32.xlu0 %v1066
          %v1101 = vpop.xlane.xlu0 %1100
          %1102 = vmax.xlane.f32.xlu0 %v1067
          %v1103 = vpop.xlane.xlu0 %1102
          %1104 = vmax.xlane.f32.xlu0 %v1068
          %v1105 = vpop.xlane.xlu0 %1104
          %1106 = vmax.xlane.f32.xlu0 %v1069
          %v1107 = vpop.xlane.xlu0 %1106
          %1108 = vmax.xlane.f32.xlu0 %v1070
          %v1109 = vpop.xlane.xlu0 %1108
          %1110 = vmax.xlane.f32.xlu0 %v1071
          %v1111 = vpop.xlane.xlu0 %1110
          %1112 = vmax.xlane.f32.xlu0 %v1072
          %v1113 = vpop.xlane.xlu0 %1112
          %1114 = vmax.xlane.f32.xlu0 %v1073
          %v1115 = vpop.xlane.xlu0 %1114
          %1116 = vmax.xlane.f32.xlu0 %v1074
          %v1117 = vpop.xlane.xlu0 %1116
          %1118 = vmax.xlane.f32.xlu0 %v1075
          %v1119 = vpop.xlane.xlu0 %1118
          %1120 = vmax.xlane.f32.xlu0 %v1076
          %v1121 = vpop.xlane.xlu0 %1120
          %1122 = vmax.xlane.f32.xlu0 %v1077
          %v1123 = vpop.xlane.xlu0 %1122
          %1124 = vmax.xlane.f32.xlu0 %v1078
          %v1125 = vpop.xlane.xlu0 %1124
          %1126 = vmax.xlane.f32.xlu0 %v1079
          %v1127 = vpop.xlane.xlu0 %1126
          %1128 = vmax.xlane.f32.xlu0 %v1080
          %v1129 = vpop.xlane.xlu0 %1128
          %1130 = vmax.xlane.f32.xlu0 %v1081
          %v1131 = vpop.xlane.xlu0 %1130
          %1132 = vmax.xlane.f32.xlu0 %v1082
          %v1133 = vpop.xlane.xlu0 %1132
          %1134 = vmax.xlane.f32.xlu0 %v1083
          %v1135 = vpop.xlane.xlu0 %1134
          %1136 = vmax.xlane.f32.xlu0 %v1084
          %v1137 = vpop.xlane.xlu0 %1136
          %1138 = vmax.xlane.f32.xlu0 %v1085
          %v1139 = vpop.xlane.xlu0 %1138
          %1140 = vmax.xlane.f32.xlu0 %v1086
          %v1141 = vpop.xlane.xlu0 %1140
          %1142 = vmax.xlane.f32.xlu0 %v1087
          %v1143 = vpop.xlane.xlu0 %1142
          %1144 = vmax.xlane.f32.xlu0 %v1088
          %v1145 = vpop.xlane.xlu0 %1144
          %1146 = vmax.xlane.f32.xlu0 %v1089
          %v1147 = vpop.xlane.xlu0 %1146
          %1148 = vmax.xlane.f32.xlu0 %v1090
          %v1149 = vpop.xlane.xlu0 %1148
          %1150 = vmax.xlane.f32.xlu0 %v1091
          %v1151 = vpop.xlane.xlu0 %1150
          %1152 = vmax.xlane.f32.xlu0 %v1092
          %v1153 = vpop.xlane.xlu0 %1152
          %1154 = vmax.xlane.f32.xlu0 %v1093
          %v1155 = vpop.xlane.xlu0 %1154
          %1156 = vmax.xlane.f32.xlu0 %v1094
          %v1157 = vpop.xlane.xlu0 %1156
          %1158 = vmax.xlane.f32.xlu0 %v1095
          %v1159 = vpop.xlane.xlu0 %1158
          %v1160 = vsub.f32 %v1064, %v1097
          %v1161 = vsub.f32 %v1065, %v1099
          %v1162 = vsub.f32 %v1066, %v1101
          %v1163 = vsub.f32 %v1067, %v1103
          %v1164 = vsub.f32 %v1068, %v1105
          %v1165 = vsub.f32 %v1069, %v1107
          %v1166 = vsub.f32 %v1070, %v1109
          %v1167 = vsub.f32 %v1071, %v1111
          %v1168 = vsub.f32 %v1072, %v1113
          %v1169 = vsub.f32 %v1073, %v1115
          %v1170 = vsub.f32 %v1074, %v1117
          %v1171 = vsub.f32 %v1075, %v1119
          %v1172 = vsub.f32 %v1076, %v1121
          %v1173 = vsub.f32 %v1077, %v1123
          %v1174 = vsub.f32 %v1078, %v1125
          %v1175 = vsub.f32 %v1079, %v1127
          %v1176 = vsub.f32 %v1080, %v1129
          %v1177 = vsub.f32 %v1081, %v1131
          %v1178 = vsub.f32 %v1082, %v1133
          %v1179 = vsub.f32 %v1083, %v1135
          %v1180 = vsub.f32 %v1084, %v1137
          %v1181 = vsub.f32 %v1085, %v1139
          %v1182 = vsub.f32 %v1086, %v1141
          %v1183 = vsub.f32 %v1087, %v1143
          %v1184 = vsub.f32 %v1088, %v1145
          %v1185 = vsub.f32 %v1089, %v1147
          %v1186 = vsub.f32 %v1090, %v1149
          %v1187 = vsub.f32 %v1091, %v1151
          %v1188 = vsub.f32 %v1092, %v1153
          %v1189 = vsub.f32 %v1093, %v1155
          %v1190 = vsub.f32 %v1094, %v1157
          %v1191 = vsub.f32 %v1095, %v1159
          %v1192 = vmul.f32 %v1160, 1.442695
          %v1193 = vpow.pop %v1192
          %v1194 = vmul.f32 %v1161, 1.442695
          %v1195 = vpow.pop %v1194
          %v1196 = vmul.f32 %v1162, 1.442695
          %v1197 = vpow.pop %v1196
          %v1198 = vmul.f32 %v1163, 1.442695
          %v1199 = vpow.pop %v1198
          %v1200 = vmul.f32 %v1164, 1.442695
          %v1201 = vpow.pop %v1200
          %v1202 = vmul.f32 %v1165, 1.442695
          %v1203 = vpow.pop %v1202
          %v1204 = vmul.f32 %v1166, 1.442695
          %v1205 = vpow.pop %v1204
          %v1206 = vmul.f32 %v1167, 1.442695
          %v1207 = vpow.pop %v1206
          %v1208 = vmul.f32 %v1168, 1.442695
          %v1209 = vpow.pop %v1208
          %v1210 = vmul.f32 %v1169, 1.442695
          %v1211 = vpow.pop %v1210
          %v1212 = vmul.f32 %v1170, 1.442695
          %v1213 = vpow.pop %v1212
          %v1214 = vmul.f32 %v1171, 1.442695
          %v1215 = vpow.pop %v1214
          %v1216 = vmul.f32 %v1172, 1.442695
          %v1217 = vpow.pop %v1216
          %v1218 = vmul.f32 %v1173, 1.442695
          %v1219 = vpow.pop %v1218
          %v1220 = vmul.f32 %v1174, 1.442695
          %v1221 = vpow.pop %v1220
          %v1222 = vmul.f32 %v1175, 1.442695
          %v1223 = vpow.pop %v1222
          %v1224 = vmul.f32 %v1176, 1.442695
          %v1225 = vpow.pop %v1224
          %v1226 = vmul.f32 %v1177, 1.442695
          %v1227 = vpow.pop %v1226
          %v1228 = vmul.f32 %v1178, 1.442695
          %v1229 = vpow.pop %v1228
          %v1230 = vmul.f32 %v1179, 1.442695
          %v1231 = vpow.pop %v1230
          %v1232 = vmul.f32 %v1180, 1.442695
          %v1233 = vpow.pop %v1232
          %v1234 = vmul.f32 %v1181, 1.442695
          %v1235 = vpow.pop %v1234
          %v1236 = vmul.f32 %v1182, 1.442695
          %v1237 = vpow.pop %v1236
          %v1238 = vmul.f32 %v1183, 1.442695
          %v1239 = vpow.pop %v1238
          %v1240 = vmul.f32 %v1184, 1.442695
          %v1241 = vpow.pop %v1240
          %v1242 = vmul.f32 %v1185, 1.442695
          %v1243 = vpow.pop %v1242
          %v1244 = vmul.f32 %v1186, 1.442695
          %v1245 = vpow.pop %v1244
          %v1246 = vmul.f32 %v1187, 1.442695
          %v1247 = vpow.pop %v1246
          %v1248 = vmul.f32 %v1188, 1.442695
          %v1249 = vpow.pop %v1248
          %v1250 = vmul.f32 %v1189, 1.442695
          %v1251 = vpow.pop %v1250
          %v1252 = vmul.f32 %v1190, 1.442695
          %v1253 = vpow.pop %v1252
          %v1254 = vmul.f32 %v1191, 1.442695
          %v1255 = vpow.pop %v1254
          %1256 = vadd.xlane.f32.xlu0 %v1193
          %v1257 = vpop.xlane.xlu0 %1256
          %1258 = vadd.xlane.f32.xlu0 %v1195
          %v1259 = vpop.xlane.xlu0 %1258
          %1260 = vadd.xlane.f32.xlu0 %v1197
          %v1261 = vpop.xlane.xlu0 %1260
          %1262 = vadd.xlane.f32.xlu0 %v1199
          %v1263 = vpop.xlane.xlu0 %1262
          %1264 = vadd.xlane.f32.xlu0 %v1201
          %v1265 = vpop.xlane.xlu0 %1264
          %1266 = vadd.xlane.f32.xlu0 %v1203
          %v1267 = vpop.xlane.xlu0 %1266
          %1268 = vadd.xlane.f32.xlu0 %v1205
          %v1269 = vpop.xlane.xlu0 %1268
          %1270 = vadd.xlane.f32.xlu0 %v1207
          %v1271 = vpop.xlane.xlu0 %1270
          %1272 = vadd.xlane.f32.xlu0 %v1209
          %v1273 = vpop.xlane.xlu0 %1272
          %1274 = vadd.xlane.f32.xlu0 %v1211
          %v1275 = vpop.xlane.xlu0 %1274
          %1276 = vadd.xlane.f32.xlu0 %v1213
          %v1277 = vpop.xlane.xlu0 %1276
          %1278 = vadd.xlane.f32.xlu0 %v1215
          %v1279 = vpop.xlane.xlu0 %1278
          %1280 = vadd.xlane.f32.xlu0 %v1217
          %v1281 = vpop.xlane.xlu0 %1280
          %1282 = vadd.xlane.f32.xlu0 %v1219
          %v1283 = vpop.xlane.xlu0 %1282
          %1284 = vadd.xlane.f32.xlu0 %v1221
          %v1285 = vpop.xlane.xlu0 %1284
          %1286 = vadd.xlane.f32.xlu0 %v1223
          %v1287 = vpop.xlane.xlu0 %1286
          %1288 = vadd.xlane.f32.xlu0 %v1225
          %v1289 = vpop.xlane.xlu0 %1288
          %1290 = vadd.xlane.f32.xlu0 %v1227
          %v1291 = vpop.xlane.xlu0 %1290
          %1292 = vadd.xlane.f32.xlu0 %v1229
          %v1293 = vpop.xlane.xlu0 %1292
          %1294 = vadd.xlane.f32.xlu0 %v1231
          %v1295 = vpop.xlane.xlu0 %1294
          %1296 = vadd.xlane.f32.xlu0 %v1233
          %v1297 = vpop.xlane.xlu0 %1296
          %1298 = vadd.xlane.f32.xlu0 %v1235
          %v1299 = vpop.xlane.xlu0 %1298
          %1300 = vadd.xlane.f32.xlu0 %v1237
          %v1301 = vpop.xlane.xlu0 %1300
          %1302 = vadd.xlane.f32.xlu0 %v1239
          %v1303 = vpop.xlane.xlu0 %1302
          %1304 = vadd.xlane.f32.xlu0 %v1241
          %v1305 = vpop.xlane.xlu0 %1304
          %1306 = vadd.xlane.f32.xlu0 %v1243
          %v1307 = vpop.xlane.xlu0 %1306
          %1308 = vadd.xlane.f32.xlu0 %v1245
          %v1309 = vpop.xlane.xlu0 %1308
          %1310 = vadd.xlane.f32.xlu0 %v1247
          %v1311 = vpop.xlane.xlu0 %1310
          %1312 = vadd.xlane.f32.xlu0 %v1249
          %v1313 = vpop.xlane.xlu0 %1312
          %1314 = vadd.xlane.f32.xlu0 %v1251
          %v1315 = vpop.xlane.xlu0 %1314
          %1316 = vadd.xlane.f32.xlu0 %v1253
          %v1317 = vpop.xlane.xlu0 %1316
          %1318 = vadd.xlane.f32.xlu0 %v1255
          %v1319 = vpop.xlane.xlu0 %1318
          %v1320 = vlog2.pop %v1257
          %v1321 = vmul.f32 %v1320, 0.6931472
          %v1322 = vlog2.pop %v1259
          %v1323 = vmul.f32 %v1322, 0.6931472
          %v1324 = vlog2.pop %v1261
          %v1325 = vmul.f32 %v1324, 0.6931472
          %v1326 = vlog2.pop %v1263
          %v1327 = vmul.f32 %v1326, 0.6931472
          %v1328 = vlog2.pop %v1265
          %v1329 = vmul.f32 %v1328, 0.6931472
          %v1330 = vlog2.pop %v1267
          %v1331 = vmul.f32 %v1330, 0.6931472
          %v1332 = vlog2.pop %v1269
          %v1333 = vmul.f32 %v1332, 0.6931472
          %v1334 = vlog2.pop %v1271
          %v1335 = vmul.f32 %v1334, 0.6931472
          %v1336 = vlog2.pop %v1273
          %v1337 = vmul.f32 %v1336, 0.6931472
          %v1338 = vlog2.pop %v1275
          %v1339 = vmul.f32 %v1338, 0.6931472
          %v1340 = vlog2.pop %v1277
          %v1341 = vmul.f32 %v1340, 0.6931472
          %v1342 = vlog2.pop %v1279
          %v1343 = vmul.f32 %v1342, 0.6931472
          %v1344 = vlog2.pop %v1281
          %v1345 = vmul.f32 %v1344, 0.6931472
          %v1346 = vlog2.pop %v1283
          %v1347 = vmul.f32 %v1346, 0.6931472
          %v1348 = vlog2.pop %v1285
          %v1349 = vmul.f32 %v1348, 0.6931472
          %v1350 = vlog2.pop %v1287
          %v1351 = vmul.f32 %v1350, 0.6931472
          %v1352 = vlog2.pop %v1289
          %v1353 = vmul.f32 %v1352, 0.6931472
          %v1354 = vlog2.pop %v1291
          %v1355 = vmul.f32 %v1354, 0.6931472
          %v1356 = vlog2.pop %v1293
          %v1357 = vmul.f32 %v1356, 0.6931472
          %v1358 = vlog2.pop %v1295
          %v1359 = vmul.f32 %v1358, 0.6931472
          %v1360 = vlog2.pop %v1297
          %v1361 = vmul.f32 %v1360, 0.6931472
          %v1362 = vlog2.pop %v1299
          %v1363 = vmul.f32 %v1362, 0.6931472
          %v1364 = vlog2.pop %v1301
          %v1365 = vmul.f32 %v1364, 0.6931472
          %v1366 = vlog2.pop %v1303
          %v1367 = vmul.f32 %v1366, 0.6931472
          %v1368 = vlog2.pop %v1305
          %v1369 = vmul.f32 %v1368, 0.6931472
          %v1370 = vlog2.pop %v1307
          %v1371 = vmul.f32 %v1370, 0.6931472
          %v1372 = vlog2.pop %v1309
          %v1373 = vmul.f32 %v1372, 0.6931472
          %v1374 = vlog2.pop %v1311
          %v1375 = vmul.f32 %v1374, 0.6931472
          %v1376 = vlog2.pop %v1313
          %v1377 = vmul.f32 %v1376, 0.6931472
          %v1378 = vlog2.pop %v1315
          %v1379 = vmul.f32 %v1378, 0.6931472
          %v1380 = vlog2.pop %v1317
          %v1381 = vmul.f32 %v1380, 0.6931472
          %v1382 = vlog2.pop %v1319
          %v1383 = vmul.f32 %v1382, 0.6931472
          %v1384 = vsub.f32 %v1160, %v1321
          %v1385 = vsub.f32 %v1161, %v1323
          %v1386 = vsub.f32 %v1162, %v1325
          %v1387 = vsub.f32 %v1163, %v1327
          %v1388 = vsub.f32 %v1164, %v1329
          %v1389 = vsub.f32 %v1165, %v1331
          %v1390 = vsub.f32 %v1166, %v1333
          %v1391 = vsub.f32 %v1167, %v1335
          %v1392 = vsub.f32 %v1168, %v1337
          %v1393 = vsub.f32 %v1169, %v1339
          %v1394 = vsub.f32 %v1170, %v1341
          %v1395 = vsub.f32 %v1171, %v1343
          %v1396 = vsub.f32 %v1172, %v1345
          %v1397 = vsub.f32 %v1173, %v1347
          %v1398 = vsub.f32 %v1174, %v1349
          %v1399 = vsub.f32 %v1175, %v1351
          %v1400 = vsub.f32 %v1176, %v1353
          %v1401 = vsub.f32 %v1177, %v1355
          %v1402 = vsub.f32 %v1178, %v1357
          %v1403 = vsub.f32 %v1179, %v1359
          %v1404 = vsub.f32 %v1180, %v1361
          %v1405 = vsub.f32 %v1181, %v1363
          %v1406 = vsub.f32 %v1182, %v1365
          %v1407 = vsub.f32 %v1183, %v1367
          %v1408 = vsub.f32 %v1184, %v1369
          %v1409 = vsub.f32 %v1185, %v1371
          %v1410 = vsub.f32 %v1186, %v1373
          %v1411 = vsub.f32 %v1187, %v1375
          %v1412 = vsub.f32 %v1188, %v1377
          %v1413 = vsub.f32 %v1189, %v1379
          %v1414 = vsub.f32 %v1190, %v1381
          %v1415 = vsub.f32 %v1191, %v1383
          %1416 = vst [vmem:[%s370] sm:$0xff] %v1384
          %1417 = vst [vmem:[%s370 + $0x8] sm:$0xff] %v1385
          %1418 = vst [vmem:[%s370 + $0x10] sm:$0xff] %v1386
          %1419 = vst [vmem:[%s370 + $0x18] sm:$0xff] %v1387
          %1420 = vst [vmem:[%s370 + $0x20] sm:$0xff] %v1388
          %1421 = vst [vmem:[%s370 + $0x28] sm:$0xff] %v1389
          %1422 = vst [vmem:[%s370 + $0x30] sm:$0xff] %v1390
          %1423 = vst [vmem:[%s370 + $0x38] sm:$0xff] %v1391
          %1424 = vst [vmem:[%s370 + $0x40] sm:$0xff] %v1392
          %1425 = vst [vmem:[%s370 + $0x48] sm:$0xff] %v1393
          %1426 = vst [vmem:[%s370 + $0x50] sm:$0xff] %v1394
          %1427 = vst [vmem:[%s370 + $0x58] sm:$0xff] %v1395
          %1428 = vst [vmem:[%s370 + $0x60] sm:$0xff] %v1396
          %1429 = vst [vmem:[%s370 + $0x68] sm:$0xff] %v1397
          %1430 = vst [vmem:[%s370 + $0x70] sm:$0xff] %v1398
          %1431 = vst [vmem:[%s370 + $0x78] sm:$0xff] %v1399
          %1432 = vst [vmem:[%s370 + $0x80] sm:$0xff] %v1400
          %1433 = vst [vmem:[%s370 + $0x88] sm:$0xff] %v1401
          %1434 = vst [vmem:[%s370 + $0x90] sm:$0xff] %v1402
          %1435 = vst [vmem:[%s370 + $0x98] sm:$0xff] %v1403
          %1436 = vst [vmem:[%s370 + $0xa0] sm:$0xff] %v1404
          %1437 = vst [vmem:[%s370 + $0xa8] sm:$0xff] %v1405
          %1438 = vst [vmem:[%s370 + $0xb0] sm:$0xff] %v1406
          %1439 = vst [vmem:[%s370 + $0xb8] sm:$0xff] %v1407
          %1440 = vst [vmem:[%s370 + $0xc0] sm:$0xff] %v1408
          %1441 = vst [vmem:[%s370 + $0xc8] sm:$0xff] %v1409
          %1442 = vst [vmem:[%s370 + $0xd0] sm:$0xff] %v1410
          %1443 = vst [vmem:[%s370 + $0xd8] sm:$0xff] %v1411
          %1444 = vst [vmem:[%s370 + $0xe0] sm:$0xff] %v1412
          %1445 = vst [vmem:[%s370 + $0xe8] sm:$0xff] %v1413
          %1446 = vst [vmem:[%s370 + $0xf0] sm:$0xff] %v1414
          %1447 = vst [vmem:[%s370 + $0xf8] sm:$0xff] %v1415
        $region78: #{gcn_forward.7} parent=65 // pred_fallthru
          _
        %s1448 = smul.u32 32, %s18
        %p1449 = scmp.lt.s32.totalorder %s1448, 63
        %s1450 = scalar_select %p1449, %s1448, 63
        %s1451 = smul.addr %s1450, 8
        %s1452 = scalar_lea.vmem %s3, %s1451
        // Predicated region
        $region79: #{gcn_forward.7} parent=65 // pred_check
          %p1453 = pneg %p119
        $region80: #{gcn_forward.7} parent=65 // pred_check_branch
          %1455 = sbr.rel (%p1453) target = $region82
        $region81: #{gcn_forward.7} parent=65 // pred_region
          %s1456 = smul.u32 32, %s18
        $region82: #{gcn_forward.7} parent=65 // pred_fallthru
          _
      $region66: #{gcn_forward.7} parent=5 // pred_fallthru
        _
      %p1457 = scmp.le.s32.totalorder 2, %s9
      // Predicated region
      $region83: #{gcn_forward.7} parent=5 // pred_check
        %p1458 = pneg %p1457
      $region84: #{gcn_forward.7} parent=5 // pred_check_branch
        %1460 = sbr.rel (%p1458) target = $region86
      $region85: #{gcn_forward.7} parent=5 // pred_region
        %s1461 = ssub.s32 %s9, 2
        // Predicated region
        $region87: #{gcn_forward.7} parent=85 // pred_check
          %p1462 = pneg %p125
        $region88: #{gcn_forward.7} parent=85 // pred_check_branch
          %1464 = sbr.rel (%p1462) target = $region90
        $region89: #{gcn_forward.7} parent=85 // pred_region
          %s1465 = smul.u32 32, %s20
          %p1466 = scmp.lt.s32.totalorder %s1465, 63
          %s1467 = scalar_select %p1466, %s1465, 63
          %s1468 = smul.addr %s1467, 8
          %s1469 = scalar_lea.vmem %s3, %s1468
        $region90: #{gcn_forward.7} parent=85 // pred_fallthru
          _
      $region86: #{gcn_forward.7} parent=5 // pred_fallthru
        _
    $region6: #{gcn_forward.7} parent=1 // loop_footer
      %s13 = sadd.s32 1, %s9
    $region7: #{gcn_forward.7} parent=1 // loop_footer_branch
      %8 = sbr.rel target = $region3
    $region8: #{gcn_forward.7} parent=1 // loop_exit
      _

</llo_original>
